<compile_context>
chip_gen: v7x
topology: tpu7x:2x2x1
jax: 0.10.0
libtpu: 0.0.40
codegen_flags: <defaults>
</compile_context>

<pallas_src>
import functools

import jax
import jax.numpy as jnp
import numpy as np
from jax.experimental import pallas as pl


# ----------------------------------------------------------------------------
# Fused Pallas kernel: conv1+ReLU+pool1 -> conv2+ReLU+pool2 -> fc1 -> fc2 -> fc3
# ----------------------------------------------------------------------------
def _lenet_kernel(a1_ref, t1_ref, b1_ref, sr1_ref, sc1_ref,
                  t2_ref, b2_ref, sr2_ref, sc2_ref,
                  w3_ref, b3_ref, w4_ref, b4_ref, w5_ref, b5_ref,
                  out_ref, *, n):
    f32 = jnp.float32
    r1 = 32 * n - 4      # conv1 output rows (row = img*32 + y, incl. seam garbage)
    r2 = 16 * n - 6      # conv2 output rows (row = img*16 + y, incl. seam garbage)

    # ---- stage 1: Conv2d(3, 6, 5) + bias + ReLU -------------------------------
    # a1 rows are raw input rows (img*32 + y), lanes are (cin, x).  The conv is
    # sum over the 5 filter rows of a1[di:di+r1] @ T1[di]   (K = Cin*W = 96,
    # lanes = Cout*Wout = 168).  Rows that straddle an image seam are garbage but
    # finite; the pool selector below never reads them.
    h1 = jnp.dot(a1_ref[0:r1, :], t1_ref[0], preferred_element_type=f32)
    for di in range(1, 5):
        h1 = h1 + jnp.dot(a1_ref[di:di + r1, :], t1_ref[di],
                          preferred_element_type=f32)
    h1 = jnp.maximum(h1 + b1_ref[...], 0.0)

    # ---- MaxPool2d(2, 2): max of the 4 window corners, then 0/1 selection
    # matmuls pick rows img*32+2p / lanes c*28+2q and re-lay them out as conv2's
    # operand a2 (rows img*16 + p, lanes c*14 + q).
    m1 = jnp.maximum(jnp.maximum(h1[:-1, :-1], h1[:-1, 1:]),
                     jnp.maximum(h1[1:, :-1], h1[1:, 1:]))
    a2 = jnp.dot(sr1_ref[...],
                 jnp.dot(m1, sc1_ref[...], preferred_element_type=f32),
                 preferred_element_type=f32)

    # ---- stage 2: Conv2d(6, 16, 5) + bias + ReLU + MaxPool2d(2, 2) ------------
    h2 = jnp.dot(a2[0:r2, :], t2_ref[0], preferred_element_type=f32)
    for di in range(1, 5):
        h2 = h2 + jnp.dot(a2[di:di + r2, :], t2_ref[di],
                          preferred_element_type=f32)
    h2 = jnp.maximum(h2 + b2_ref[...], 0.0)
    m2 = jnp.maximum(jnp.maximum(h2[:-1, :-1], h2[:-1, 1:]),
                     jnp.maximum(h2[1:, :-1], h2[1:, 1:]))
    # l2: rows = p2 * n + img, lanes = c*5 + q2
    l2 = jnp.dot(sr2_ref[...],
                 jnp.dot(m2, sc2_ref[...], preferred_element_type=f32),
                 preferred_element_type=f32)

    # ---- stage 3: Linear(400,256)+ReLU -> Linear(256,128)+ReLU -> Linear(128,100)
    # PyTorch Flatten order is folded into w3's (5, 80, 256) layout, so fc1 is a
    # sum of 5 (n, 80) @ (80, 256) matmuls over pooled rows p2 = 0..4.
    y = jnp.dot(l2[0:n, :], w3_ref[0], preferred_element_type=f32)
    for p in range(1, 5):
        y = y + jnp.dot(l2[p * n:(p + 1) * n, :], w3_ref[p],
                        preferred_element_type=f32)
    y = jnp.maximum(y + b3_ref[...], 0.0)
    y = jnp.maximum(jnp.dot(y, w4_ref[...], preferred_element_type=f32)
                    + b4_ref[...], 0.0)
    y = jnp.dot(y, w5_ref[...], preferred_element_type=f32) + b5_ref[...]
    out_ref[...] = y.astype(out_ref.dtype)


# ----------------------------------------------------------------------------
# Wrapper-side one-time operand preprocessing
# ----------------------------------------------------------------------------
def _toeplitz_rows(w, win, wout):
    """Per-filter-row block-Toeplitz slabs: T[di][c*win+u, o*wout+j] = w[o,c,di,u-j]."""
    cout, cin, kh, kw = w.shape
    eyes = jnp.stack([jnp.eye(win, wout, k=-dj, dtype=w.dtype) for dj in range(kw)])
    t = jnp.einsum("ocid,duj->icuoj", w, eyes)          # (kh, cin, win, cout, wout)
    return t.reshape(kh, cin * win, cout * wout)


def _pool_selectors(n):
    """Static 0/1 matrices implementing the 2x2/2 max-pool subsample + relayout."""
    # stage 1: rows img*32+2p -> img*16+p ; lanes c*28+2q -> c*14+q
    sr1 = np.zeros((16 * n, 32 * n - 5), np.float32)
    for img in range(n):
        for p in range(14):
            sr1[img * 16 + p, img * 32 + 2 * p] = 1.0
    sc1 = np.zeros((6 * 28 - 1, 6 * 14), np.float32)
    for c in range(6):
        for q in range(14):
            sc1[c * 28 + 2 * q, c * 14 + q] = 1.0
    # stage 2: rows img*16+2p -> p*n+img ; lanes c*10+2q -> c*5+q
    sr2 = np.zeros((5 * n, 16 * n - 7), np.float32)
    for img in range(n):
        for p in range(5):
            sr2[p * n + img, img * 16 + 2 * p] = 1.0
    sc2 = np.zeros((16 * 10 - 1, 16 * 5), np.float32)
    for c in range(16):
        for q in range(5):
            sc2[c * 10 + 2 * q, c * 5 + q] = 1.0
    return jnp.asarray(sr1), jnp.asarray(sc1), jnp.asarray(sr2), jnp.asarray(sc2)


def _full_vmem_spec(a):
    nd = a.ndim
    return pl.BlockSpec(a.shape, lambda nd=nd: (0,) * nd)


@jax.jit
def _lenet_pallas(params, x):
    n = int(x.shape[0])
    nc = params["w5"].shape[0]

    # Weight-only preprocessing (cache-able; constant w.r.t. the input).
    t1 = _toeplitz_rows(params["w1"], 32, 28)           # (5, 96, 168)
    t2 = _toeplitz_rows(params["w2"], 14, 10)           # (5, 84, 160)
    b1e = jnp.repeat(params["b1"], 28)[None, :]         # (1, 168)
    b2e = jnp.repeat(params["b2"], 10)[None, :]         # (1, 160)
    sr1, sc1, sr2, sc2 = _pool_selectors(n)
    w3p = params["w3"].reshape(256, 16, 5, 5).transpose(2, 1, 3, 0).reshape(5, 80, 256)
    b3e = params["b3"][None, :]
    w4t = params["w4"].T                                 # (256, 128)
    b4e = params["b4"][None, :]
    w5t = params["w5"].T                                 # (128, nc)
    b5e = params["b5"][None, :]

    # Per-call input plumbing: rows = img*32 + y, lanes = (cin, x).
    a1 = x.transpose(0, 2, 1, 3).reshape(n * 32, 3 * 32)

    operands = (a1, t1, b1e, sr1, sc1, t2, b2e, sr2, sc2,
                w3p, b3e, w4t, b4e, w5t, b5e)

    r1, r2 = 32 * n - 4, 16 * n - 6
    flops = 2 * (5 * r1 * 96 * 168 + (r1 - 1) * 167 * 84 + 16 * n * (r1 - 1) * 84
                 + 5 * r2 * 84 * 160 + (r2 - 1) * 159 * 80 + 5 * n * (r2 - 1) * 80
                 + 5 * n * 80 * 256 + n * 256 * 128 + n * 128 * nc)
    bytes_accessed = 4 * (sum(int(np.prod(a.shape)) for a in operands) + n * nc)

    # TODO(synk): for large batches, add a grid over the row/batch dimension with
    #             dimension_semantics=("parallel",) (v7x megacore) and cast the
    #             matmul inputs to bf16 on v6e/v7x; at batch=2 a single grid-less
    #             f32 invocation is already launch-overhead bound.
    return pl.pallas_call(
        functools.partial(_lenet_kernel, n=n),
        out_shape=jax.ShapeDtypeStruct((n, nc), jnp.float32),
        in_specs=[_full_vmem_spec(a) for a in operands],
        out_specs=pl.BlockSpec((n, nc), lambda: (0, 0)),
        cost_estimate=pl.CostEstimate(flops=flops, transcendentals=0,
                                      bytes_accessed=bytes_accessed),
    )(*operands)


def lenet_forward(params, x):
    """Returns (logits, shape_dict) matching the PyTorch module's forward."""
    n = x.shape[0]
    logits = _lenet_pallas(params, x)
    shape_dict = {1: (n, 6, 14, 14), 2: (n, 16, 5, 5), 3: (n, 400),
                  4: (n, 256), 5: (n, 128), 6: (n, params["w5"].shape[0])}
    return logits, shape_dict


# ----------------------------------------------------------------------------
# Pure-JAX reference (for the numerical self-check) and parameter init
# ----------------------------------------------------------------------------
def _reference_forward(params, x):
    dn = ("NCHW", "OIHW", "NCHW")
    hp = jax.lax.Precision.HIGHEST

    def conv_relu_pool(y, w, b):
        y = jax.lax.conv_general_dilated(y, w, (1, 1), "VALID",
                                         dimension_numbers=dn, precision=hp)
        y = jnp.maximum(y + b[None, :, None, None], 0.0)
        return jnp.maximum(jnp.maximum(y[:, :, 0::2, 0::2], y[:, :, 0::2, 1::2]),
                           jnp.maximum(y[:, :, 1::2, 0::2], y[:, :, 1::2, 1::2]))

    y = conv_relu_pool(x, params["w1"], params["b1"])
    y = conv_relu_pool(y, params["w2"], params["b2"])
    y = y.reshape(y.shape[0], -1)
    y = jnp.maximum(jnp.dot(y, params["w3"].T, precision=hp) + params["b3"], 0.0)
    y = jnp.maximum(jnp.dot(y, params["w4"].T, precision=hp) + params["b4"], 0.0)
    return jnp.dot(y, params["w5"].T, precision=hp) + params["b5"]


def init_params(key):
    ks = jax.random.split(key, 10)
    s = 0.05
    return {
        "w1": jax.random.normal(ks[0], (6, 3, 5, 5), jnp.float32) * s,
        "b1": jax.random.normal(ks[1], (6,), jnp.float32) * s,
        "w2": jax.random.normal(ks[2], (16, 6, 5, 5), jnp.float32) * s,
        "b2": jax.random.normal(ks[3], (16,), jnp.float32) * s,
        "w3": jax.random.normal(ks[4], (256, 400), jnp.float32) * s,
        "b3": jax.random.normal(ks[5], (256,), jnp.float32) * s,
        "w4": jax.random.normal(ks[6], (128, 256), jnp.float32) * s,
        "b4": jax.random.normal(ks[7], (128,), jnp.float32) * s,
        "w5": jax.random.normal(ks[8], (100, 128), jnp.float32) * s,
        "b5": jax.random.normal(ks[9], (100,), jnp.float32) * s,
    }


if __name__ == "__main__":
    key = jax.random.PRNGKey(0)
    pkey, xkey = jax.random.split(key)
    params = init_params(pkey)
    # CIFAR-style input: batch=2, channels=3, 32x32 (NCHW, matching PyTorch).
    x = jax.random.normal(xkey, (2, 3, 32, 32), jnp.float32)

    logits, shape_dict = lenet_forward(params, x)
    logits = jax.block_until_ready(logits)

    assert logits.shape == (2, 100), logits.shape
    assert shape_dict == {
        1: (2, 6, 14, 14),
        2: (2, 16, 5, 5),
        3: (2, 400),
        4: (2, 256),
        5: (2, 128),
        6: (2, 100),
    }, shape_dict
    assert bool(jnp.all(jnp.isfinite(logits)))

    ref = _reference_forward(params, x)
    np.testing.assert_allclose(np.asarray(logits), np.asarray(ref),
                               rtol=2e-2, atol=2e-2)
    print("KERNEL_OK")
</pallas_src>

<mosaic_0001>
module attributes {stable_mosaic.version = 11 : i64} {
  func.func @_lenet_kernel(%arg0: memref<64x96xf32, #tpu.memory_space<vmem>>, %arg1: memref<5x96x168xf32, #tpu.memory_space<vmem>>, %arg2: memref<1x168xf32, #tpu.memory_space<vmem>>, %arg3: memref<32x59xf32, #tpu.memory_space<vmem>>, %arg4: memref<167x84xf32, #tpu.memory_space<vmem>>, %arg5: memref<5x84x160xf32, #tpu.memory_space<vmem>>, %arg6: memref<1x160xf32, #tpu.memory_space<vmem>>, %arg7: memref<10x25xf32, #tpu.memory_space<vmem>>, %arg8: memref<159x80xf32, #tpu.memory_space<vmem>>, %arg9: memref<5x80x256xf32, #tpu.memory_space<vmem>>, %arg10: memref<1x256xf32, #tpu.memory_space<vmem>>, %arg11: memref<256x128xf32, #tpu.memory_space<vmem>>, %arg12: memref<1x128xf32, #tpu.memory_space<vmem>>, %arg13: memref<128x100xf32, #tpu.memory_space<vmem>>, %arg14: memref<1x100xf32, #tpu.memory_space<vmem>>, %arg15: memref<2x100xf32, #tpu.memory_space<vmem>>) attributes {dimension_semantics = [], scalar_prefetch = 0 : i64, scratch_operands = 0 : i64, tpu.core_type = #tpu.core_type<tc>} {
    %c0 = arith.constant 0 : index
    %c0_0 = arith.constant 0 : index
    %0 = vector.load %arg0[%c0, %c0_0] : memref<64x96xf32, #tpu.memory_space<vmem>>, vector<60x96xf32>
    %c0_1 = arith.constant 0 : index
    %c0_2 = arith.constant 0 : index
    %c0_3 = arith.constant 0 : index
    %1 = vector.load %arg1[%c0_1, %c0_2, %c0_3] : memref<5x96x168xf32, #tpu.memory_space<vmem>>, vector<1x96x168xf32>
    %2 = vector.shape_cast %1 : vector<1x96x168xf32> to vector<96x168xf32>
    %cst = arith.constant dense<0.000000e+00> : vector<60x168xf32>
    %3 = tpu.matmul %0, %2, %cst {dimension_numbers = #tpu.dot_dimension_numbers<[1], [0], [0], [1], [0, 0, 1, 1], [], []>} : vector<60x96xf32>, vector<96x168xf32>, vector<60x168xf32> -> vector<60x168xf32>
    %c1 = arith.constant 1 : index
    %c0_4 = arith.constant 0 : index
    %4 = vector.load %arg0[%c1, %c0_4] : memref<64x96xf32, #tpu.memory_space<vmem>>, vector<60x96xf32>
    %c1_5 = arith.constant 1 : index
    %c0_6 = arith.constant 0 : index
    %c0_7 = arith.constant 0 : index
    %5 = vector.load %arg1[%c1_5, %c0_6, %c0_7] : memref<5x96x168xf32, #tpu.memory_space<vmem>>, vector<1x96x168xf32>
    %6 = vector.shape_cast %5 : vector<1x96x168xf32> to vector<96x168xf32>
    %cst_8 = arith.constant dense<0.000000e+00> : vector<60x168xf32>
    %7 = tpu.matmul %4, %6, %cst_8 {dimension_numbers = #tpu.dot_dimension_numbers<[1], [0], [0], [1], [0, 0, 1, 1], [], []>} : vector<60x96xf32>, vector<96x168xf32>, vector<60x168xf32> -> vector<60x168xf32>
    %8 = arith.addf %3, %7 : vector<60x168xf32>
    %c2 = arith.constant 2 : index
    %c0_9 = arith.constant 0 : index
    %9 = vector.load %arg0[%c2, %c0_9] : memref<64x96xf32, #tpu.memory_space<vmem>>, vector<60x96xf32>
    %c2_10 = arith.constant 2 : index
    %c0_11 = arith.constant 0 : index
    %c0_12 = arith.constant 0 : index
    %10 = vector.load %arg1[%c2_10, %c0_11, %c0_12] : memref<5x96x168xf32, #tpu.memory_space<vmem>>, vector<1x96x168xf32>
    %11 = vector.shape_cast %10 : vector<1x96x168xf32> to vector<96x168xf32>
    %cst_13 = arith.constant dense<0.000000e+00> : vector<60x168xf32>
    %12 = tpu.matmul %9, %11, %cst_13 {dimension_numbers = #tpu.dot_dimension_numbers<[1], [0], [0], [1], [0, 0, 1, 1], [], []>} : vector<60x96xf32>, vector<96x168xf32>, vector<60x168xf32> -> vector<60x168xf32>
    %13 = arith.addf %8, %12 : vector<60x168xf32>
    %c3 = arith.constant 3 : index
    %c0_14 = arith.constant 0 : index
    %14 = vector.load %arg0[%c3, %c0_14] : memref<64x96xf32, #tpu.memory_space<vmem>>, vector<60x96xf32>
    %c3_15 = arith.constant 3 : index
    %c0_16 = arith.constant 0 : index
    %c0_17 = arith.constant 0 : index
    %15 = vector.load %arg1[%c3_15, %c0_16, %c0_17] : memref<5x96x168xf32, #tpu.memory_space<vmem>>, vector<1x96x168xf32>
    %16 = vector.shape_cast %15 : vector<1x96x168xf32> to vector<96x168xf32>
    %cst_18 = arith.constant dense<0.000000e+00> : vector<60x168xf32>
    %17 = tpu.matmul %14, %16, %cst_18 {dimension_numbers = #tpu.dot_dimension_numbers<[1], [0], [0], [1], [0, 0, 1, 1], [], []>} : vector<60x96xf32>, vector<96x168xf32>, vector<60x168xf32> -> vector<60x168xf32>
    %18 = arith.addf %13, %17 : vector<60x168xf32>
    %c4 = arith.constant 4 : index
    %c0_19 = arith.constant 0 : index
    %19 = vector.load %arg0[%c4, %c0_19] : memref<64x96xf32, #tpu.memory_space<vmem>>, vector<60x96xf32>
    %c4_20 = arith.constant 4 : index
    %c0_21 = arith.constant 0 : index
    %c0_22 = arith.constant 0 : index
    %20 = vector.load %arg1[%c4_20, %c0_21, %c0_22] : memref<5x96x168xf32, #tpu.memory_space<vmem>>, vector<1x96x168xf32>
    %21 = vector.shape_cast %20 : vector<1x96x168xf32> to vector<96x168xf32>
    %cst_23 = arith.constant dense<0.000000e+00> : vector<60x168xf32>
    %22 = tpu.matmul %19, %21, %cst_23 {dimension_numbers = #tpu.dot_dimension_numbers<[1], [0], [0], [1], [0, 0, 1, 1], [], []>} : vector<60x96xf32>, vector<96x168xf32>, vector<60x168xf32> -> vector<60x168xf32>
    %23 = arith.addf %18, %22 : vector<60x168xf32>
    %c0_24 = arith.constant 0 : index
    %c0_25 = arith.constant 0 : index
    %24 = vector.load %arg2[%c0_24, %c0_25] : memref<1x168xf32, #tpu.memory_space<vmem>>, vector<1x168xf32>
    %25 = vector.broadcast %24 : vector<1x168xf32> to vector<60x168xf32>
    %26 = arith.addf %23, %25 : vector<60x168xf32>
    %cst_26 = arith.constant 0.000000e+00 : f32
    %27 = vector.broadcast %cst_26 : f32 to vector<60x168xf32>
    %28 = arith.maximumf %26, %27 : vector<60x168xf32>
    %29 = vector.extract_strided_slice %28 {offsets = [0, 0], sizes = [59, 167], strides = [1, 1]} : vector<60x168xf32> to vector<59x167xf32>
    %30 = vector.extract_strided_slice %28 {offsets = [0, 1], sizes = [59, 167], strides = [1, 1]} : vector<60x168xf32> to vector<59x167xf32>
    %31 = arith.maximumf %29, %30 : vector<59x167xf32>
    %32 = vector.extract_strided_slice %28 {offsets = [1, 0], sizes = [59, 167], strides = [1, 1]} : vector<60x168xf32> to vector<59x167xf32>
    %33 = vector.extract_strided_slice %28 {offsets = [1, 1], sizes = [59, 167], strides = [1, 1]} : vector<60x168xf32> to vector<59x167xf32>
    %34 = arith.maximumf %32, %33 : vector<59x167xf32>
    %35 = arith.maximumf %31, %34 : vector<59x167xf32>
    %c0_27 = arith.constant 0 : index
    %c0_28 = arith.constant 0 : index
    %36 = vector.load %arg3[%c0_27, %c0_28] : memref<32x59xf32, #tpu.memory_space<vmem>>, vector<32x59xf32>
    %c0_29 = arith.constant 0 : index
    %c0_30 = arith.constant 0 : index
    %37 = vector.load %arg4[%c0_29, %c0_30] : memref<167x84xf32, #tpu.memory_space<vmem>>, vector<167x84xf32>
    %cst_31 = arith.constant dense<0.000000e+00> : vector<59x84xf32>
    %38 = tpu.matmul %35, %37, %cst_31 {dimension_numbers = #tpu.dot_dimension_numbers<[1], [0], [0], [1], [0, 0, 1, 1], [], []>} : vector<59x167xf32>, vector<167x84xf32>, vector<59x84xf32> -> vector<59x84xf32>
    %cst_32 = arith.constant dense<0.000000e+00> : vector<32x84xf32>
    %39 = tpu.matmul %36, %38, %cst_32 {dimension_numbers = #tpu.dot_dimension_numbers<[1], [0], [0], [1], [0, 0, 1, 1], [], []>} : vector<32x59xf32>, vector<59x84xf32>, vector<32x84xf32> -> vector<32x84xf32>
    %40 = vector.extract_strided_slice %39 {offsets = [0, 0], sizes = [26, 84], strides = [1, 1]} : vector<32x84xf32> to vector<26x84xf32>
    %c0_33 = arith.constant 0 : index
    %c0_34 = arith.constant 0 : index
    %c0_35 = arith.constant 0 : index
    %41 = vector.load %arg5[%c0_33, %c0_34, %c0_35] : memref<5x84x160xf32, #tpu.memory_space<vmem>>, vector<1x84x160xf32>
    %42 = vector.shape_cast %41 : vector<1x84x160xf32> to vector<84x160xf32>
    %cst_36 = arith.constant dense<0.000000e+00> : vector<26x160xf32>
    %43 = tpu.matmul %40, %42, %cst_36 {dimension_numbers = #tpu.dot_dimension_numbers<[1], [0], [0], [1], [0, 0, 1, 1], [], []>} : vector<26x84xf32>, vector<84x160xf32>, vector<26x160xf32> -> vector<26x160xf32>
    %44 = vector.extract_strided_slice %39 {offsets = [1, 0], sizes = [26, 84], strides = [1, 1]} : vector<32x84xf32> to vector<26x84xf32>
    %c1_37 = arith.constant 1 : index
    %c0_38 = arith.constant 0 : index
    %c0_39 = arith.constant 0 : index
    %45 = vector.load %arg5[%c1_37, %c0_38, %c0_39] : memref<5x84x160xf32, #tpu.memory_space<vmem>>, vector<1x84x160xf32>
    %46 = vector.shape_cast %45 : vector<1x84x160xf32> to vector<84x160xf32>
    %cst_40 = arith.constant dense<0.000000e+00> : vector<26x160xf32>
    %47 = tpu.matmul %44, %46, %cst_40 {dimension_numbers = #tpu.dot_dimension_numbers<[1], [0], [0], [1], [0, 0, 1, 1], [], []>} : vector<26x84xf32>, vector<84x160xf32>, vector<26x160xf32> -> vector<26x160xf32>
    %48 = arith.addf %43, %47 : vector<26x160xf32>
    %49 = vector.extract_strided_slice %39 {offsets = [2, 0], sizes = [26, 84], strides = [1, 1]} : vector<32x84xf32> to vector<26x84xf32>
    %c2_41 = arith.constant 2 : index
    %c0_42 = arith.constant 0 : index
    %c0_43 = arith.constant 0 : index
    %50 = vector.load %arg5[%c2_41, %c0_42, %c0_43] : memref<5x84x160xf32, #tpu.memory_space<vmem>>, vector<1x84x160xf32>
    %51 = vector.shape_cast %50 : vector<1x84x160xf32> to vector<84x160xf32>
    %cst_44 = arith.constant dense<0.000000e+00> : vector<26x160xf32>
    %52 = tpu.matmul %49, %51, %cst_44 {dimension_numbers = #tpu.dot_dimension_numbers<[1], [0], [0], [1], [0, 0, 1, 1], [], []>} : vector<26x84xf32>, vector<84x160xf32>, vector<26x160xf32> -> vector<26x160xf32>
    %53 = arith.addf %48, %52 : vector<26x160xf32>
    %54 = vector.extract_strided_slice %39 {offsets = [3, 0], sizes = [26, 84], strides = [1, 1]} : vector<32x84xf32> to vector<26x84xf32>
    %c3_45 = arith.constant 3 : index
    %c0_46 = arith.constant 0 : index
    %c0_47 = arith.constant 0 : index
    %55 = vector.load %arg5[%c3_45, %c0_46, %c0_47] : memref<5x84x160xf32, #tpu.memory_space<vmem>>, vector<1x84x160xf32>
    %56 = vector.shape_cast %55 : vector<1x84x160xf32> to vector<84x160xf32>
    %cst_48 = arith.constant dense<0.000000e+00> : vector<26x160xf32>
    %57 = tpu.matmul %54, %56, %cst_48 {dimension_numbers = #tpu.dot_dimension_numbers<[1], [0], [0], [1], [0, 0, 1, 1], [], []>} : vector<26x84xf32>, vector<84x160xf32>, vector<26x160xf32> -> vector<26x160xf32>
    %58 = arith.addf %53, %57 : vector<26x160xf32>
    %59 = vector.extract_strided_slice %39 {offsets = [4, 0], sizes = [26, 84], strides = [1, 1]} : vector<32x84xf32> to vector<26x84xf32>
    %c4_49 = arith.constant 4 : index
    %c0_50 = arith.constant 0 : index
    %c0_51 = arith.constant 0 : index
    %60 = vector.load %arg5[%c4_49, %c0_50, %c0_51] : memref<5x84x160xf32, #tpu.memory_space<vmem>>, vector<1x84x160xf32>
    %61 = vector.shape_cast %60 : vector<1x84x160xf32> to vector<84x160xf32>
    %cst_52 = arith.constant dense<0.000000e+00> : vector<26x160xf32>
    %62 = tpu.matmul %59, %61, %cst_52 {dimension_numbers = #tpu.dot_dimension_numbers<[1], [0], [0], [1], [0, 0, 1, 1], [], []>} : vector<26x84xf32>, vector<84x160xf32>, vector<26x160xf32> -> vector<26x160xf32>
    %63 = arith.addf %58, %62 : vector<26x160xf32>
    %c0_53 = arith.constant 0 : index
    %c0_54 = arith.constant 0 : index
    %64 = vector.load %arg6[%c0_53, %c0_54] : memref<1x160xf32, #tpu.memory_space<vmem>>, vector<1x160xf32>
    %65 = vector.broadcast %64 : vector<1x160xf32> to vector<26x160xf32>
    %66 = arith.addf %63, %65 : vector<26x160xf32>
    %cst_55 = arith.constant 0.000000e+00 : f32
    %67 = vector.broadcast %cst_55 : f32 to vector<26x160xf32>
    %68 = arith.maximumf %66, %67 : vector<26x160xf32>
    %69 = vector.extract_strided_slice %68 {offsets = [0, 0], sizes = [25, 159], strides = [1, 1]} : vector<26x160xf32> to vector<25x159xf32>
    %70 = vector.extract_strided_slice %68 {offsets = [0, 1], sizes = [25, 159], strides = [1, 1]} : vector<26x160xf32> to vector<25x159xf32>
    %71 = arith.maximumf %69, %70 : vector<25x159xf32>
    %72 = vector.extract_strided_slice %68 {offsets = [1, 0], sizes = [25, 159], strides = [1, 1]} : vector<26x160xf32> to vector<25x159xf32>
    %73 = vector.extract_strided_slice %68 {offsets = [1, 1], sizes = [25, 159], strides = [1, 1]} : vector<26x160xf32> to vector<25x159xf32>
    %74 = arith.maximumf %72, %73 : vector<25x159xf32>
    %75 = arith.maximumf %71, %74 : vector<25x159xf32>
    %c0_56 = arith.constant 0 : index
    %c0_57 = arith.constant 0 : index
    %76 = vector.load %arg7[%c0_56, %c0_57] : memref<10x25xf32, #tpu.memory_space<vmem>>, vector<10x25xf32>
    %c0_58 = arith.constant 0 : index
    %c0_59 = arith.constant 0 : index
    %77 = vector.load %arg8[%c0_58, %c0_59] : memref<159x80xf32, #tpu.memory_space<vmem>>, vector<159x80xf32>
    %cst_60 = arith.constant dense<0.000000e+00> : vector<25x80xf32>
    %78 = tpu.matmul %75, %77, %cst_60 {dimension_numbers = #tpu.dot_dimension_numbers<[1], [0], [0], [1], [0, 0, 1, 1], [], []>} : vector<25x159xf32>, vector<159x80xf32>, vector<25x80xf32> -> vector<25x80xf32>
    %cst_61 = arith.constant dense<0.000000e+00> : vector<10x80xf32>
    %79 = tpu.matmul %76, %78, %cst_61 {dimension_numbers = #tpu.dot_dimension_numbers<[1], [0], [0], [1], [0, 0, 1, 1], [], []>} : vector<10x25xf32>, vector<25x80xf32>, vector<10x80xf32> -> vector<10x80xf32>
    %80 = vector.extract_strided_slice %79 {offsets = [0, 0], sizes = [2, 80], strides = [1, 1]} : vector<10x80xf32> to vector<2x80xf32>
    %c0_62 = arith.constant 0 : index
    %c0_63 = arith.constant 0 : index
    %c0_64 = arith.constant 0 : index
    %81 = vector.load %arg9[%c0_62, %c0_63, %c0_64] : memref<5x80x256xf32, #tpu.memory_space<vmem>>, vector<1x80x256xf32>
    %82 = vector.shape_cast %81 : vector<1x80x256xf32> to vector<80x256xf32>
    %cst_65 = arith.constant dense<0.000000e+00> : vector<2x256xf32>
    %83 = tpu.matmul %80, %82, %cst_65 {dimension_numbers = #tpu.dot_dimension_numbers<[1], [0], [0], [1], [0, 0, 1, 1], [], []>} : vector<2x80xf32>, vector<80x256xf32>, vector<2x256xf32> -> vector<2x256xf32>
    %84 = vector.extract_strided_slice %79 {offsets = [2, 0], sizes = [2, 80], strides = [1, 1]} : vector<10x80xf32> to vector<2x80xf32>
    %c1_66 = arith.constant 1 : index
    %c0_67 = arith.constant 0 : index
    %c0_68 = arith.constant 0 : index
    %85 = vector.load %arg9[%c1_66, %c0_67, %c0_68] : memref<5x80x256xf32, #tpu.memory_space<vmem>>, vector<1x80x256xf32>
    %86 = vector.shape_cast %85 : vector<1x80x256xf32> to vector<80x256xf32>
    %cst_69 = arith.constant dense<0.000000e+00> : vector<2x256xf32>
    %87 = tpu.matmul %84, %86, %cst_69 {dimension_numbers = #tpu.dot_dimension_numbers<[1], [0], [0], [1], [0, 0, 1, 1], [], []>} : vector<2x80xf32>, vector<80x256xf32>, vector<2x256xf32> -> vector<2x256xf32>
    %88 = arith.addf %83, %87 : vector<2x256xf32>
    %89 = vector.extract_strided_slice %79 {offsets = [4, 0], sizes = [2, 80], strides = [1, 1]} : vector<10x80xf32> to vector<2x80xf32>
    %c2_70 = arith.constant 2 : index
    %c0_71 = arith.constant 0 : index
    %c0_72 = arith.constant 0 : index
    %90 = vector.load %arg9[%c2_70, %c0_71, %c0_72] : memref<5x80x256xf32, #tpu.memory_space<vmem>>, vector<1x80x256xf32>
    %91 = vector.shape_cast %90 : vector<1x80x256xf32> to vector<80x256xf32>
    %cst_73 = arith.constant dense<0.000000e+00> : vector<2x256xf32>
    %92 = tpu.matmul %89, %91, %cst_73 {dimension_numbers = #tpu.dot_dimension_numbers<[1], [0], [0], [1], [0, 0, 1, 1], [], []>} : vector<2x80xf32>, vector<80x256xf32>, vector<2x256xf32> -> vector<2x256xf32>
    %93 = arith.addf %88, %92 : vector<2x256xf32>
    %94 = vector.extract_strided_slice %79 {offsets = [6, 0], sizes = [2, 80], strides = [1, 1]} : vector<10x80xf32> to vector<2x80xf32>
    %c3_74 = arith.constant 3 : index
    %c0_75 = arith.constant 0 : index
    %c0_76 = arith.constant 0 : index
    %95 = vector.load %arg9[%c3_74, %c0_75, %c0_76] : memref<5x80x256xf32, #tpu.memory_space<vmem>>, vector<1x80x256xf32>
    %96 = vector.shape_cast %95 : vector<1x80x256xf32> to vector<80x256xf32>
    %cst_77 = arith.constant dense<0.000000e+00> : vector<2x256xf32>
    %97 = tpu.matmul %94, %96, %cst_77 {dimension_numbers = #tpu.dot_dimension_numbers<[1], [0], [0], [1], [0, 0, 1, 1], [], []>} : vector<2x80xf32>, vector<80x256xf32>, vector<2x256xf32> -> vector<2x256xf32>
    %98 = arith.addf %93, %97 : vector<2x256xf32>
    %99 = vector.extract_strided_slice %79 {offsets = [8, 0], sizes = [2, 80], strides = [1, 1]} : vector<10x80xf32> to vector<2x80xf32>
    %c4_78 = arith.constant 4 : index
    %c0_79 = arith.constant 0 : index
    %c0_80 = arith.constant 0 : index
    %100 = vector.load %arg9[%c4_78, %c0_79, %c0_80] : memref<5x80x256xf32, #tpu.memory_space<vmem>>, vector<1x80x256xf32>
    %101 = vector.shape_cast %100 : vector<1x80x256xf32> to vector<80x256xf32>
    %cst_81 = arith.constant dense<0.000000e+00> : vector<2x256xf32>
    %102 = tpu.matmul %99, %101, %cst_81 {dimension_numbers = #tpu.dot_dimension_numbers<[1], [0], [0], [1], [0, 0, 1, 1], [], []>} : vector<2x80xf32>, vector<80x256xf32>, vector<2x256xf32> -> vector<2x256xf32>
    %103 = arith.addf %98, %102 : vector<2x256xf32>
    %c0_82 = arith.constant 0 : index
    %c0_83 = arith.constant 0 : index
    %104 = vector.load %arg10[%c0_82, %c0_83] : memref<1x256xf32, #tpu.memory_space<vmem>>, vector<1x256xf32>
    %105 = vector.broadcast %104 : vector<1x256xf32> to vector<2x256xf32>
    %106 = arith.addf %103, %105 : vector<2x256xf32>
    %cst_84 = arith.constant 0.000000e+00 : f32
    %107 = vector.broadcast %cst_84 : f32 to vector<2x256xf32>
    %108 = arith.maximumf %106, %107 : vector<2x256xf32>
    %c0_85 = arith.constant 0 : index
    %c0_86 = arith.constant 0 : index
    %109 = vector.load %arg11[%c0_85, %c0_86] : memref<256x128xf32, #tpu.memory_space<vmem>>, vector<256x128xf32>
    %cst_87 = arith.constant dense<0.000000e+00> : vector<2x128xf32>
    %110 = tpu.matmul %108, %109, %cst_87 {dimension_numbers = #tpu.dot_dimension_numbers<[1], [0], [0], [1], [0, 0, 1, 1], [], []>} : vector<2x256xf32>, vector<256x128xf32>, vector<2x128xf32> -> vector<2x128xf32>
    %c0_88 = arith.constant 0 : index
    %c0_89 = arith.constant 0 : index
    %111 = vector.load %arg12[%c0_88, %c0_89] : memref<1x128xf32, #tpu.memory_space<vmem>>, vector<1x128xf32>
    %112 = vector.broadcast %111 : vector<1x128xf32> to vector<2x128xf32>
    %113 = arith.addf %110, %112 : vector<2x128xf32>
    %cst_90 = arith.constant 0.000000e+00 : f32
    %114 = vector.broadcast %cst_90 : f32 to vector<2x128xf32>
    %115 = arith.maximumf %113, %114 : vector<2x128xf32>
    %c0_91 = arith.constant 0 : index
    %c0_92 = arith.constant 0 : index
    %116 = vector.load %arg13[%c0_91, %c0_92] : memref<128x100xf32, #tpu.memory_space<vmem>>, vector<128x100xf32>
    %cst_93 = arith.constant dense<0.000000e+00> : vector<2x100xf32>
    %117 = tpu.matmul %115, %116, %cst_93 {dimension_numbers = #tpu.dot_dimension_numbers<[1], [0], [0], [1], [0, 0, 1, 1], [], []>} : vector<2x128xf32>, vector<128x100xf32>, vector<2x100xf32> -> vector<2x100xf32>
    %c0_94 = arith.constant 0 : index
    %c0_95 = arith.constant 0 : index
    %118 = vector.load %arg14[%c0_94, %c0_95] : memref<1x100xf32, #tpu.memory_space<vmem>>, vector<1x100xf32>
    %119 = vector.broadcast %118 : vector<1x100xf32> to vector<2x100xf32>
    %120 = arith.addf %117, %119 : vector<2x100xf32>
    %c0_96 = arith.constant 0 : index
    %c0_97 = arith.constant 0 : index
    %121 = vector.load %arg15[%c0_96, %c0_97] : memref<2x100xf32, #tpu.memory_space<vmem>>, vector<2x100xf32>
    tpu.vector_store %arg15[%c0_96, %c0_97], %120 {strides = array<i32>} : memref<2x100xf32, #tpu.memory_space<vmem>>, vector<2x100xf32>,
    return
  }
}

</mosaic_0001>

<llo_original>
// kernel: _lenet_pallas.1
$region0: #{_lenet_pallas.1}
  #allocation0 [shape = 'u32[]', space=smem, size = 0x4, offset = 0x4, fixed_abs, tag = 'smem constant byte address 0x4 - core index']
  #allocation1 [shape = 'u32[144,128]{1,0:T(1,128)}', space=vmem, size = 0x12000, scoped, tag = 'internal scratch']
  %s0 = inlined_call_operand.vmem [shape: f32[64,96], index: 0, kind: input, shape index: {}]
  %s1 = inlined_call_operand.vmem [shape: f32[5,96,168], index: 1, kind: input, shape index: {}]
  %s2 = inlined_call_operand.vmem [shape: f32[1,168], index: 2, kind: input, shape index: {}]
  %s3 = inlined_call_operand.vmem [shape: f32[32,59], index: 3, kind: input, shape index: {}]
  %s4 = inlined_call_operand.vmem [shape: f32[167,84], index: 4, kind: input, shape index: {}]
  %s5 = inlined_call_operand.vmem [shape: f32[5,84,160], index: 5, kind: input, shape index: {}]
  %s6 = inlined_call_operand.vmem [shape: f32[1,160], index: 6, kind: input, shape index: {}]
  %s7 = inlined_call_operand.vmem [shape: f32[10,25], index: 7, kind: input, shape index: {}]
  %s8 = inlined_call_operand.vmem [shape: f32[159,80], index: 8, kind: input, shape index: {}]
  %s9 = inlined_call_operand.vmem [shape: f32[5,80,256], index: 9, kind: input, shape index: {}]
  %s10 = inlined_call_operand.vmem [shape: f32[1,256], index: 10, kind: input, shape index: {}]
  %s11 = inlined_call_operand.vmem [shape: f32[256,128], index: 11, kind: input, shape index: {}]
  %s12 = inlined_call_operand.vmem [shape: f32[1,128], index: 12, kind: input, shape index: {}]
  %s13 = inlined_call_operand.vmem [shape: f32[128,100], index: 13, kind: input, shape index: {}]
  %s14 = inlined_call_operand.vmem [shape: f32[1,100], index: 14, kind: input, shape index: {}]
  %s15 = inlined_call_operand.hbm [shape: f32[2,100], index: 15, kind: output, shape index: {}]
  %s16 = sld [smem:[#allocation0]]
  $region70: #{_lenet_pallas.1} parent=0
    _
  %s18 = ssub.s32 1, %s16
  %s19 = scalar_select 0, %s18, %s16
  $region1: #{_lenet_pallas.1} parent=0
    #allocation2 [shape = 'u8[1024]{0}', space=vmem, size = 0x400, scoped, tag = 'output window, operand 0, single buffered']
    #allocation3 [shape = 's32[1]{0}', space=sflag, size = 0x4, scoped, tag = 'scoped memory for _lenet_pallas.1']
    %20 = vsyncpa [#allocation3], 0
    // Predicated region
    $region2: #{_lenet_pallas.1} parent=1 // pred_check
      _
    $region3: #{_lenet_pallas.1} parent=1 // pred_check_branch
      %22 = sbr.rel (0) target = $region5
    $region4: #{_lenet_pallas.1} parent=1 // pred_region
      _
    $region5: #{_lenet_pallas.1} parent=1 // pred_fallthru
      _
    // Predicated region
    $region6: #{_lenet_pallas.1} parent=1 // pred_check
      _
    $region7: #{_lenet_pallas.1} parent=1 // pred_check_branch
      %24 = sbr.rel (0) target = $region9
    $region8: #{_lenet_pallas.1} parent=1 // pred_region
      _
    $region9: #{_lenet_pallas.1} parent=1 // pred_fallthru
      _
    // Predicated region
    $region10: #{_lenet_pallas.1} parent=1 // pred_check
      _
    $region11: #{_lenet_pallas.1} parent=1 // pred_check_branch
      %26 = sbr.rel (0) target = $region13
    $region12: #{_lenet_pallas.1} parent=1 // pred_region
      _
    $region13: #{_lenet_pallas.1} parent=1 // pred_fallthru
      _
    // Predicated region
    $region14: #{_lenet_pallas.1} parent=1 // pred_check
      _
    $region15: #{_lenet_pallas.1} parent=1 // pred_check_branch
      %28 = sbr.rel (0) target = $region17
    $region16: #{_lenet_pallas.1} parent=1 // pred_region
      _
    $region17: #{_lenet_pallas.1} parent=1 // pred_fallthru
      _
    // Predicated region
    $region18: #{_lenet_pallas.1} parent=1 // pred_check
      _
    $region19: #{_lenet_pallas.1} parent=1 // pred_check_branch
      %30 = sbr.rel (0) target = $region21
    $region20: #{_lenet_pallas.1} parent=1 // pred_region
      _
    $region21: #{_lenet_pallas.1} parent=1 // pred_fallthru
      _
    // Predicated region
    $region22: #{_lenet_pallas.1} parent=1 // pred_check
      _
    $region23: #{_lenet_pallas.1} parent=1 // pred_check_branch
      %32 = sbr.rel (0) target = $region25
    $region24: #{_lenet_pallas.1} parent=1 // pred_region
      _
    $region25: #{_lenet_pallas.1} parent=1 // pred_fallthru
      _
    // Predicated region
    $region26: #{_lenet_pallas.1} parent=1 // pred_check
      _
    $region27: #{_lenet_pallas.1} parent=1 // pred_check_branch
      %34 = sbr.rel (0) target = $region29
    $region28: #{_lenet_pallas.1} parent=1 // pred_region
      _
    $region29: #{_lenet_pallas.1} parent=1 // pred_fallthru
      _
    // Predicated region
    $region30: #{_lenet_pallas.1} parent=1 // pred_check
      _
    $region31: #{_lenet_pallas.1} parent=1 // pred_check_branch
      %36 = sbr.rel (0) target = $region33
    $region32: #{_lenet_pallas.1} parent=1 // pred_region
      _
    $region33: #{_lenet_pallas.1} parent=1 // pred_fallthru
      _
    // Predicated region
    $region34: #{_lenet_pallas.1} parent=1 // pred_check
      _
    $region35: #{_lenet_pallas.1} parent=1 // pred_check_branch
      %38 = sbr.rel (0) target = $region37
    $region36: #{_lenet_pallas.1} parent=1 // pred_region
      _
    $region37: #{_lenet_pallas.1} parent=1 // pred_fallthru
      _
    // Predicated region
    $region38: #{_lenet_pallas.1} parent=1 // pred_check
      _
    $region39: #{_lenet_pallas.1} parent=1 // pred_check_branch
      %40 = sbr.rel (0) target = $region41
    $region40: #{_lenet_pallas.1} parent=1 // pred_region
      _
    $region41: #{_lenet_pallas.1} parent=1 // pred_fallthru
      _
    // Predicated region
    $region42: #{_lenet_pallas.1} parent=1 // pred_check
      _
    $region43: #{_lenet_pallas.1} parent=1 // pred_check_branch
      %42 = sbr.rel (0) target = $region45
    $region44: #{_lenet_pallas.1} parent=1 // pred_region
      _
    $region45: #{_lenet_pallas.1} parent=1 // pred_fallthru
      _
    // Predicated region
    $region46: #{_lenet_pallas.1} parent=1 // pred_check
      _
    $region47: #{_lenet_pallas.1} parent=1 // pred_check_branch
      %44 = sbr.rel (0) target = $region49
    $region48: #{_lenet_pallas.1} parent=1 // pred_region
      _
    $region49: #{_lenet_pallas.1} parent=1 // pred_fallthru
      _
    // Predicated region
    $region50: #{_lenet_pallas.1} parent=1 // pred_check
      _
    $region51: #{_lenet_pallas.1} parent=1 // pred_check_branch
      %46 = sbr.rel (0) target = $region53
    $region52: #{_lenet_pallas.1} parent=1 // pred_region
      _
    $region53: #{_lenet_pallas.1} parent=1 // pred_fallthru
      _
    // Predicated region
    $region54: #{_lenet_pallas.1} parent=1 // pred_check
      _
    $region55: #{_lenet_pallas.1} parent=1 // pred_check_branch
      %48 = sbr.rel (0) target = $region57
    $region56: #{_lenet_pallas.1} parent=1 // pred_region
      _
    $region57: #{_lenet_pallas.1} parent=1 // pred_fallthru
      _
    // Predicated region
    $region58: #{_lenet_pallas.1} parent=1 // pred_check
      _
    $region59: #{_lenet_pallas.1} parent=1 // pred_check_branch
      %50 = sbr.rel (0) target = $region61
    $region60: #{_lenet_pallas.1} parent=1 // pred_region
      _
    $region61: #{_lenet_pallas.1} parent=1 // pred_fallthru
      _
    %v51 = vld [vmem:[%s0] sm:$0xff]
    %v52 = vld [vmem:[%s0 + $0x8] sm:$0xff]
    %v53 = vld [vmem:[%s0 + $0x10] sm:$0xff]
    %v54 = vld [vmem:[%s0 + $0x18] sm:$0xff]
    %v55 = vld [vmem:[%s0 + $0x20] sm:$0xff]
    %v56 = vld [vmem:[%s0 + $0x28] sm:$0xff]
    %v57 = vld [vmem:[%s0 + $0x30] sm:$0xff]
    %v58 = vld [vmem:[%s0 + $0x38] sm:$0xf]
    %v59 = vld [vmem:[%s1] sm:$0xff]
    %v60 = vld [vmem:[%s1 + $0x8] sm:$0xff]
    %v61 = vld [vmem:[%s1 + $0x10] sm:$0xff]
    %v62 = vld [vmem:[%s1 + $0x18] sm:$0xff]
    %v63 = vld [vmem:[%s1 + $0x20] sm:$0xff]
    %v64 = vld [vmem:[%s1 + $0x28] sm:$0xff]
    %v65 = vld [vmem:[%s1 + $0x30] sm:$0xff]
    %v66 = vld [vmem:[%s1 + $0x38] sm:$0xff]
    %v67 = vld [vmem:[%s1 + $0x40] sm:$0xff]
    %v68 = vld [vmem:[%s1 + $0x48] sm:$0xff]
    %v69 = vld [vmem:[%s1 + $0x50] sm:$0xff]
    %v70 = vld [vmem:[%s1 + $0x58] sm:$0xff]
    %v71 = vld [vmem:[%s1 + $0x60] sm:$0xff]
    %v72 = vld [vmem:[%s1 + $0x68] sm:$0xff]
    %v73 = vld [vmem:[%s1 + $0x70] sm:$0xff]
    %v74 = vld [vmem:[%s1 + $0x78] sm:$0xff]
    %v75 = vld [vmem:[%s1 + $0x80] sm:$0xff]
    %v76 = vld [vmem:[%s1 + $0x88] sm:$0xff]
    %v77 = vld [vmem:[%s1 + $0x90] sm:$0xff]
    %v78 = vld [vmem:[%s1 + $0x98] sm:$0xff]
    %v79 = vld [vmem:[%s1 + $0xa0] sm:$0xff]
    %v80 = vld [vmem:[%s1 + $0xa8] sm:$0xff]
    %v81 = vld [vmem:[%s1 + $0xb0] sm:$0xff]
    %v82 = vld [vmem:[%s1 + $0xb8] sm:$0xff]
    %v83 = vld [vmem:[%s0 + $0x1] sm:$0xff]
    %v84 = vld [vmem:[%s0 + $0x9] sm:$0xff]
    %v85 = vld [vmem:[%s0 + $0x11] sm:$0xff]
    %v86 = vld [vmem:[%s0 + $0x19] sm:$0xff]
    %v87 = vld [vmem:[%s0 + $0x21] sm:$0xff]
    %v88 = vld [vmem:[%s0 + $0x29] sm:$0xff]
    %v89 = vld [vmem:[%s0 + $0x31] sm:$0xff]
    %v90 = vld [vmem:[%s0 + $0x39] sm:$0xf]
    %s91 = scalar_lea.vmem %s1, 192
    %v92 = vld [vmem:[%s91] sm:$0xff]
    %v93 = vld [vmem:[%s91 + $0x8] sm:$0xff]
    %v94 = vld [vmem:[%s91 + $0x10] sm:$0xff]
    %v95 = vld [vmem:[%s91 + $0x18] sm:$0xff]
    %v96 = vld [vmem:[%s91 + $0x20] sm:$0xff]
    %v97 = vld [vmem:[%s91 + $0x28] sm:$0xff]
    %v98 = vld [vmem:[%s91 + $0x30] sm:$0xff]
    %v99 = vld [vmem:[%s91 + $0x38] sm:$0xff]
    %v100 = vld [vmem:[%s91 + $0x40] sm:$0xff]
    %v101 = vld [vmem:[%s91 + $0x48] sm:$0xff]
    %v102 = vld [vmem:[%s91 + $0x50] sm:$0xff]
    %v103 = vld [vmem:[%s91 + $0x58] sm:$0xff]
    %v104 = vld [vmem:[%s91 + $0x60] sm:$0xff]
    %v105 = vld [vmem:[%s91 + $0x68] sm:$0xff]
    %v106 = vld [vmem:[%s91 + $0x70] sm:$0xff]
    %v107 = vld [vmem:[%s91 + $0x78] sm:$0xff]
    %v108 = vld [vmem:[%s91 + $0x80] sm:$0xff]
    %v109 = vld [vmem:[%s91 + $0x88] sm:$0xff]
    %v110 = vld [vmem:[%s91 + $0x90] sm:$0xff]
    %v111 = vld [vmem:[%s91 + $0x98] sm:$0xff]
    %v112 = vld [vmem:[%s91 + $0xa0] sm:$0xff]
    %v113 = vld [vmem:[%s91 + $0xa8] sm:$0xff]
    %v114 = vld [vmem:[%s91 + $0xb0] sm:$0xff]
    %v115 = vld [vmem:[%s91 + $0xb8] sm:$0xff]
    %vm116 = vcmask 785408
    %v118 = vsel %vm116, %v83, 0
    %v121 = vsel %vm116, %v84, 0
    %v124 = vsel %vm116, %v85, 0
    %v127 = vsel %vm116, %v86, 0
    %v130 = vsel %vm116, %v87, 0
    %v133 = vsel %vm116, %v88, 0
    %v136 = vsel %vm116, %v89, 0
    %v139 = vsel %vm116, %v90, 0
    %141 = vmatprep.subr.mxu0 %v93
    %142 = vmatpush1.msra.mxu0 %v92
    %143 = vmatprep.subr.mxu0 %v95
    %144 = vmatpush1.msra.mxu0 %v94
    %145 = vmatprep.subr.mxu0 %v97
    %146 = vmatpush1.msra.mxu0 %v96
    %147 = vmatprep.subr.mxu0 %v99
    %148 = vmatpush1.msra.mxu0 %v98
    %149 = vmatprep.subr.mxu0 %v101
    %150 = vmatpush1.msra.mxu0 %v100
    %151 = vmatprep.subr.mxu0 %v103
    %152 = vmatpush1.msra.mxu0 %v102
    %153 = vmatprep.subr.mxu0 %v105
    %154 = vmatpush1.msra.mxu0 %v104
    %155 = vmatprep.subr.mxu0 %v107
    %156 = vmatpush1.msra.mxu0 %v106
    %157 = vmatprep.subr.mxu0 %v109
    %158 = vmatpush1.msra.mxu0 %v108
    %159 = vmatprep.subr.mxu0 %v111
    %160 = vmatpush1.msra.mxu0 %v110
    %161 = vmatprep.subr.mxu0 %v113
    %162 = vmatpush1.msra.mxu0 %v112
    %163 = vmatprep.subr.mxu0 %v115
    %164 = vmatpush1.msra.mxu0 %v114
    %165 = vmatprep.subr.mxu0 0.0
    %166 = vmatpush1.msra.mxu0 0.0
    %167 = vmatprep.subr.mxu0 0.0
    %168 = vmatpush1.msra.mxu0 0.0
    %169 = vmatprep.subr.mxu0 0.0
    %170 = vmatpush1.msra.mxu0 0.0
    %171 = vmatprep.subr.mxu0 0.0
    %172 = vmatpush1.msra.mxu0 0.0
    %173 = vmatprep.subr.mxu0 0.0
    %174 = vmatpush1.msra.mxu0 0.0
    %175 = vmatprep.subr.mxu0 0.0
    %176 = vmatpush1.msra.mxu0 0.0
    %177 = vmatprep.subr.mxu0 0.0
    %178 = vmatpush1.msra.mxu0 0.0
    %179 = vmatprep.subr.mxu0 0.0
    %180 = vmatpush1.msra.mxu0 0.0
    %181 = vmatprep.subr.mxu0 0.0
    %182 = vmatpush1.msra.mxu0 0.0
    %183 = vmatprep.subr.mxu0 0.0
    %184 = vmatpush1.msra.mxu0 0.0
    %185 = vmatprep.subr.mxu0 0.0
    %186 = vmatpush1.msra.mxu0 0.0
    %187 = vmatprep.subr.mxu0 0.0
    %188 = vmatpush1.msra.mxu0 0.0
    %189 = vmatprep.subr.mxu0 0.0
    %190 = vmatpush1.msra.mxu0 0.0
    %191 = vmatprep.subr.mxu0 0.0
    %192 = vmatpush1.msra.mxu0 0.0
    %193 = vmatprep.subr.mxu0 0.0
    %194 = vmatpush1.msra.mxu0 0.0
    %195 = vmatprep.subr.mxu0 0.0
    %196 = vmatpush1.msra.mxu0 0.0
    %197 = vmatprep.subr.mxu0 0.0
    %198 = vmatpush1.msra.mxu0 0.0
    %199 = vmatprep.subr.mxu0 0.0
    %200 = vmatpush1.msra.mxu0 0.0
    %201 = vmatprep.subr.mxu0 0.0
    %202 = vmatpush1.msra.mxu0 0.0
    %203 = vmatprep.subr.mxu0 0.0
    %204 = vmatpush1.msra.mxu0 0.0
    %205 = vmatprep.mubr.f32.mxu0 0.0
    %206 = vmatmul.mubr.f32.gmra.mrb[0].mxu0 %v118
    %v207 = vpop.f32.mrb[0].mxu0
    %v208 = vadd.f32 0.0, %v207
    %v209 = vpop.f32.mrb[0].mxu0
    %v210 = vadd.f32 0.0, %v209
    %211 = vmatprep.mubr.f32.mxu0 0.0
    %212 = vmatmul.mubr.f32.gmra.mrb[0].mxu0 %v121
    %v213 = vpop.f32.mrb[0].mxu0
    %v214 = vadd.f32 0.0, %v213
    %v215 = vpop.f32.mrb[0].mxu0
    %v216 = vadd.f32 0.0, %v215
    %217 = vmatprep.mubr.f32.mxu0 0.0
    %218 = vmatmul.mubr.f32.gmra.mrb[0].mxu0 %v124
    %v219 = vpop.f32.mrb[0].mxu0
    %v220 = vadd.f32 0.0, %v219
    %v221 = vpop.f32.mrb[0].mxu0
    %v222 = vadd.f32 0.0, %v221
    %223 = vmatprep.mubr.f32.mxu0 0.0
    %224 = vmatmul.mubr.f32.gmra.mrb[0].mxu0 %v127
    %v225 = vpop.f32.mrb[0].mxu0
    %v226 = vadd.f32 0.0, %v225
    %v227 = vpop.f32.mrb[0].mxu0
    %v228 = vadd.f32 0.0, %v227
    %229 = vmatprep.mubr.f32.mxu0 0.0
    %230 = vmatmul.mubr.f32.gmra.mrb[0].mxu0 %v130
    %v231 = vpop.f32.mrb[0].mxu0
    %v232 = vadd.f32 0.0, %v231
    %v233 = vpop.f32.mrb[0].mxu0
    %v234 = vadd.f32 0.0, %v233
    %235 = vmatprep.mubr.f32.mxu0 0.0
    %236 = vmatmul.mubr.f32.gmra.mrb[0].mxu0 %v133
    %v237 = vpop.f32.mrb[0].mxu0
    %v238 = vadd.f32 0.0, %v237
    %v239 = vpop.f32.mrb[0].mxu0
    %v240 = vadd.f32 0.0, %v239
    %241 = vmatprep.mubr.f32.mxu0 0.0
    %242 = vmatmul.mubr.f32.gmra.mrb[0].mxu0 %v136
    %v243 = vpop.f32.mrb[0].mxu0
    %v244 = vadd.f32 0.0, %v243
    %v245 = vpop.f32.mrb[0].mxu0
    %v246 = vadd.f32 0.0, %v245
    %247 = vmatprep.mubr.f32.mxu0 0.0
    %248 = vmatmul.mubr.f32.gmra.mrb[0].mxu0 %v139
    %v249 = vpop.f32.mrb[0].mxu0
    %v250 = vadd.f32 0.0, %v249
    %v251 = vpop.f32.mrb[0].mxu0
    %v252 = vadd.f32 0.0, %v251
    %253 = vdwg.mxu0
    %v255 = vsel %vm116, %v51, 0
    %v258 = vsel %vm116, %v52, 0
    %v261 = vsel %vm116, %v53, 0
    %v264 = vsel %vm116, %v54, 0
    %v267 = vsel %vm116, %v55, 0
    %v270 = vsel %vm116, %v56, 0
    %v273 = vsel %vm116, %v57, 0
    %v276 = vsel %vm116, %v58, 0
    %278 = vmatprep.subr.mxu0 %v60
    %279 = vmatpush1.msra.mxu0 %v59
    %280 = vmatprep.subr.mxu0 %v62
    %281 = vmatpush1.msra.mxu0 %v61
    %282 = vmatprep.subr.mxu0 %v64
    %283 = vmatpush1.msra.mxu0 %v63
    %284 = vmatprep.subr.mxu0 %v66
    %285 = vmatpush1.msra.mxu0 %v65
    %286 = vmatprep.subr.mxu0 %v68
    %287 = vmatpush1.msra.mxu0 %v67
    %288 = vmatprep.subr.mxu0 %v70
    %289 = vmatpush1.msra.mxu0 %v69
    %290 = vmatprep.subr.mxu0 %v72
    %291 = vmatpush1.msra.mxu0 %v71
    %292 = vmatprep.subr.mxu0 %v74
    %293 = vmatpush1.msra.mxu0 %v73
    %294 = vmatprep.subr.mxu0 %v76
    %295 = vmatpush1.msra.mxu0 %v75
    %296 = vmatprep.subr.mxu0 %v78
    %297 = vmatpush1.msra.mxu0 %v77
    %298 = vmatprep.subr.mxu0 %v80
    %299 = vmatpush1.msra.mxu0 %v79
    %300 = vmatprep.subr.mxu0 %v82
    %301 = vmatpush1.msra.mxu0 %v81
    %302 = vmatprep.subr.mxu0 0.0
    %303 = vmatpush1.msra.mxu0 0.0
    %304 = vmatprep.subr.mxu0 0.0
    %305 = vmatpush1.msra.mxu0 0.0
    %306 = vmatprep.subr.mxu0 0.0
    %307 = vmatpush1.msra.mxu0 0.0
    %308 = vmatprep.subr.mxu0 0.0
    %309 = vmatpush1.msra.mxu0 0.0
    %310 = vmatprep.subr.mxu0 0.0
    %311 = vmatpush1.msra.mxu0 0.0
    %312 = vmatprep.subr.mxu0 0.0
    %313 = vmatpush1.msra.mxu0 0.0
    %314 = vmatprep.subr.mxu0 0.0
    %315 = vmatpush1.msra.mxu0 0.0
    %316 = vmatprep.subr.mxu0 0.0
    %317 = vmatpush1.msra.mxu0 0.0
    %318 = vmatprep.subr.mxu0 0.0
    %319 = vmatpush1.msra.mxu0 0.0
    %320 = vmatprep.subr.mxu0 0.0
    %321 = vmatpush1.msra.mxu0 0.0
    %322 = vmatprep.subr.mxu0 0.0
    %323 = vmatpush1.msra.mxu0 0.0
    %324 = vmatprep.subr.mxu0 0.0
    %325 = vmatpush1.msra.mxu0 0.0
    %326 = vmatprep.subr.mxu0 0.0
    %327 = vmatpush1.msra.mxu0 0.0
    %328 = vmatprep.subr.mxu0 0.0
    %329 = vmatpush1.msra.mxu0 0.0
    %330 = vmatprep.subr.mxu0 0.0
    %331 = vmatpush1.msra.mxu0 0.0
    %332 = vmatprep.subr.mxu0 0.0
    %333 = vmatpush1.msra.mxu0 0.0
    %334 = vmatprep.subr.mxu0 0.0
    %335 = vmatpush1.msra.mxu0 0.0
    %336 = vmatprep.subr.mxu0 0.0
    %337 = vmatpush1.msra.mxu0 0.0
    %338 = vmatprep.subr.mxu0 0.0
    %339 = vmatpush1.msra.mxu0 0.0
    %340 = vmatprep.subr.mxu0 0.0
    %341 = vmatpush1.msra.mxu0 0.0
    %342 = vmatprep.mubr.f32.mxu0 0.0
    %343 = vmatmul.mubr.f32.gmra.mrb[0].mxu0 %v255
    %v344 = vpop.f32.mrb[0].mxu0
    %v345 = vadd.f32 %v208, %v344
    %v346 = vpop.f32.mrb[0].mxu0
    %v347 = vadd.f32 %v210, %v346
    %348 = vmatprep.mubr.f32.mxu0 0.0
    %349 = vmatmul.mubr.f32.gmra.mrb[0].mxu0 %v258
    %v350 = vpop.f32.mrb[0].mxu0
    %v351 = vadd.f32 %v214, %v350
    %v352 = vpop.f32.mrb[0].mxu0
    %v353 = vadd.f32 %v216, %v352
    %354 = vmatprep.mubr.f32.mxu0 0.0
    %355 = vmatmul.mubr.f32.gmra.mrb[0].mxu0 %v261
    %v356 = vpop.f32.mrb[0].mxu0
    %v357 = vadd.f32 %v220, %v356
    %v358 = vpop.f32.mrb[0].mxu0
    %v359 = vadd.f32 %v222, %v358
    %360 = vmatprep.mubr.f32.mxu0 0.0
    %361 = vmatmul.mubr.f32.gmra.mrb[0].mxu0 %v264
    %v362 = vpop.f32.mrb[0].mxu0
    %v363 = vadd.f32 %v226, %v362
    %v364 = vpop.f32.mrb[0].mxu0
    %v365 = vadd.f32 %v228, %v364
    %366 = vmatprep.mubr.f32.mxu0 0.0
    %367 = vmatmul.mubr.f32.gmra.mrb[0].mxu0 %v267
    %v368 = vpop.f32.mrb[0].mxu0
    %v369 = vadd.f32 %v232, %v368
    %v370 = vpop.f32.mrb[0].mxu0
    %v371 = vadd.f32 %v234, %v370
    %372 = vmatprep.mubr.f32.mxu0 0.0
    %373 = vmatmul.mubr.f32.gmra.mrb[0].mxu0 %v270
    %v374 = vpop.f32.mrb[0].mxu0
    %v375 = vadd.f32 %v238, %v374
    %v376 = vpop.f32.mrb[0].mxu0
    %v377 = vadd.f32 %v240, %v376
    %378 = vmatprep.mubr.f32.mxu0 0.0
    %379 = vmatmul.mubr.f32.gmra.mrb[0].mxu0 %v273
    %v380 = vpop.f32.mrb[0].mxu0
    %v381 = vadd.f32 %v244, %v380
    %v382 = vpop.f32.mrb[0].mxu0
    %v383 = vadd.f32 %v246, %v382
    %384 = vmatprep.mubr.f32.mxu0 0.0
    %385 = vmatmul.mubr.f32.gmra.mrb[0].mxu0 %v276
    %v386 = vpop.f32.mrb[0].mxu0
    %v387 = vadd.f32 %v250, %v386
    %v388 = vpop.f32.mrb[0].mxu0
    %v389 = vadd.f32 %v252, %v388
    %390 = vdwg.mxu0
    %v391 = vld [vmem:[%s0 + $0x2] sm:$0xff]
    %v392 = vld [vmem:[%s0 + $0xa] sm:$0xff]
    %v393 = vld [vmem:[%s0 + $0x12] sm:$0xff]
    %v394 = vld [vmem:[%s0 + $0x1a] sm:$0xff]
    %v395 = vld [vmem:[%s0 + $0x22] sm:$0xff]
    %v396 = vld [vmem:[%s0 + $0x2a] sm:$0xff]
    %v397 = vld [vmem:[%s0 + $0x32] sm:$0xff]
    %v398 = vld [vmem:[%s0 + $0x3a] sm:$0xf]
    %s399 = scalar_lea.vmem %s1, 384
    %v400 = vld [vmem:[%s399] sm:$0xff]
    %v401 = vld [vmem:[%s399 + $0x8] sm:$0xff]
    %v402 = vld [vmem:[%s399 + $0x10] sm:$0xff]
    %v403 = vld [vmem:[%s399 + $0x18] sm:$0xff]
    %v404 = vld [vmem:[%s399 + $0x20] sm:$0xff]
    %v405 = vld [vmem:[%s399 + $0x28] sm:$0xff]
    %v406 = vld [vmem:[%s399 + $0x30] sm:$0xff]
    %v407 = vld [vmem:[%s399 + $0x38] sm:$0xff]
    %v408 = vld [vmem:[%s399 + $0x40] sm:$0xff]
    %v409 = vld [vmem:[%s399 + $0x48] sm:$0xff]
    %v410 = vld [vmem:[%s399 + $0x50] sm:$0xff]
    %v411 = vld [vmem:[%s399 + $0x58] sm:$0xff]
    %v412 = vld [vmem:[%s399 + $0x60] sm:$0xff]
    %v413 = vld [vmem:[%s399 + $0x68] sm:$0xff]
    %v414 = vld [vmem:[%s399 + $0x70] sm:$0xff]
    %v415 = vld [vmem:[%s399 + $0x78] sm:$0xff]
    %v416 = vld [vmem:[%s399 + $0x80] sm:$0xff]
    %v417 = vld [vmem:[%s399 + $0x88] sm:$0xff]
    %v418 = vld [vmem:[%s399 + $0x90] sm:$0xff]
    %v419 = vld [vmem:[%s399 + $0x98] sm:$0xff]
    %v420 = vld [vmem:[%s399 + $0xa0] sm:$0xff]
    %v421 = vld [vmem:[%s399 + $0xa8] sm:$0xff]
    %v422 = vld [vmem:[%s399 + $0xb0] sm:$0xff]
    %v423 = vld [vmem:[%s399 + $0xb8] sm:$0xff]
    %v425 = vsel %vm116, %v391, 0
    %v428 = vsel %vm116, %v392, 0
    %v431 = vsel %vm116, %v393, 0
    %v434 = vsel %vm116, %v394, 0
    %v437 = vsel %vm116, %v395, 0
    %v440 = vsel %vm116, %v396, 0
    %v443 = vsel %vm116, %v397, 0
    %v446 = vsel %vm116, %v398, 0
    %448 = vmatprep.subr.mxu0 %v401
    %449 = vmatpush1.msra.mxu0 %v400
    %450 = vmatprep.subr.mxu0 %v403
    %451 = vmatpush1.msra.mxu0 %v402
    %452 = vmatprep.subr.mxu0 %v405
    %453 = vmatpush1.msra.mxu0 %v404
    %454 = vmatprep.subr.mxu0 %v407
    %455 = vmatpush1.msra.mxu0 %v406
    %456 = vmatprep.subr.mxu0 %v409
    %457 = vmatpush1.msra.mxu0 %v408
    %458 = vmatprep.subr.mxu0 %v411
    %459 = vmatpush1.msra.mxu0 %v410
    %460 = vmatprep.subr.mxu0 %v413
    %461 = vmatpush1.msra.mxu0 %v412
    %462 = vmatprep.subr.mxu0 %v415
    %463 = vmatpush1.msra.mxu0 %v414
    %464 = vmatprep.subr.mxu0 %v417
    %465 = vmatpush1.msra.mxu0 %v416
    %466 = vmatprep.subr.mxu0 %v419
    %467 = vmatpush1.msra.mxu0 %v418
    %468 = vmatprep.subr.mxu0 %v421
    %469 = vmatpush1.msra.mxu0 %v420
    %470 = vmatprep.subr.mxu0 %v423
    %471 = vmatpush1.msra.mxu0 %v422
    %472 = vmatprep.subr.mxu0 0.0
    %473 = vmatpush1.msra.mxu0 0.0
    %474 = vmatprep.subr.mxu0 0.0
    %475 = vmatpush1.msra.mxu0 0.0
    %476 = vmatprep.subr.mxu0 0.0
    %477 = vmatpush1.msra.mxu0 0.0
    %478 = vmatprep.subr.mxu0 0.0
    %479 = vmatpush1.msra.mxu0 0.0
    %480 = vmatprep.subr.mxu0 0.0
    %481 = vmatpush1.msra.mxu0 0.0
    %482 = vmatprep.subr.mxu0 0.0
    %483 = vmatpush1.msra.mxu0 0.0
    %484 = vmatprep.subr.mxu0 0.0
    %485 = vmatpush1.msra.mxu0 0.0
    %486 = vmatprep.subr.mxu0 0.0
    %487 = vmatpush1.msra.mxu0 0.0
    %488 = vmatprep.subr.mxu0 0.0
    %489 = vmatpush1.msra.mxu0 0.0
    %490 = vmatprep.subr.mxu0 0.0
    %491 = vmatpush1.msra.mxu0 0.0
    %492 = vmatprep.subr.mxu0 0.0
    %493 = vmatpush1.msra.mxu0 0.0
    %494 = vmatprep.subr.mxu0 0.0
    %495 = vmatpush1.msra.mxu0 0.0
    %496 = vmatprep.subr.mxu0 0.0
    %497 = vmatpush1.msra.mxu0 0.0
    %498 = vmatprep.subr.mxu0 0.0
    %499 = vmatpush1.msra.mxu0 0.0
    %500 = vmatprep.subr.mxu0 0.0
    %501 = vmatpush1.msra.mxu0 0.0
    %502 = vmatprep.subr.mxu0 0.0
    %503 = vmatpush1.msra.mxu0 0.0
    %504 = vmatprep.subr.mxu0 0.0
    %505 = vmatpush1.msra.mxu0 0.0
    %506 = vmatprep.subr.mxu0 0.0
    %507 = vmatpush1.msra.mxu0 0.0
    %508 = vmatprep.subr.mxu0 0.0
    %509 = vmatpush1.msra.mxu0 0.0
    %510 = vmatprep.subr.mxu0 0.0
    %511 = vmatpush1.msra.mxu0 0.0
    %512 = vmatprep.mubr.f32.mxu0 0.0
    %513 = vmatmul.mubr.f32.gmra.mrb[0].mxu0 %v425
    %v514 = vpop.f32.mrb[0].mxu0
    %v515 = vadd.f32 0.0, %v514
    %v516 = vpop.f32.mrb[0].mxu0
    %v517 = vadd.f32 0.0, %v516
    %518 = vmatprep.mubr.f32.mxu0 0.0
    %519 = vmatmul.mubr.f32.gmra.mrb[0].mxu0 %v428
    %v520 = vpop.f32.mrb[0].mxu0
    %v521 = vadd.f32 0.0, %v520
    %v522 = vpop.f32.mrb[0].mxu0
    %v523 = vadd.f32 0.0, %v522
    %524 = vmatprep.mubr.f32.mxu0 0.0
    %525 = vmatmul.mubr.f32.gmra.mrb[0].mxu0 %v431
    %v526 = vpop.f32.mrb[0].mxu0
    %v527 = vadd.f32 0.0, %v526
    %v528 = vpop.f32.mrb[0].mxu0
    %v529 = vadd.f32 0.0, %v528
    %530 = vmatprep.mubr.f32.mxu0 0.0
    %531 = vmatmul.mubr.f32.gmra.mrb[0].mxu0 %v434
    %v532 = vpop.f32.mrb[0].mxu0
    %v533 = vadd.f32 0.0, %v532
    %v534 = vpop.f32.mrb[0].mxu0
    %v535 = vadd.f32 0.0, %v534
    %536 = vmatprep.mubr.f32.mxu0 0.0
    %537 = vmatmul.mubr.f32.gmra.mrb[0].mxu0 %v437
    %v538 = vpop.f32.mrb[0].mxu0
    %v539 = vadd.f32 0.0, %v538
    %v540 = vpop.f32.mrb[0].mxu0
    %v541 = vadd.f32 0.0, %v540
    %542 = vmatprep.mubr.f32.mxu0 0.0
    %543 = vmatmul.mubr.f32.gmra.mrb[0].mxu0 %v440
    %v544 = vpop.f32.mrb[0].mxu0
    %v545 = vadd.f32 0.0, %v544
    %v546 = vpop.f32.mrb[0].mxu0
    %v547 = vadd.f32 0.0, %v546
    %548 = vmatprep.mubr.f32.mxu0 0.0
    %549 = vmatmul.mubr.f32.gmra.mrb[0].mxu0 %v443
    %v550 = vpop.f32.mrb[0].mxu0
    %v551 = vadd.f32 0.0, %v550
    %v552 = vpop.f32.mrb[0].mxu0
    %v553 = vadd.f32 0.0, %v552
    %554 = vmatprep.mubr.f32.mxu0 0.0
    %555 = vmatmul.mubr.f32.gmra.mrb[0].mxu0 %v446
    %v556 = vpop.f32.mrb[0].mxu0
    %v557 = vadd.f32 0.0, %v556
    %v558 = vpop.f32.mrb[0].mxu0
    %v559 = vadd.f32 0.0, %v558
    %560 = vdwg.mxu0
    %v561 = vadd.f32 %v345, %v515
    %v562 = vadd.f32 %v347, %v517
    %v563 = vadd.f32 %v351, %v521
    %v564 = vadd.f32 %v353, %v523
    %v565 = vadd.f32 %v357, %v527
    %v566 = vadd.f32 %v359, %v529
    %v567 = vadd.f32 %v363, %v533
    %v568 = vadd.f32 %v365, %v535
    %v569 = vadd.f32 %v369, %v539
    %v570 = vadd.f32 %v371, %v541
    %v571 = vadd.f32 %v375, %v545
    %v572 = vadd.f32 %v377, %v547
    %v573 = vadd.f32 %v381, %v551
    %v574 = vadd.f32 %v383, %v553
    %v575 = vadd.f32 %v387, %v557
    %v576 = vadd.f32 %v389, %v559
    %v577 = vld [vmem:[%s0 + $0x3] sm:$0xff]
    %v578 = vld [vmem:[%s0 + $0xb] sm:$0xff]
    %v579 = vld [vmem:[%s0 + $0x13] sm:$0xff]
    %v580 = vld [vmem:[%s0 + $0x1b] sm:$0xff]
    %v581 = vld [vmem:[%s0 + $0x23] sm:$0xff]
    %v582 = vld [vmem:[%s0 + $0x2b] sm:$0xff]
    %v583 = vld [vmem:[%s0 + $0x33] sm:$0xff]
    %v584 = vld [vmem:[%s0 + $0x3b] sm:$0xf]
    %s585 = scalar_lea.vmem %s1, 576
    %v586 = vld [vmem:[%s585] sm:$0xff]
    %v587 = vld [vmem:[%s585 + $0x8] sm:$0xff]
    %v588 = vld [vmem:[%s585 + $0x10] sm:$0xff]
    %v589 = vld [vmem:[%s585 + $0x18] sm:$0xff]
    %v590 = vld [vmem:[%s585 + $0x20] sm:$0xff]
    %v591 = vld [vmem:[%s585 + $0x28] sm:$0xff]
    %v592 = vld [vmem:[%s585 + $0x30] sm:$0xff]
    %v593 = vld [vmem:[%s585 + $0x38] sm:$0xff]
    %v594 = vld [vmem:[%s585 + $0x40] sm:$0xff]
    %v595 = vld [vmem:[%s585 + $0x48] sm:$0xff]
    %v596 = vld [vmem:[%s585 + $0x50] sm:$0xff]
    %v597 = vld [vmem:[%s585 + $0x58] sm:$0xff]
    %v598 = vld [vmem:[%s585 + $0x60] sm:$0xff]
    %v599 = vld [vmem:[%s585 + $0x68] sm:$0xff]
    %v600 = vld [vmem:[%s585 + $0x70] sm:$0xff]
    %v601 = vld [vmem:[%s585 + $0x78] sm:$0xff]
    %v602 = vld [vmem:[%s585 + $0x80] sm:$0xff]
    %v603 = vld [vmem:[%s585 + $0x88] sm:$0xff]
    %v604 = vld [vmem:[%s585 + $0x90] sm:$0xff]
    %v605 = vld [vmem:[%s585 + $0x98] sm:$0xff]
    %v606 = vld [vmem:[%s585 + $0xa0] sm:$0xff]
    %v607 = vld [vmem:[%s585 + $0xa8] sm:$0xff]
    %v608 = vld [vmem:[%s585 + $0xb0] sm:$0xff]
    %v609 = vld [vmem:[%s585 + $0xb8] sm:$0xff]
    %v611 = vsel %vm116, %v577, 0
    %v614 = vsel %vm116, %v578, 0
    %v617 = vsel %vm116, %v579, 0
    %v620 = vsel %vm116, %v580, 0
    %v623 = vsel %vm116, %v581, 0
    %v626 = vsel %vm116, %v582, 0
    %v629 = vsel %vm116, %v583, 0
    %v632 = vsel %vm116, %v584, 0
    %634 = vmatprep.subr.mxu0 %v587
    %635 = vmatpush1.msra.mxu0 %v586
    %636 = vmatprep.subr.mxu0 %v589
    %637 = vmatpush1.msra.mxu0 %v588
    %638 = vmatprep.subr.mxu0 %v591
    %639 = vmatpush1.msra.mxu0 %v590
    %640 = vmatprep.subr.mxu0 %v593
    %641 = vmatpush1.msra.mxu0 %v592
    %642 = vmatprep.subr.mxu0 %v595
    %643 = vmatpush1.msra.mxu0 %v594
    %644 = vmatprep.subr.mxu0 %v597
    %645 = vmatpush1.msra.mxu0 %v596
    %646 = vmatprep.subr.mxu0 %v599
    %647 = vmatpush1.msra.mxu0 %v598
    %648 = vmatprep.subr.mxu0 %v601
    %649 = vmatpush1.msra.mxu0 %v600
    %650 = vmatprep.subr.mxu0 %v603
    %651 = vmatpush1.msra.mxu0 %v602
    %652 = vmatprep.subr.mxu0 %v605
    %653 = vmatpush1.msra.mxu0 %v604
    %654 = vmatprep.subr.mxu0 %v607
    %655 = vmatpush1.msra.mxu0 %v606
    %656 = vmatprep.subr.mxu0 %v609
    %657 = vmatpush1.msra.mxu0 %v608
    %658 = vmatprep.subr.mxu0 0.0
    %659 = vmatpush1.msra.mxu0 0.0
    %660 = vmatprep.subr.mxu0 0.0
    %661 = vmatpush1.msra.mxu0 0.0
    %662 = vmatprep.subr.mxu0 0.0
    %663 = vmatpush1.msra.mxu0 0.0
    %664 = vmatprep.subr.mxu0 0.0
    %665 = vmatpush1.msra.mxu0 0.0
    %666 = vmatprep.subr.mxu0 0.0
    %667 = vmatpush1.msra.mxu0 0.0
    %668 = vmatprep.subr.mxu0 0.0
    %669 = vmatpush1.msra.mxu0 0.0
    %670 = vmatprep.subr.mxu0 0.0
    %671 = vmatpush1.msra.mxu0 0.0
    %672 = vmatprep.subr.mxu0 0.0
    %673 = vmatpush1.msra.mxu0 0.0
    %674 = vmatprep.subr.mxu0 0.0
    %675 = vmatpush1.msra.mxu0 0.0
    %676 = vmatprep.subr.mxu0 0.0
    %677 = vmatpush1.msra.mxu0 0.0
    %678 = vmatprep.subr.mxu0 0.0
    %679 = vmatpush1.msra.mxu0 0.0
    %680 = vmatprep.subr.mxu0 0.0
    %681 = vmatpush1.msra.mxu0 0.0
    %682 = vmatprep.subr.mxu0 0.0
    %683 = vmatpush1.msra.mxu0 0.0
    %684 = vmatprep.subr.mxu0 0.0
    %685 = vmatpush1.msra.mxu0 0.0
    %686 = vmatprep.subr.mxu0 0.0
    %687 = vmatpush1.msra.mxu0 0.0
    %688 = vmatprep.subr.mxu0 0.0
    %689 = vmatpush1.msra.mxu0 0.0
    %690 = vmatprep.subr.mxu0 0.0
    %691 = vmatpush1.msra.mxu0 0.0
    %692 = vmatprep.subr.mxu0 0.0
    %693 = vmatpush1.msra.mxu0 0.0
    %694 = vmatprep.subr.mxu0 0.0
    %695 = vmatpush1.msra.mxu0 0.0
    %696 = vmatprep.subr.mxu0 0.0
    %697 = vmatpush1.msra.mxu0 0.0
    %698 = vmatprep.mubr.f32.mxu0 0.0
    %699 = vmatmul.mubr.f32.gmra.mrb[0].mxu0 %v611
    %v700 = vpop.f32.mrb[0].mxu0
    %v701 = vadd.f32 0.0, %v700
    %v702 = vpop.f32.mrb[0].mxu0
    %v703 = vadd.f32 0.0, %v702
    %704 = vmatprep.mubr.f32.mxu0 0.0
    %705 = vmatmul.mubr.f32.gmra.mrb[0].mxu0 %v614
    %v706 = vpop.f32.mrb[0].mxu0
    %v707 = vadd.f32 0.0, %v706
    %v708 = vpop.f32.mrb[0].mxu0
    %v709 = vadd.f32 0.0, %v708
    %710 = vmatprep.mubr.f32.mxu0 0.0
    %711 = vmatmul.mubr.f32.gmra.mrb[0].mxu0 %v617
    %v712 = vpop.f32.mrb[0].mxu0
    %v713 = vadd.f32 0.0, %v712
    %v714 = vpop.f32.mrb[0].mxu0
    %v715 = vadd.f32 0.0, %v714
    %716 = vmatprep.mubr.f32.mxu0 0.0
    %717 = vmatmul.mubr.f32.gmra.mrb[0].mxu0 %v620
    %v718 = vpop.f32.mrb[0].mxu0
    %v719 = vadd.f32 0.0, %v718
    %v720 = vpop.f32.mrb[0].mxu0
    %v721 = vadd.f32 0.0, %v720
    %722 = vmatprep.mubr.f32.mxu0 0.0
    %723 = vmatmul.mubr.f32.gmra.mrb[0].mxu0 %v623
    %v724 = vpop.f32.mrb[0].mxu0
    %v725 = vadd.f32 0.0, %v724
    %v726 = vpop.f32.mrb[0].mxu0
    %v727 = vadd.f32 0.0, %v726
    %728 = vmatprep.mubr.f32.mxu0 0.0
    %729 = vmatmul.mubr.f32.gmra.mrb[0].mxu0 %v626
    %v730 = vpop.f32.mrb[0].mxu0
    %v731 = vadd.f32 0.0, %v730
    %v732 = vpop.f32.mrb[0].mxu0
    %v733 = vadd.f32 0.0, %v732
    %734 = vmatprep.mubr.f32.mxu0 0.0
    %735 = vmatmul.mubr.f32.gmra.mrb[0].mxu0 %v629
    %v736 = vpop.f32.mrb[0].mxu0
    %v737 = vadd.f32 0.0, %v736
    %v738 = vpop.f32.mrb[0].mxu0
    %v739 = vadd.f32 0.0, %v738
    %740 = vmatprep.mubr.f32.mxu0 0.0
    %741 = vmatmul.mubr.f32.gmra.mrb[0].mxu0 %v632
    %v742 = vpop.f32.mrb[0].mxu0
    %v743 = vadd.f32 0.0, %v742
    %v744 = vpop.f32.mrb[0].mxu0
    %v745 = vadd.f32 0.0, %v744
    %746 = vdwg.mxu0
    %v747 = vadd.f32 %v561, %v701
    %v748 = vadd.f32 %v562, %v703
    %v749 = vadd.f32 %v563, %v707
    %v750 = vadd.f32 %v564, %v709
    %v751 = vadd.f32 %v565, %v713
    %v752 = vadd.f32 %v566, %v715
    %v753 = vadd.f32 %v567, %v719
    %v754 = vadd.f32 %v568, %v721
    %v755 = vadd.f32 %v569, %v725
    %v756 = vadd.f32 %v570, %v727
    %v757 = vadd.f32 %v571, %v731
    %v758 = vadd.f32 %v572, %v733
    %v759 = vadd.f32 %v573, %v737
    %v760 = vadd.f32 %v574, %v739
    %v761 = vadd.f32 %v575, %v743
    %v762 = vadd.f32 %v576, %v745
    %v763 = vld [vmem:[%s0 + $0x4] sm:$0xff]
    %v764 = vld [vmem:[%s0 + $0xc] sm:$0xff]
    %v765 = vld [vmem:[%s0 + $0x14] sm:$0xff]
    %v766 = vld [vmem:[%s0 + $0x1c] sm:$0xff]
    %v767 = vld [vmem:[%s0 + $0x24] sm:$0xff]
    %v768 = vld [vmem:[%s0 + $0x2c] sm:$0xff]
    %v769 = vld [vmem:[%s0 + $0x34] sm:$0xff]
    %v770 = vld [vmem:[%s0 + $0x3c] sm:$0xf]
    %s771 = scalar_lea.vmem %s1, 768
    %v772 = vld [vmem:[%s771] sm:$0xff]
    %v773 = vld [vmem:[%s771 + $0x8] sm:$0xff]
    %v774 = vld [vmem:[%s771 + $0x10] sm:$0xff]
    %v775 = vld [vmem:[%s771 + $0x18] sm:$0xff]
    %v776 = vld [vmem:[%s771 + $0x20] sm:$0xff]
    %v777 = vld [vmem:[%s771 + $0x28] sm:$0xff]
    %v778 = vld [vmem:[%s771 + $0x30] sm:$0xff]
    %v779 = vld [vmem:[%s771 + $0x38] sm:$0xff]
    %v780 = vld [vmem:[%s771 + $0x40] sm:$0xff]
    %v781 = vld [vmem:[%s771 + $0x48] sm:$0xff]
    %v782 = vld [vmem:[%s771 + $0x50] sm:$0xff]
    %v783 = vld [vmem:[%s771 + $0x58] sm:$0xff]
    %v784 = vld [vmem:[%s771 + $0x60] sm:$0xff]
    %v785 = vld [vmem:[%s771 + $0x68] sm:$0xff]
    %v786 = vld [vmem:[%s771 + $0x70] sm:$0xff]
    %v787 = vld [vmem:[%s771 + $0x78] sm:$0xff]
    %v788 = vld [vmem:[%s771 + $0x80] sm:$0xff]
    %v789 = vld [vmem:[%s771 + $0x88] sm:$0xff]
    %v790 = vld [vmem:[%s771 + $0x90] sm:$0xff]
    %v791 = vld [vmem:[%s771 + $0x98] sm:$0xff]
    %v792 = vld [vmem:[%s771 + $0xa0] sm:$0xff]
    %v793 = vld [vmem:[%s771 + $0xa8] sm:$0xff]
    %v794 = vld [vmem:[%s771 + $0xb0] sm:$0xff]
    %v795 = vld [vmem:[%s771 + $0xb8] sm:$0xff]
    %v797 = vsel %vm116, %v763, 0
    %v800 = vsel %vm116, %v764, 0
    %v803 = vsel %vm116, %v765, 0
    %v806 = vsel %vm116, %v766, 0
    %v809 = vsel %vm116, %v767, 0
    %v812 = vsel %vm116, %v768, 0
    %v815 = vsel %vm116, %v769, 0
    %v818 = vsel %vm116, %v770, 0
    %820 = vmatprep.subr.mxu0 %v773
    %821 = vmatpush1.msra.mxu0 %v772
    %822 = vmatprep.subr.mxu0 %v775
    %823 = vmatpush1.msra.mxu0 %v774
    %824 = vmatprep.subr.mxu0 %v777
    %825 = vmatpush1.msra.mxu0 %v776
    %826 = vmatprep.subr.mxu0 %v779
    %827 = vmatpush1.msra.mxu0 %v778
    %828 = vmatprep.subr.mxu0 %v781
    %829 = vmatpush1.msra.mxu0 %v780
    %830 = vmatprep.subr.mxu0 %v783
    %831 = vmatpush1.msra.mxu0 %v782
    %832 = vmatprep.subr.mxu0 %v785
    %833 = vmatpush1.msra.mxu0 %v784
    %834 = vmatprep.subr.mxu0 %v787
    %835 = vmatpush1.msra.mxu0 %v786
    %836 = vmatprep.subr.mxu0 %v789
    %837 = vmatpush1.msra.mxu0 %v788
    %838 = vmatprep.subr.mxu0 %v791
    %839 = vmatpush1.msra.mxu0 %v790
    %840 = vmatprep.subr.mxu0 %v793
    %841 = vmatpush1.msra.mxu0 %v792
    %842 = vmatprep.subr.mxu0 %v795
    %843 = vmatpush1.msra.mxu0 %v794
    %844 = vmatprep.subr.mxu0 0.0
    %845 = vmatpush1.msra.mxu0 0.0
    %846 = vmatprep.subr.mxu0 0.0
    %847 = vmatpush1.msra.mxu0 0.0
    %848 = vmatprep.subr.mxu0 0.0
    %849 = vmatpush1.msra.mxu0 0.0
    %850 = vmatprep.subr.mxu0 0.0
    %851 = vmatpush1.msra.mxu0 0.0
    %852 = vmatprep.subr.mxu0 0.0
    %853 = vmatpush1.msra.mxu0 0.0
    %854 = vmatprep.subr.mxu0 0.0
    %855 = vmatpush1.msra.mxu0 0.0
    %856 = vmatprep.subr.mxu0 0.0
    %857 = vmatpush1.msra.mxu0 0.0
    %858 = vmatprep.subr.mxu0 0.0
    %859 = vmatpush1.msra.mxu0 0.0
    %860 = vmatprep.subr.mxu0 0.0
    %861 = vmatpush1.msra.mxu0 0.0
    %862 = vmatprep.subr.mxu0 0.0
    %863 = vmatpush1.msra.mxu0 0.0
    %864 = vmatprep.subr.mxu0 0.0
    %865 = vmatpush1.msra.mxu0 0.0
    %866 = vmatprep.subr.mxu0 0.0
    %867 = vmatpush1.msra.mxu0 0.0
    %868 = vmatprep.subr.mxu0 0.0
    %869 = vmatpush1.msra.mxu0 0.0
    %870 = vmatprep.subr.mxu0 0.0
    %871 = vmatpush1.msra.mxu0 0.0
    %872 = vmatprep.subr.mxu0 0.0
    %873 = vmatpush1.msra.mxu0 0.0
    %874 = vmatprep.subr.mxu0 0.0
    %875 = vmatpush1.msra.mxu0 0.0
    %876 = vmatprep.subr.mxu0 0.0
    %877 = vmatpush1.msra.mxu0 0.0
    %878 = vmatprep.subr.mxu0 0.0
    %879 = vmatpush1.msra.mxu0 0.0
    %880 = vmatprep.subr.mxu0 0.0
    %881 = vmatpush1.msra.mxu0 0.0
    %882 = vmatprep.subr.mxu0 0.0
    %883 = vmatpush1.msra.mxu0 0.0
    %884 = vmatprep.mubr.f32.mxu0 0.0
    %885 = vmatmul.mubr.f32.gmra.mrb[0].mxu0 %v797
    %v886 = vpop.f32.mrb[0].mxu0
    %v887 = vadd.f32 0.0, %v886
    %v888 = vpop.f32.mrb[0].mxu0
    %v889 = vadd.f32 0.0, %v888
    %890 = vmatprep.mubr.f32.mxu0 0.0
    %891 = vmatmul.mubr.f32.gmra.mrb[0].mxu0 %v800
    %v892 = vpop.f32.mrb[0].mxu0
    %v893 = vadd.f32 0.0, %v892
    %v894 = vpop.f32.mrb[0].mxu0
    %v895 = vadd.f32 0.0, %v894
    %896 = vmatprep.mubr.f32.mxu0 0.0
    %897 = vmatmul.mubr.f32.gmra.mrb[0].mxu0 %v803
    %v898 = vpop.f32.mrb[0].mxu0
    %v899 = vadd.f32 0.0, %v898
    %v900 = vpop.f32.mrb[0].mxu0
    %v901 = vadd.f32 0.0, %v900
    %902 = vmatprep.mubr.f32.mxu0 0.0
    %903 = vmatmul.mubr.f32.gmra.mrb[0].mxu0 %v806
    %v904 = vpop.f32.mrb[0].mxu0
    %v905 = vadd.f32 0.0, %v904
    %v906 = vpop.f32.mrb[0].mxu0
    %v907 = vadd.f32 0.0, %v906
    %908 = vmatprep.mubr.f32.mxu0 0.0
    %909 = vmatmul.mubr.f32.gmra.mrb[0].mxu0 %v809
    %v910 = vpop.f32.mrb[0].mxu0
    %v911 = vadd.f32 0.0, %v910
    %v912 = vpop.f32.mrb[0].mxu0
    %v913 = vadd.f32 0.0, %v912
    %914 = vmatprep.mubr.f32.mxu0 0.0
    %915 = vmatmul.mubr.f32.gmra.mrb[0].mxu0 %v812
    %v916 = vpop.f32.mrb[0].mxu0
    %v917 = vadd.f32 0.0, %v916
    %v918 = vpop.f32.mrb[0].mxu0
    %v919 = vadd.f32 0.0, %v918
    %920 = vmatprep.mubr.f32.mxu0 0.0
    %921 = vmatmul.mubr.f32.gmra.mrb[0].mxu0 %v815
    %v922 = vpop.f32.mrb[0].mxu0
    %v923 = vadd.f32 0.0, %v922
    %v924 = vpop.f32.mrb[0].mxu0
    %v925 = vadd.f32 0.0, %v924
    %926 = vmatprep.mubr.f32.mxu0 0.0
    %927 = vmatmul.mubr.f32.gmra.mrb[0].mxu0 %v818
    %v928 = vpop.f32.mrb[0].mxu0
    %v929 = vadd.f32 0.0, %v928
    %v930 = vpop.f32.mrb[0].mxu0
    %v931 = vadd.f32 0.0, %v930
    %932 = vdwg.mxu0
    %v933 = vadd.f32 %v747, %v887
    %v934 = vadd.f32 %v748, %v889
    %v935 = vadd.f32 %v749, %v893
    %v936 = vadd.f32 %v750, %v895
    %v937 = vadd.f32 %v751, %v899
    %v938 = vadd.f32 %v752, %v901
    %v939 = vadd.f32 %v753, %v905
    %v940 = vadd.f32 %v754, %v907
    %v941 = vadd.f32 %v755, %v911
    %v942 = vadd.f32 %v756, %v913
    %v943 = vadd.f32 %v757, %v917
    %v944 = vadd.f32 %v758, %v919
    %v945 = vadd.f32 %v759, %v923
    %v946 = vadd.f32 %v760, %v925
    %v947 = vadd.f32 %v761, %v929
    %v948 = vadd.f32 %v762, %v931
    %v949 = vld [vmem:[%s2] sm:$0x3]
    %v951 = vlaneseq
    %v952 = vshrl.u32 %v951, 7
    %v953 = vsub.s32 0, %v952
    %v954 = vrot.slane %v949, %v953
    %v955 = vlaneseq
    %v956 = vshrl.u32 %v955, 7
    %v957 = vsub.s32 1, %v956
    %v958 = vrot.slane %v949, %v957
    %v961 = vadd.f32 %v933, %v954
    %v962 = vadd.f32 %v934, %v958
    %v963 = vadd.f32 %v935, %v954
    %v964 = vadd.f32 %v936, %v958
    %v965 = vadd.f32 %v937, %v954
    %v966 = vadd.f32 %v938, %v958
    %v967 = vadd.f32 %v939, %v954
    %v968 = vadd.f32 %v940, %v958
    %v969 = vadd.f32 %v941, %v954
    %v970 = vadd.f32 %v942, %v958
    %v971 = vadd.f32 %v943, %v954
    %v972 = vadd.f32 %v944, %v958
    %v973 = vadd.f32 %v945, %v954
    %v974 = vadd.f32 %v946, %v958
    %v975 = vadd.f32 %v947, %v954
    %v976 = vadd.f32 %v948, %v958
    %v977 = vmax.f32 %v961, 0.0
    %v978 = vmax.f32 %v962, 0.0
    %v979 = vmax.f32 %v963, 0.0
    %v980 = vmax.f32 %v964, 0.0
    %v981 = vmax.f32 %v965, 0.0
    %v982 = vmax.f32 %v966, 0.0
    %v983 = vmax.f32 %v967, 0.0
    %v984 = vmax.f32 %v968, 0.0
    %v985 = vmax.f32 %v969, 0.0
    %v986 = vmax.f32 %v970, 0.0
    %v987 = vmax.f32 %v971, 0.0
    %v988 = vmax.f32 %v972, 0.0
    %v989 = vmax.f32 %v973, 0.0
    %v990 = vmax.f32 %v974, 0.0
    %v991 = vmax.f32 %v975, 0.0
    %v992 = vmax.f32 %v976, 0.0
    %1009 = vrot.lane.b32.xlu0 %v977, 127
    %v1010 = vpop.permute.xlu0 %1009
    %1011 = vrot.lane.b32.xlu0 %v978, 127
    %v1012 = vpop.permute.xlu0 %1011
    %1013 = vrot.lane.b32.xlu0 %v979, 127
    %v1014 = vpop.permute.xlu0 %1013
    %1015 = vrot.lane.b32.xlu0 %v980, 127
    %v1016 = vpop.permute.xlu0 %1015
    %1017 = vrot.lane.b32.xlu0 %v981, 127
    %v1018 = vpop.permute.xlu0 %1017
    %1019 = vrot.lane.b32.xlu0 %v982, 127
    %v1020 = vpop.permute.xlu0 %1019
    %1021 = vrot.lane.b32.xlu0 %v983, 127
    %v1022 = vpop.permute.xlu0 %1021
    %1023 = vrot.lane.b32.xlu0 %v984, 127
    %v1024 = vpop.permute.xlu0 %1023
    %1025 = vrot.lane.b32.xlu0 %v985, 127
    %v1026 = vpop.permute.xlu0 %1025
    %1027 = vrot.lane.b32.xlu0 %v986, 127
    %v1028 = vpop.permute.xlu0 %1027
    %1029 = vrot.lane.b32.xlu0 %v987, 127
    %v1030 = vpop.permute.xlu0 %1029
    %1031 = vrot.lane.b32.xlu0 %v988, 127
    %v1032 = vpop.permute.xlu0 %1031
    %1033 = vrot.lane.b32.xlu0 %v989, 127
    %v1034 = vpop.permute.xlu0 %1033
    %1035 = vrot.lane.b32.xlu0 %v990, 127
    %v1036 = vpop.permute.xlu0 %1035
    %1037 = vrot.lane.b32.xlu0 %v991, 127
    %v1038 = vpop.permute.xlu0 %1037
    %1039 = vrot.lane.b32.xlu0 %v992, 127
    %v1040 = vpop.permute.xlu0 %1039
    %vm1041 = vcmask 1039360
    %v1042 = vsel %vm1041, %v1010, %v1012
    %v1043 = vsel %vm1041, %v1014, %v1016
    %v1044 = vsel %vm1041, %v1018, %v1020
    %v1045 = vsel %vm1041, %v1022, %v1024
    %v1046 = vsel %vm1041, %v1026, %v1028
    %v1047 = vsel %vm1041, %v1030, %v1032
    %v1048 = vsel %vm1041, %v1034, %v1036
    %v1049 = vsel %vm1041, %v1038, %v1040
    %v1066 = vmax.f32 %v977, %v1042
    %v1067 = vmax.f32 %v978, %v1012
    %v1068 = vmax.f32 %v979, %v1043
    %v1069 = vmax.f32 %v980, %v1016
    %v1070 = vmax.f32 %v981, %v1044
    %v1071 = vmax.f32 %v982, %v1020
    %v1072 = vmax.f32 %v983, %v1045
    %v1073 = vmax.f32 %v984, %v1024
    %v1074 = vmax.f32 %v985, %v1046
    %v1075 = vmax.f32 %v986, %v1028
    %v1076 = vmax.f32 %v987, %v1047
    %v1077 = vmax.f32 %v988, %v1032
    %v1078 = vmax.f32 %v989, %v1048
    %v1079 = vmax.f32 %v990, %v1036
    %v1080 = vmax.f32 %v991, %v1049
    %v1081 = vmax.f32 %v992, %v1040
    %vm1098 = vcmask 1046528
    %v1099 = vrot.slane %v1066, 1
    %v1100 = vrot.slane %v1068, 1
    %v1101 = vsel %vm1098, %v1099, %v1100
    %v1102 = vrot.slane %v1067, 1
    %v1103 = vrot.slane %v1069, 1
    %v1104 = vsel %vm1098, %v1102, %v1103
    %v1105 = vrot.slane %v1070, 1
    %v1106 = vsel %vm1098, %v1100, %v1105
    %v1107 = vrot.slane %v1071, 1
    %v1108 = vsel %vm1098, %v1103, %v1107
    %v1109 = vrot.slane %v1072, 1
    %v1110 = vsel %vm1098, %v1105, %v1109
    %v1111 = vrot.slane %v1073, 1
    %v1112 = vsel %vm1098, %v1107, %v1111
    %v1113 = vrot.slane %v1074, 1
    %v1114 = vsel %vm1098, %v1109, %v1113
    %v1115 = vrot.slane %v1075, 1
    %v1116 = vsel %vm1098, %v1111, %v1115
    %v1117 = vrot.slane %v1076, 1
    %v1118 = vsel %vm1098, %v1113, %v1117
    %v1119 = vrot.slane %v1077, 1
    %v1120 = vsel %vm1098, %v1115, %v1119
    %v1121 = vrot.slane %v1078, 1
    %v1122 = vsel %vm1098, %v1117, %v1121
    %v1123 = vrot.slane %v1079, 1
    %v1124 = vsel %vm1098, %v1119, %v1123
    %v1125 = vrot.slane %v1080, 1
    %v1126 = vsel %vm1098, %v1121, %v1125
    %v1127 = vrot.slane %v1081, 1
    %v1128 = vsel %vm1098, %v1123, %v1127
    %v1145 = vmax.f32 %v1066, %v1101
    %v1146 = vmax.f32 %v1067, %v1104
    %v1147 = vmax.f32 %v1068, %v1106
    %v1148 = vmax.f32 %v1069, %v1108
    %v1149 = vmax.f32 %v1070, %v1110
    %v1150 = vmax.f32 %v1071, %v1112
    %v1151 = vmax.f32 %v1072, %v1114
    %v1152 = vmax.f32 %v1073, %v1116
    %v1153 = vmax.f32 %v1074, %v1118
    %v1154 = vmax.f32 %v1075, %v1120
    %v1155 = vmax.f32 %v1076, %v1122
    %v1156 = vmax.f32 %v1077, %v1124
    %v1157 = vmax.f32 %v1078, %v1126
    %v1158 = vmax.f32 %v1079, %v1128
    %v1159 = vmax.f32 %v1080, %v1125
    %v1160 = vmax.f32 %v1081, %v1127
    %v1161 = vld [vmem:[%s3] sm:$0xff]
    %v1162 = vld [vmem:[%s3 + $0x8] sm:$0xff]
    %v1163 = vld [vmem:[%s3 + $0x10] sm:$0xff]
    %v1164 = vld [vmem:[%s3 + $0x18] sm:$0xff]
    %v1165 = vld [vmem:[%s4] sm:$0xff]
    %v1166 = vld [vmem:[%s4 + $0x8] sm:$0xff]
    %v1167 = vld [vmem:[%s4 + $0x10] sm:$0xff]
    %v1168 = vld [vmem:[%s4 + $0x18] sm:$0xff]
    %v1169 = vld [vmem:[%s4 + $0x20] sm:$0xff]
    %v1170 = vld [vmem:[%s4 + $0x28] sm:$0xff]
    %v1171 = vld [vmem:[%s4 + $0x30] sm:$0xff]
    %v1172 = vld [vmem:[%s4 + $0x38] sm:$0xff]
    %v1173 = vld [vmem:[%s4 + $0x40] sm:$0xff]
    %v1174 = vld [vmem:[%s4 + $0x48] sm:$0xff]
    %v1175 = vld [vmem:[%s4 + $0x50] sm:$0xff]
    %v1176 = vld [vmem:[%s4 + $0x58] sm:$0xff]
    %v1177 = vld [vmem:[%s4 + $0x60] sm:$0xff]
    %v1178 = vld [vmem:[%s4 + $0x68] sm:$0xff]
    %v1179 = vld [vmem:[%s4 + $0x70] sm:$0xff]
    %v1180 = vld [vmem:[%s4 + $0x78] sm:$0xff]
    %v1181 = vld [vmem:[%s4 + $0x80] sm:$0xff]
    %v1182 = vld [vmem:[%s4 + $0x88] sm:$0xff]
    %v1183 = vld [vmem:[%s4 + $0x90] sm:$0xff]
    %v1184 = vld [vmem:[%s4 + $0x98] sm:$0xff]
    %v1185 = vld [vmem:[%s4 + $0xa0] sm:$0x7f]
    %vm1186 = vcmask 318464
    %v1188 = vsel %vm1186, %v1146, 0
    %v1191 = vsel %vm1186, %v1148, 0
    %v1194 = vsel %vm1186, %v1150, 0
    %v1197 = vsel %vm1186, %v1152, 0
    %v1200 = vsel %vm1186, %v1154, 0
    %v1203 = vsel %vm1186, %v1156, 0
    %v1206 = vsel %vm1186, %v1158, 0
    %v1209 = vsel %vm1186, %v1160, 0
    %v1212 = vsel %vm1098, %v1185, 0
    %1214 = vmatprep.subr.mxu0 0.0
    %1215 = vmatpush1.msra.mxu0 %v1165
    %1216 = vmatprep.subr.mxu0 0.0
    %1217 = vmatpush1.msra.mxu0 %v1166
    %1218 = vmatprep.subr.mxu0 0.0
    %1219 = vmatpush1.msra.mxu0 %v1167
    %1220 = vmatprep.subr.mxu0 0.0
    %1221 = vmatpush1.msra.mxu0 %v1168
    %1222 = vmatprep.subr.mxu0 0.0
    %1223 = vmatpush1.msra.mxu0 %v1169
    %1224 = vmatprep.subr.mxu0 0.0
    %1225 = vmatpush1.msra.mxu0 %v1170
    %1226 = vmatprep.subr.mxu0 0.0
    %1227 = vmatpush1.msra.mxu0 %v1171
    %1228 = vmatprep.subr.mxu0 0.0
    %1229 = vmatpush1.msra.mxu0 %v1172
    %1230 = vmatprep.subr.mxu0 0.0
    %1231 = vmatpush1.msra.mxu0 %v1173
    %1232 = vmatprep.subr.mxu0 0.0
    %1233 = vmatpush1.msra.mxu0 %v1174
    %1234 = vmatprep.subr.mxu0 0.0
    %1235 = vmatpush1.msra.mxu0 %v1175
    %1236 = vmatprep.subr.mxu0 0.0
    %1237 = vmatpush1.msra.mxu0 %v1176
    %1238 = vmatprep.subr.mxu0 0.0
    %1239 = vmatpush1.msra.mxu0 %v1177
    %1240 = vmatprep.subr.mxu0 0.0
    %1241 = vmatpush1.msra.mxu0 %v1178
    %1242 = vmatprep.subr.mxu0 0.0
    %1243 = vmatpush1.msra.mxu0 %v1179
    %1244 = vmatprep.subr.mxu0 0.0
    %1245 = vmatpush1.msra.mxu0 %v1180
    %1246 = vmatprep.subr.mxu0 0.0
    %1247 = vmatpush1.msra.mxu0 %v1181
    %1248 = vmatprep.subr.mxu0 0.0
    %1249 = vmatpush1.msra.mxu0 %v1182
    %1250 = vmatprep.subr.mxu0 0.0
    %1251 = vmatpush1.msra.mxu0 %v1183
    %1252 = vmatprep.subr.mxu0 0.0
    %1253 = vmatpush1.msra.mxu0 %v1184
    %1254 = vmatprep.subr.mxu0 0.0
    %1255 = vmatpush1.msra.mxu0 %v1212
    %1256 = vmatprep.subr.mxu0 0.0
    %1257 = vmatpush1.msra.mxu0 0.0
    %1258 = vmatprep.subr.mxu0 0.0
    %1259 = vmatpush1.msra.mxu0 0.0
    %1260 = vmatprep.subr.mxu0 0.0
    %1261 = vmatpush1.msra.mxu0 0.0
    %1262 = vmatprep.subr.mxu0 0.0
    %1263 = vmatpush1.msra.mxu0 0.0
    %1264 = vmatprep.subr.mxu0 0.0
    %1265 = vmatpush1.msra.mxu0 0.0
    %1266 = vmatprep.subr.mxu0 0.0
    %1267 = vmatpush1.msra.mxu0 0.0
    %1268 = vmatprep.subr.mxu0 0.0
    %1269 = vmatpush1.msra.mxu0 0.0
    %1270 = vmatprep.subr.mxu0 0.0
    %1271 = vmatpush1.msra.mxu0 0.0
    %1272 = vmatprep.subr.mxu0 0.0
    %1273 = vmatpush1.msra.mxu0 0.0
    %1274 = vmatprep.subr.mxu0 0.0
    %1275 = vmatpush1.msra.mxu0 0.0
    %1276 = vmatprep.subr.mxu0 0.0
    %1277 = vmatpush1.msra.mxu0 0.0
    %1278 = vmatprep.mubr.f32.mxu0 %v1188
    %1279 = vmatmul.mubr.f32.gmra.mrb[0].mxu0 %v1145
    %v1280 = vpop.f32.mrb[0].mxu0
    %v1281 = vadd.f32 0.0, %v1280
    %v1282 = vpop.f32.mrb[0].mxu0
    %1283 = vmatprep.mubr.f32.mxu0 %v1191
    %1284 = vmatmul.mubr.f32.gmra.mrb[0].mxu0 %v1147
    %v1285 = vpop.f32.mrb[0].mxu0
    %v1286 = vadd.f32 0.0, %v1285
    %v1287 = vpop.f32.mrb[0].mxu0
    %1288 = vmatprep.mubr.f32.mxu0 %v1194
    %1289 = vmatmul.mubr.f32.gmra.mrb[0].mxu0 %v1149
    %v1290 = vpop.f32.mrb[0].mxu0
    %v1291 = vadd.f32 0.0, %v1290
    %v1292 = vpop.f32.mrb[0].mxu0
    %1293 = vmatprep.mubr.f32.mxu0 %v1197
    %1294 = vmatmul.mubr.f32.gmra.mrb[0].mxu0 %v1151
    %v1295 = vpop.f32.mrb[0].mxu0
    %v1296 = vadd.f32 0.0, %v1295
    %v1297 = vpop.f32.mrb[0].mxu0
    %1298 = vmatprep.mubr.f32.mxu0 %v1200
    %1299 = vmatmul.mubr.f32.gmra.mrb[0].mxu0 %v1153
    %v1300 = vpop.f32.mrb[0].mxu0
    %v1301 = vadd.f32 0.0, %v1300
    %v1302 = vpop.f32.mrb[0].mxu0
    %1303 = vmatprep.mubr.f32.mxu0 %v1203
    %1304 = vmatmul.mubr.f32.gmra.mrb[0].mxu0 %v1155
    %v1305 = vpop.f32.mrb[0].mxu0
    %v1306 = vadd.f32 0.0, %v1305
    %v1307 = vpop.f32.mrb[0].mxu0
    %1308 = vmatprep.mubr.f32.mxu0 %v1206
    %1309 = vmatmul.mubr.f32.gmra.mrb[0].mxu0 %v1157
    %v1310 = vpop.f32.mrb[0].mxu0
    %v1311 = vadd.f32 0.0, %v1310
    %v1312 = vpop.f32.mrb[0].mxu0
    %1313 = vmatprep.mubr.f32.mxu0 %v1209
    %1314 = vmatmul.mubr.f32.gmra.mrb[0].mxu0 %v1159
    %v1315 = vpop.f32.mrb[0].mxu0
    %v1316 = vadd.f32 0.0, %v1315
    %v1317 = vpop.f32.mrb[0].mxu0
    %1318 = vdwg.mxu0
    %vm1319 = vcmask 482304
    %v1321 = vsel %vm1319, %v1161, 0
    %v1324 = vsel %vm1319, %v1162, 0
    %v1327 = vsel %vm1319, %v1163, 0
    %v1330 = vsel %vm1319, %v1164, 0
    %vm1332 = vcmask 1042432
    %v1334 = vsel %vm1332, %v1316, 0
    %1336 = vmatprep.subr.mxu0 0.0
    %1337 = vmatpush1.msra.mxu0 %v1281
    %1338 = vmatprep.subr.mxu0 0.0
    %1339 = vmatpush1.msra.mxu0 %v1286
    %1340 = vmatprep.subr.mxu0 0.0
    %1341 = vmatpush1.msra.mxu0 %v1291
    %1342 = vmatprep.subr.mxu0 0.0
    %1343 = vmatpush1.msra.mxu0 %v1296
    %1344 = vmatprep.subr.mxu0 0.0
    %1345 = vmatpush1.msra.mxu0 %v1301
    %1346 = vmatprep.subr.mxu0 0.0
    %1347 = vmatpush1.msra.mxu0 %v1306
    %1348 = vmatprep.subr.mxu0 0.0
    %1349 = vmatpush1.msra.mxu0 %v1311
    %1350 = vmatprep.subr.mxu0 0.0
    %1351 = vmatpush1.msra.mxu0 %v1334
    %1352 = vmatprep.subr.mxu0 0.0
    %1353 = vmatpush1.msra.mxu0 0.0
    %1354 = vmatprep.subr.mxu0 0.0
    %1355 = vmatpush1.msra.mxu0 0.0
    %1356 = vmatprep.subr.mxu0 0.0
    %1357 = vmatpush1.msra.mxu0 0.0
    %1358 = vmatprep.subr.mxu0 0.0
    %1359 = vmatpush1.msra.mxu0 0.0
    %1360 = vmatprep.subr.mxu0 0.0
    %1361 = vmatpush1.msra.mxu0 0.0
    %1362 = vmatprep.subr.mxu0 0.0
    %1363 = vmatpush1.msra.mxu0 0.0
    %1364 = vmatprep.subr.mxu0 0.0
    %1365 = vmatpush1.msra.mxu0 0.0
    %1366 = vmatprep.subr.mxu0 0.0
    %1367 = vmatpush1.msra.mxu0 0.0
    %1368 = vmatprep.subr.mxu0 0.0
    %1369 = vmatpush1.msra.mxu0 0.0
    %1370 = vmatprep.subr.mxu0 0.0
    %1371 = vmatpush1.msra.mxu0 0.0
    %1372 = vmatprep.subr.mxu0 0.0
    %1373 = vmatpush1.msra.mxu0 0.0
    %1374 = vmatprep.subr.mxu0 0.0
    %1375 = vmatpush1.msra.mxu0 0.0
    %1376 = vmatprep.subr.mxu0 0.0
    %1377 = vmatpush1.msra.mxu0 0.0
    %1378 = vmatprep.subr.mxu0 0.0
    %1379 = vmatpush1.msra.mxu0 0.0
    %1380 = vmatprep.subr.mxu0 0.0
    %1381 = vmatpush1.msra.mxu0 0.0
    %1382 = vmatprep.subr.mxu0 0.0
    %1383 = vmatpush1.msra.mxu0 0.0
    %1384 = vmatprep.subr.mxu0 0.0
    %1385 = vmatpush1.msra.mxu0 0.0
    %1386 = vmatprep.subr.mxu0 0.0
    %1387 = vmatpush1.msra.mxu0 0.0
    %1388 = vmatprep.subr.mxu0 0.0
    %1389 = vmatpush1.msra.mxu0 0.0
    %1390 = vmatprep.subr.mxu0 0.0
    %1391 = vmatpush1.msra.mxu0 0.0
    %1392 = vmatprep.subr.mxu0 0.0
    %1393 = vmatpush1.msra.mxu0 0.0
    %1394 = vmatprep.subr.mxu0 0.0
    %1395 = vmatpush1.msra.mxu0 0.0
    %1396 = vmatprep.subr.mxu0 0.0
    %1397 = vmatpush1.msra.mxu0 0.0
    %1398 = vmatprep.subr.mxu0 0.0
    %1399 = vmatpush1.msra.mxu0 0.0
    %1400 = vmatprep.mubr.f32.mxu0 0.0
    %1401 = vmatmul.mubr.f32.gmra.mrb[0].mxu0 %v1321
    %v1402 = vpop.f32.mrb[0].mxu0
    %v1403 = vadd.f32 0.0, %v1402
    %v1404 = vpop.f32.mrb[0].mxu0
    %1405 = vmatprep.mubr.f32.mxu0 0.0
    %1406 = vmatmul.mubr.f32.gmra.mrb[0].mxu0 %v1324
    %v1407 = vpop.f32.mrb[0].mxu0
    %v1408 = vadd.f32 0.0, %v1407
    %v1409 = vpop.f32.mrb[0].mxu0
    %1410 = vmatprep.mubr.f32.mxu0 0.0
    %1411 = vmatmul.mubr.f32.gmra.mrb[0].mxu0 %v1327
    %v1412 = vpop.f32.mrb[0].mxu0
    %v1413 = vadd.f32 0.0, %v1412
    %v1414 = vpop.f32.mrb[0].mxu0
    %1415 = vmatprep.mubr.f32.mxu0 0.0
    %1416 = vmatmul.mubr.f32.gmra.mrb[0].mxu0 %v1330
    %v1417 = vpop.f32.mrb[0].mxu0
    %v1418 = vadd.f32 0.0, %v1417
    %v1419 = vpop.f32.mrb[0].mxu0
    %1420 = vdwg.mxu0
    %v1421 = vld [vmem:[%s5] sm:$0xff]
    %v1422 = vld [vmem:[%s5 + $0x8] sm:$0xff]
    %v1423 = vld [vmem:[%s5 + $0x10] sm:$0xff]
    %v1424 = vld [vmem:[%s5 + $0x18] sm:$0xff]
    %v1425 = vld [vmem:[%s5 + $0x20] sm:$0xff]
    %v1426 = vld [vmem:[%s5 + $0x28] sm:$0xff]
    %v1427 = vld [vmem:[%s5 + $0x30] sm:$0xff]
    %v1428 = vld [vmem:[%s5 + $0x38] sm:$0xff]
    %v1429 = vld [vmem:[%s5 + $0x40] sm:$0xff]
    %v1430 = vld [vmem:[%s5 + $0x48] sm:$0xff]
    %v1431 = vld [vmem:[%s5 + $0x50] sm:$0xff]
    %v1432 = vld [vmem:[%s5 + $0x58] sm:$0xff]
    %v1433 = vld [vmem:[%s5 + $0x60] sm:$0xff]
    %v1434 = vld [vmem:[%s5 + $0x68] sm:$0xff]
    %v1435 = vld [vmem:[%s5 + $0x70] sm:$0xff]
    %v1436 = vld [vmem:[%s5 + $0x78] sm:$0xff]
    %v1437 = vld [vmem:[%s5 + $0x80] sm:$0xff]
    %v1438 = vld [vmem:[%s5 + $0x88] sm:$0xff]
    %v1439 = vld [vmem:[%s5 + $0x90] sm:$0xff]
    %v1440 = vld [vmem:[%s5 + $0x98] sm:$0xff]
    %v1441 = vld [vmem:[%s5 + $0xa0] sm:$0xf]
    %v1442 = vld [vmem:[%s5 + $0xa8] sm:$0xf]
    %s1443 = scalar_lea.vmem %s5, 176
    %v1444 = vld [vmem:[%s1443] sm:$0xff]
    %v1445 = vld [vmem:[%s1443 + $0x8] sm:$0xff]
    %v1446 = vld [vmem:[%s1443 + $0x10] sm:$0xff]
    %v1447 = vld [vmem:[%s1443 + $0x18] sm:$0xff]
    %v1448 = vld [vmem:[%s1443 + $0x20] sm:$0xff]
    %v1449 = vld [vmem:[%s1443 + $0x28] sm:$0xff]
    %v1450 = vld [vmem:[%s1443 + $0x30] sm:$0xff]
    %v1451 = vld [vmem:[%s1443 + $0x38] sm:$0xff]
    %v1452 = vld [vmem:[%s1443 + $0x40] sm:$0xff]
    %v1453 = vld [vmem:[%s1443 + $0x48] sm:$0xff]
    %v1454 = vld [vmem:[%s1443 + $0x50] sm:$0xff]
    %v1455 = vld [vmem:[%s1443 + $0x58] sm:$0xff]
    %v1456 = vld [vmem:[%s1443 + $0x60] sm:$0xff]
    %v1457 = vld [vmem:[%s1443 + $0x68] sm:$0xff]
    %v1458 = vld [vmem:[%s1443 + $0x70] sm:$0xff]
    %v1459 = vld [vmem:[%s1443 + $0x78] sm:$0xff]
    %v1460 = vld [vmem:[%s1443 + $0x80] sm:$0xff]
    %v1461 = vld [vmem:[%s1443 + $0x88] sm:$0xff]
    %v1462 = vld [vmem:[%s1443 + $0x90] sm:$0xff]
    %v1463 = vld [vmem:[%s1443 + $0x98] sm:$0xff]
    %v1464 = vld [vmem:[%s1443 + $0xa0] sm:$0xf]
    %v1465 = vld [vmem:[%s1443 + $0xa8] sm:$0xf]
    %v1470 = vrot.slane %v1403, 1
    %v1471 = vrot.slane %v1408, 1
    %v1472 = vsel %vm1098, %v1470, %v1471
    %v1473 = vrot.slane %v1413, 1
    %v1474 = vsel %vm1098, %v1471, %v1473
    %v1475 = vrot.slane %v1418, 1
    %v1476 = vsel %vm1098, %v1473, %v1475
    %vm1477 = vcmask 687104
    %v1478 = vsel %vm1477, %v1472, 0
    %v1480 = vsel %vm1477, %v1474, 0
    %v1482 = vsel %vm1477, %v1476, 0
    %v1484 = vsel %vm1477, %v1475, 0
    %vm1486 = vcmask 1043456
    %v1488 = vsel %vm1486, %v1464, 0
    %v1491 = vsel %vm1486, %v1465, 0
    %1493 = vmatprep.subr.mxu0 %v1445
    %1494 = vmatpush1.msra.mxu0 %v1444
    %1495 = vmatprep.subr.mxu0 %v1447
    %1496 = vmatpush1.msra.mxu0 %v1446
    %1497 = vmatprep.subr.mxu0 %v1449
    %1498 = vmatpush1.msra.mxu0 %v1448
    %1499 = vmatprep.subr.mxu0 %v1451
    %1500 = vmatpush1.msra.mxu0 %v1450
    %1501 = vmatprep.subr.mxu0 %v1453
    %1502 = vmatpush1.msra.mxu0 %v1452
    %1503 = vmatprep.subr.mxu0 %v1455
    %1504 = vmatpush1.msra.mxu0 %v1454
    %1505 = vmatprep.subr.mxu0 %v1457
    %1506 = vmatpush1.msra.mxu0 %v1456
    %1507 = vmatprep.subr.mxu0 %v1459
    %1508 = vmatpush1.msra.mxu0 %v1458
    %1509 = vmatprep.subr.mxu0 %v1461
    %1510 = vmatpush1.msra.mxu0 %v1460
    %1511 = vmatprep.subr.mxu0 %v1463
    %1512 = vmatpush1.msra.mxu0 %v1462
    %1513 = vmatprep.subr.mxu0 %v1491
    %1514 = vmatpush1.msra.mxu0 %v1488
    %1515 = vmatprep.subr.mxu0 0.0
    %1516 = vmatpush1.msra.mxu0 0.0
    %1517 = vmatprep.subr.mxu0 0.0
    %1518 = vmatpush1.msra.mxu0 0.0
    %1519 = vmatprep.subr.mxu0 0.0
    %1520 = vmatpush1.msra.mxu0 0.0
    %1521 = vmatprep.subr.mxu0 0.0
    %1522 = vmatpush1.msra.mxu0 0.0
    %1523 = vmatprep.subr.mxu0 0.0
    %1524 = vmatpush1.msra.mxu0 0.0
    %1525 = vmatprep.subr.mxu0 0.0
    %1526 = vmatpush1.msra.mxu0 0.0
    %1527 = vmatprep.subr.mxu0 0.0
    %1528 = vmatpush1.msra.mxu0 0.0
    %1529 = vmatprep.subr.mxu0 0.0
    %1530 = vmatpush1.msra.mxu0 0.0
    %1531 = vmatprep.subr.mxu0 0.0
    %1532 = vmatpush1.msra.mxu0 0.0
    %1533 = vmatprep.subr.mxu0 0.0
    %1534 = vmatpush1.msra.mxu0 0.0
    %1535 = vmatprep.subr.mxu0 0.0
    %1536 = vmatpush1.msra.mxu0 0.0
    %1537 = vmatprep.subr.mxu0 0.0
    %1538 = vmatpush1.msra.mxu0 0.0
    %1539 = vmatprep.subr.mxu0 0.0
    %1540 = vmatpush1.msra.mxu0 0.0
    %1541 = vmatprep.subr.mxu0 0.0
    %1542 = vmatpush1.msra.mxu0 0.0
    %1543 = vmatprep.subr.mxu0 0.0
    %1544 = vmatpush1.msra.mxu0 0.0
    %1545 = vmatprep.subr.mxu0 0.0
    %1546 = vmatpush1.msra.mxu0 0.0
    %1547 = vmatprep.subr.mxu0 0.0
    %1548 = vmatpush1.msra.mxu0 0.0
    %1549 = vmatprep.subr.mxu0 0.0
    %1550 = vmatpush1.msra.mxu0 0.0
    %1551 = vmatprep.subr.mxu0 0.0
    %1552 = vmatpush1.msra.mxu0 0.0
    %1553 = vmatprep.subr.mxu0 0.0
    %1554 = vmatpush1.msra.mxu0 0.0
    %1555 = vmatprep.subr.mxu0 0.0
    %1556 = vmatpush1.msra.mxu0 0.0
    %1557 = vmatprep.mubr.f32.mxu0 0.0
    %1558 = vmatmul.mubr.f32.gmra.mrb[0].mxu0 %v1478
    %v1559 = vpop.f32.mrb[0].mxu0
    %v1560 = vadd.f32 0.0, %v1559
    %v1561 = vpop.f32.mrb[0].mxu0
    %v1562 = vadd.f32 0.0, %v1561
    %1563 = vmatprep.mubr.f32.mxu0 0.0
    %1564 = vmatmul.mubr.f32.gmra.mrb[0].mxu0 %v1480
    %v1565 = vpop.f32.mrb[0].mxu0
    %v1566 = vadd.f32 0.0, %v1565
    %v1567 = vpop.f32.mrb[0].mxu0
    %v1568 = vadd.f32 0.0, %v1567
    %1569 = vmatprep.mubr.f32.mxu0 0.0
    %1570 = vmatmul.mubr.f32.gmra.mrb[0].mxu0 %v1482
    %v1571 = vpop.f32.mrb[0].mxu0
    %v1572 = vadd.f32 0.0, %v1571
    %v1573 = vpop.f32.mrb[0].mxu0
    %v1574 = vadd.f32 0.0, %v1573
    %1575 = vmatprep.mubr.f32.mxu0 0.0
    %1576 = vmatmul.mubr.f32.gmra.mrb[0].mxu0 %v1484
    %v1577 = vpop.f32.mrb[0].mxu0
    %v1578 = vadd.f32 0.0, %v1577
    %v1579 = vpop.f32.mrb[0].mxu0
    %v1580 = vadd.f32 0.0, %v1579
    %1581 = vdwg.mxu0
    %v1582 = vsel %vm1477, %v1403, 0
    %v1584 = vsel %vm1477, %v1408, 0
    %v1586 = vsel %vm1477, %v1413, 0
    %v1588 = vsel %vm1477, %v1418, 0
    %v1591 = vsel %vm1486, %v1441, 0
    %v1594 = vsel %vm1486, %v1442, 0
    %1596 = vmatprep.subr.mxu0 %v1422
    %1597 = vmatpush1.msra.mxu0 %v1421
    %1598 = vmatprep.subr.mxu0 %v1424
    %1599 = vmatpush1.msra.mxu0 %v1423
    %1600 = vmatprep.subr.mxu0 %v1426
    %1601 = vmatpush1.msra.mxu0 %v1425
    %1602 = vmatprep.subr.mxu0 %v1428
    %1603 = vmatpush1.msra.mxu0 %v1427
    %1604 = vmatprep.subr.mxu0 %v1430
    %1605 = vmatpush1.msra.mxu0 %v1429
    %1606 = vmatprep.subr.mxu0 %v1432
    %1607 = vmatpush1.msra.mxu0 %v1431
    %1608 = vmatprep.subr.mxu0 %v1434
    %1609 = vmatpush1.msra.mxu0 %v1433
    %1610 = vmatprep.subr.mxu0 %v1436
    %1611 = vmatpush1.msra.mxu0 %v1435
    %1612 = vmatprep.subr.mxu0 %v1438
    %1613 = vmatpush1.msra.mxu0 %v1437
    %1614 = vmatprep.subr.mxu0 %v1440
    %1615 = vmatpush1.msra.mxu0 %v1439
    %1616 = vmatprep.subr.mxu0 %v1594
    %1617 = vmatpush1.msra.mxu0 %v1591
    %1618 = vmatprep.subr.mxu0 0.0
    %1619 = vmatpush1.msra.mxu0 0.0
    %1620 = vmatprep.subr.mxu0 0.0
    %1621 = vmatpush1.msra.mxu0 0.0
    %1622 = vmatprep.subr.mxu0 0.0
    %1623 = vmatpush1.msra.mxu0 0.0
    %1624 = vmatprep.subr.mxu0 0.0
    %1625 = vmatpush1.msra.mxu0 0.0
    %1626 = vmatprep.subr.mxu0 0.0
    %1627 = vmatpush1.msra.mxu0 0.0
    %1628 = vmatprep.subr.mxu0 0.0
    %1629 = vmatpush1.msra.mxu0 0.0
    %1630 = vmatprep.subr.mxu0 0.0
    %1631 = vmatpush1.msra.mxu0 0.0
    %1632 = vmatprep.subr.mxu0 0.0
    %1633 = vmatpush1.msra.mxu0 0.0
    %1634 = vmatprep.subr.mxu0 0.0
    %1635 = vmatpush1.msra.mxu0 0.0
    %1636 = vmatprep.subr.mxu0 0.0
    %1637 = vmatpush1.msra.mxu0 0.0
    %1638 = vmatprep.subr.mxu0 0.0
    %1639 = vmatpush1.msra.mxu0 0.0
    %1640 = vmatprep.subr.mxu0 0.0
    %1641 = vmatpush1.msra.mxu0 0.0
    %1642 = vmatprep.subr.mxu0 0.0
    %1643 = vmatpush1.msra.mxu0 0.0
    %1644 = vmatprep.subr.mxu0 0.0
    %1645 = vmatpush1.msra.mxu0 0.0
    %1646 = vmatprep.subr.mxu0 0.0
    %1647 = vmatpush1.msra.mxu0 0.0
    %1648 = vmatprep.subr.mxu0 0.0
    %1649 = vmatpush1.msra.mxu0 0.0
    %1650 = vmatprep.subr.mxu0 0.0
    %1651 = vmatpush1.msra.mxu0 0.0
    %1652 = vmatprep.subr.mxu0 0.0
    %1653 = vmatpush1.msra.mxu0 0.0
    %1654 = vmatprep.subr.mxu0 0.0
    %1655 = vmatpush1.msra.mxu0 0.0
    %1656 = vmatprep.subr.mxu0 0.0
    %1657 = vmatpush1.msra.mxu0 0.0
    %1658 = vmatprep.subr.mxu0 0.0
    %1659 = vmatpush1.msra.mxu0 0.0
    %1660 = vmatprep.mubr.f32.mxu0 0.0
    %1661 = vmatmul.mubr.f32.gmra.mrb[0].mxu0 %v1582
    %v1662 = vpop.f32.mrb[0].mxu0
    %v1663 = vadd.f32 %v1560, %v1662
    %v1664 = vpop.f32.mrb[0].mxu0
    %v1665 = vadd.f32 %v1562, %v1664
    %1666 = vmatprep.mubr.f32.mxu0 0.0
    %1667 = vmatmul.mubr.f32.gmra.mrb[0].mxu0 %v1584
    %v1668 = vpop.f32.mrb[0].mxu0
    %v1669 = vadd.f32 %v1566, %v1668
    %v1670 = vpop.f32.mrb[0].mxu0
    %v1671 = vadd.f32 %v1568, %v1670
    %1672 = vmatprep.mubr.f32.mxu0 0.0
    %1673 = vmatmul.mubr.f32.gmra.mrb[0].mxu0 %v1586
    %v1674 = vpop.f32.mrb[0].mxu0
    %v1675 = vadd.f32 %v1572, %v1674
    %v1676 = vpop.f32.mrb[0].mxu0
    %v1677 = vadd.f32 %v1574, %v1676
    %1678 = vmatprep.mubr.f32.mxu0 0.0
    %1679 = vmatmul.mubr.f32.gmra.mrb[0].mxu0 %v1588
    %v1680 = vpop.f32.mrb[0].mxu0
    %v1681 = vadd.f32 %v1578, %v1680
    %v1682 = vpop.f32.mrb[0].mxu0
    %v1683 = vadd.f32 %v1580, %v1682
    %1684 = vdwg.mxu0
    %s1685 = scalar_lea.vmem %s5, 352
    %v1686 = vld [vmem:[%s1685] sm:$0xff]
    %v1687 = vld [vmem:[%s1685 + $0x8] sm:$0xff]
    %v1688 = vld [vmem:[%s1685 + $0x10] sm:$0xff]
    %v1689 = vld [vmem:[%s1685 + $0x18] sm:$0xff]
    %v1690 = vld [vmem:[%s1685 + $0x20] sm:$0xff]
    %v1691 = vld [vmem:[%s1685 + $0x28] sm:$0xff]
    %v1692 = vld [vmem:[%s1685 + $0x30] sm:$0xff]
    %v1693 = vld [vmem:[%s1685 + $0x38] sm:$0xff]
    %v1694 = vld [vmem:[%s1685 + $0x40] sm:$0xff]
    %v1695 = vld [vmem:[%s1685 + $0x48] sm:$0xff]
    %v1696 = vld [vmem:[%s1685 + $0x50] sm:$0xff]
    %v1697 = vld [vmem:[%s1685 + $0x58] sm:$0xff]
    %v1698 = vld [vmem:[%s1685 + $0x60] sm:$0xff]
    %v1699 = vld [vmem:[%s1685 + $0x68] sm:$0xff]
    %v1700 = vld [vmem:[%s1685 + $0x70] sm:$0xff]
    %v1701 = vld [vmem:[%s1685 + $0x78] sm:$0xff]
    %v1702 = vld [vmem:[%s1685 + $0x80] sm:$0xff]
    %v1703 = vld [vmem:[%s1685 + $0x88] sm:$0xff]
    %v1704 = vld [vmem:[%s1685 + $0x90] sm:$0xff]
    %v1705 = vld [vmem:[%s1685 + $0x98] sm:$0xff]
    %v1706 = vld [vmem:[%s1685 + $0xa0] sm:$0xf]
    %v1707 = vld [vmem:[%s1685 + $0xa8] sm:$0xf]
    %vm1708 = vcmask 1045504
    %v1709 = vrot.slane %v1403, 2
    %v1710 = vrot.slane %v1408, 2
    %v1711 = vsel %vm1708, %v1709, %v1710
    %v1712 = vrot.slane %v1413, 2
    %v1713 = vsel %vm1708, %v1710, %v1712
    %v1714 = vrot.slane %v1418, 2
    %v1715 = vsel %vm1708, %v1712, %v1714
    %v1716 = vsel %vm1477, %v1711, 0
    %v1718 = vsel %vm1477, %v1713, 0
    %v1720 = vsel %vm1477, %v1715, 0
    %v1722 = vsel %vm1477, %v1714, 0
    %v1725 = vsel %vm1486, %v1706, 0
    %v1728 = vsel %vm1486, %v1707, 0
    %1730 = vmatprep.subr.mxu0 %v1687
    %1731 = vmatpush1.msra.mxu0 %v1686
    %1732 = vmatprep.subr.mxu0 %v1689
    %1733 = vmatpush1.msra.mxu0 %v1688
    %1734 = vmatprep.subr.mxu0 %v1691
    %1735 = vmatpush1.msra.mxu0 %v1690
    %1736 = vmatprep.subr.mxu0 %v1693
    %1737 = vmatpush1.msra.mxu0 %v1692
    %1738 = vmatprep.subr.mxu0 %v1695
    %1739 = vmatpush1.msra.mxu0 %v1694
    %1740 = vmatprep.subr.mxu0 %v1697
    %1741 = vmatpush1.msra.mxu0 %v1696
    %1742 = vmatprep.subr.mxu0 %v1699
    %1743 = vmatpush1.msra.mxu0 %v1698
    %1744 = vmatprep.subr.mxu0 %v1701
    %1745 = vmatpush1.msra.mxu0 %v1700
    %1746 = vmatprep.subr.mxu0 %v1703
    %1747 = vmatpush1.msra.mxu0 %v1702
    %1748 = vmatprep.subr.mxu0 %v1705
    %1749 = vmatpush1.msra.mxu0 %v1704
    %1750 = vmatprep.subr.mxu0 %v1728
    %1751 = vmatpush1.msra.mxu0 %v1725
    %1752 = vmatprep.subr.mxu0 0.0
    %1753 = vmatpush1.msra.mxu0 0.0
    %1754 = vmatprep.subr.mxu0 0.0
    %1755 = vmatpush1.msra.mxu0 0.0
    %1756 = vmatprep.subr.mxu0 0.0
    %1757 = vmatpush1.msra.mxu0 0.0
    %1758 = vmatprep.subr.mxu0 0.0
    %1759 = vmatpush1.msra.mxu0 0.0
    %1760 = vmatprep.subr.mxu0 0.0
    %1761 = vmatpush1.msra.mxu0 0.0
    %1762 = vmatprep.subr.mxu0 0.0
    %1763 = vmatpush1.msra.mxu0 0.0
    %1764 = vmatprep.subr.mxu0 0.0
    %1765 = vmatpush1.msra.mxu0 0.0
    %1766 = vmatprep.subr.mxu0 0.0
    %1767 = vmatpush1.msra.mxu0 0.0
    %1768 = vmatprep.subr.mxu0 0.0
    %1769 = vmatpush1.msra.mxu0 0.0
    %1770 = vmatprep.subr.mxu0 0.0
    %1771 = vmatpush1.msra.mxu0 0.0
    %1772 = vmatprep.subr.mxu0 0.0
    %1773 = vmatpush1.msra.mxu0 0.0
    %1774 = vmatprep.subr.mxu0 0.0
    %1775 = vmatpush1.msra.mxu0 0.0
    %1776 = vmatprep.subr.mxu0 0.0
    %1777 = vmatpush1.msra.mxu0 0.0
    %1778 = vmatprep.subr.mxu0 0.0
    %1779 = vmatpush1.msra.mxu0 0.0
    %1780 = vmatprep.subr.mxu0 0.0
    %1781 = vmatpush1.msra.mxu0 0.0
    %1782 = vmatprep.subr.mxu0 0.0
    %1783 = vmatpush1.msra.mxu0 0.0
    %1784 = vmatprep.subr.mxu0 0.0
    %1785 = vmatpush1.msra.mxu0 0.0
    %1786 = vmatprep.subr.mxu0 0.0
    %1787 = vmatpush1.msra.mxu0 0.0
    %1788 = vmatprep.subr.mxu0 0.0
    %1789 = vmatpush1.msra.mxu0 0.0
    %1790 = vmatprep.subr.mxu0 0.0
    %1791 = vmatpush1.msra.mxu0 0.0
    %1792 = vmatprep.subr.mxu0 0.0
    %1793 = vmatpush1.msra.mxu0 0.0
    %1794 = vmatprep.mubr.f32.mxu0 0.0
    %1795 = vmatmul.mubr.f32.gmra.mrb[0].mxu0 %v1716
    %v1796 = vpop.f32.mrb[0].mxu0
    %v1797 = vadd.f32 0.0, %v1796
    %v1798 = vpop.f32.mrb[0].mxu0
    %v1799 = vadd.f32 0.0, %v1798
    %1800 = vmatprep.mubr.f32.mxu0 0.0
    %1801 = vmatmul.mubr.f32.gmra.mrb[0].mxu0 %v1718
    %v1802 = vpop.f32.mrb[0].mxu0
    %v1803 = vadd.f32 0.0, %v1802
    %v1804 = vpop.f32.mrb[0].mxu0
    %v1805 = vadd.f32 0.0, %v1804
    %1806 = vmatprep.mubr.f32.mxu0 0.0
    %1807 = vmatmul.mubr.f32.gmra.mrb[0].mxu0 %v1720
    %v1808 = vpop.f32.mrb[0].mxu0
    %v1809 = vadd.f32 0.0, %v1808
    %v1810 = vpop.f32.mrb[0].mxu0
    %v1811 = vadd.f32 0.0, %v1810
    %1812 = vmatprep.mubr.f32.mxu0 0.0
    %1813 = vmatmul.mubr.f32.gmra.mrb[0].mxu0 %v1722
    %v1814 = vpop.f32.mrb[0].mxu0
    %v1815 = vadd.f32 0.0, %v1814
    %v1816 = vpop.f32.mrb[0].mxu0
    %v1817 = vadd.f32 0.0, %v1816
    %1818 = vdwg.mxu0
    %v1819 = vadd.f32 %v1663, %v1797
    %v1820 = vadd.f32 %v1665, %v1799
    %v1821 = vadd.f32 %v1669, %v1803
    %v1822 = vadd.f32 %v1671, %v1805
    %v1823 = vadd.f32 %v1675, %v1809
    %v1824 = vadd.f32 %v1677, %v1811
    %v1825 = vadd.f32 %v1681, %v1815
    %v1826 = vadd.f32 %v1683, %v1817
    %s1827 = scalar_lea.vmem %s5, 528
    %v1828 = vld [vmem:[%s1827] sm:$0xff]
    %v1829 = vld [vmem:[%s1827 + $0x8] sm:$0xff]
    %v1830 = vld [vmem:[%s1827 + $0x10] sm:$0xff]
    %v1831 = vld [vmem:[%s1827 + $0x18] sm:$0xff]
    %v1832 = vld [vmem:[%s1827 + $0x20] sm:$0xff]
    %v1833 = vld [vmem:[%s1827 + $0x28] sm:$0xff]
    %v1834 = vld [vmem:[%s1827 + $0x30] sm:$0xff]
    %v1835 = vld [vmem:[%s1827 + $0x38] sm:$0xff]
    %v1836 = vld [vmem:[%s1827 + $0x40] sm:$0xff]
    %v1837 = vld [vmem:[%s1827 + $0x48] sm:$0xff]
    %v1838 = vld [vmem:[%s1827 + $0x50] sm:$0xff]
    %v1839 = vld [vmem:[%s1827 + $0x58] sm:$0xff]
    %v1840 = vld [vmem:[%s1827 + $0x60] sm:$0xff]
    %v1841 = vld [vmem:[%s1827 + $0x68] sm:$0xff]
    %v1842 = vld [vmem:[%s1827 + $0x70] sm:$0xff]
    %v1843 = vld [vmem:[%s1827 + $0x78] sm:$0xff]
    %v1844 = vld [vmem:[%s1827 + $0x80] sm:$0xff]
    %v1845 = vld [vmem:[%s1827 + $0x88] sm:$0xff]
    %v1846 = vld [vmem:[%s1827 + $0x90] sm:$0xff]
    %v1847 = vld [vmem:[%s1827 + $0x98] sm:$0xff]
    %v1848 = vld [vmem:[%s1827 + $0xa0] sm:$0xf]
    %v1849 = vld [vmem:[%s1827 + $0xa8] sm:$0xf]
    %vm1850 = vcmask 1044480
    %v1851 = vrot.slane %v1403, 3
    %v1852 = vrot.slane %v1408, 3
    %v1853 = vsel %vm1850, %v1851, %v1852
    %v1854 = vrot.slane %v1413, 3
    %v1855 = vsel %vm1850, %v1852, %v1854
    %v1856 = vrot.slane %v1418, 3
    %v1857 = vsel %vm1850, %v1854, %v1856
    %v1858 = vsel %vm1477, %v1853, 0
    %v1860 = vsel %vm1477, %v1855, 0
    %v1862 = vsel %vm1477, %v1857, 0
    %v1864 = vsel %vm1477, %v1856, 0
    %v1867 = vsel %vm1486, %v1848, 0
    %v1870 = vsel %vm1486, %v1849, 0
    %1872 = vmatprep.subr.mxu0 %v1829
    %1873 = vmatpush1.msra.mxu0 %v1828
    %1874 = vmatprep.subr.mxu0 %v1831
    %1875 = vmatpush1.msra.mxu0 %v1830
    %1876 = vmatprep.subr.mxu0 %v1833
    %1877 = vmatpush1.msra.mxu0 %v1832
    %1878 = vmatprep.subr.mxu0 %v1835
    %1879 = vmatpush1.msra.mxu0 %v1834
    %1880 = vmatprep.subr.mxu0 %v1837
    %1881 = vmatpush1.msra.mxu0 %v1836
    %1882 = vmatprep.subr.mxu0 %v1839
    %1883 = vmatpush1.msra.mxu0 %v1838
    %1884 = vmatprep.subr.mxu0 %v1841
    %1885 = vmatpush1.msra.mxu0 %v1840
    %1886 = vmatprep.subr.mxu0 %v1843
    %1887 = vmatpush1.msra.mxu0 %v1842
    %1888 = vmatprep.subr.mxu0 %v1845
    %1889 = vmatpush1.msra.mxu0 %v1844
    %1890 = vmatprep.subr.mxu0 %v1847
    %1891 = vmatpush1.msra.mxu0 %v1846
    %1892 = vmatprep.subr.mxu0 %v1870
    %1893 = vmatpush1.msra.mxu0 %v1867
    %1894 = vmatprep.subr.mxu0 0.0
    %1895 = vmatpush1.msra.mxu0 0.0
    %1896 = vmatprep.subr.mxu0 0.0
    %1897 = vmatpush1.msra.mxu0 0.0
    %1898 = vmatprep.subr.mxu0 0.0
    %1899 = vmatpush1.msra.mxu0 0.0
    %1900 = vmatprep.subr.mxu0 0.0
    %1901 = vmatpush1.msra.mxu0 0.0
    %1902 = vmatprep.subr.mxu0 0.0
    %1903 = vmatpush1.msra.mxu0 0.0
    %1904 = vmatprep.subr.mxu0 0.0
    %1905 = vmatpush1.msra.mxu0 0.0
    %1906 = vmatprep.subr.mxu0 0.0
    %1907 = vmatpush1.msra.mxu0 0.0
    %1908 = vmatprep.subr.mxu0 0.0
    %1909 = vmatpush1.msra.mxu0 0.0
    %1910 = vmatprep.subr.mxu0 0.0
    %1911 = vmatpush1.msra.mxu0 0.0
    %1912 = vmatprep.subr.mxu0 0.0
    %1913 = vmatpush1.msra.mxu0 0.0
    %1914 = vmatprep.subr.mxu0 0.0
    %1915 = vmatpush1.msra.mxu0 0.0
    %1916 = vmatprep.subr.mxu0 0.0
    %1917 = vmatpush1.msra.mxu0 0.0
    %1918 = vmatprep.subr.mxu0 0.0
    %1919 = vmatpush1.msra.mxu0 0.0
    %1920 = vmatprep.subr.mxu0 0.0
    %1921 = vmatpush1.msra.mxu0 0.0
    %1922 = vmatprep.subr.mxu0 0.0
    %1923 = vmatpush1.msra.mxu0 0.0
    %1924 = vmatprep.subr.mxu0 0.0
    %1925 = vmatpush1.msra.mxu0 0.0
    %1926 = vmatprep.subr.mxu0 0.0
    %1927 = vmatpush1.msra.mxu0 0.0
    %1928 = vmatprep.subr.mxu0 0.0
    %1929 = vmatpush1.msra.mxu0 0.0
    %1930 = vmatprep.subr.mxu0 0.0
    %1931 = vmatpush1.msra.mxu0 0.0
    %1932 = vmatprep.subr.mxu0 0.0
    %1933 = vmatpush1.msra.mxu0 0.0
    %1934 = vmatprep.subr.mxu0 0.0
    %1935 = vmatpush1.msra.mxu0 0.0
    %1936 = vmatprep.mubr.f32.mxu0 0.0
    %1937 = vmatmul.mubr.f32.gmra.mrb[0].mxu0 %v1858
    %v1938 = vpop.f32.mrb[0].mxu0
    %v1939 = vadd.f32 0.0, %v1938
    %v1940 = vpop.f32.mrb[0].mxu0
    %v1941 = vadd.f32 0.0, %v1940
    %1942 = vmatprep.mubr.f32.mxu0 0.0
    %1943 = vmatmul.mubr.f32.gmra.mrb[0].mxu0 %v1860
    %v1944 = vpop.f32.mrb[0].mxu0
    %v1945 = vadd.f32 0.0, %v1944
    %v1946 = vpop.f32.mrb[0].mxu0
    %v1947 = vadd.f32 0.0, %v1946
    %1948 = vmatprep.mubr.f32.mxu0 0.0
    %1949 = vmatmul.mubr.f32.gmra.mrb[0].mxu0 %v1862
    %v1950 = vpop.f32.mrb[0].mxu0
    %v1951 = vadd.f32 0.0, %v1950
    %v1952 = vpop.f32.mrb[0].mxu0
    %v1953 = vadd.f32 0.0, %v1952
    %1954 = vmatprep.mubr.f32.mxu0 0.0
    %1955 = vmatmul.mubr.f32.gmra.mrb[0].mxu0 %v1864
    %v1956 = vpop.f32.mrb[0].mxu0
    %v1957 = vadd.f32 0.0, %v1956
    %v1958 = vpop.f32.mrb[0].mxu0
    %v1959 = vadd.f32 0.0, %v1958
    %1960 = vdwg.mxu0
    %v1961 = vadd.f32 %v1819, %v1939
    %v1962 = vadd.f32 %v1820, %v1941
    %v1963 = vadd.f32 %v1821, %v1945
    %v1964 = vadd.f32 %v1822, %v1947
    %v1965 = vadd.f32 %v1823, %v1951
    %v1966 = vadd.f32 %v1824, %v1953
    %v1967 = vadd.f32 %v1825, %v1957
    %v1968 = vadd.f32 %v1826, %v1959
    %s1969 = scalar_lea.vmem %s5, 704
    %v1970 = vld [vmem:[%s1969] sm:$0xff]
    %v1971 = vld [vmem:[%s1969 + $0x8] sm:$0xff]
    %v1972 = vld [vmem:[%s1969 + $0x10] sm:$0xff]
    %v1973 = vld [vmem:[%s1969 + $0x18] sm:$0xff]
    %v1974 = vld [vmem:[%s1969 + $0x20] sm:$0xff]
    %v1975 = vld [vmem:[%s1969 + $0x28] sm:$0xff]
    %v1976 = vld [vmem:[%s1969 + $0x30] sm:$0xff]
    %v1977 = vld [vmem:[%s1969 + $0x38] sm:$0xff]
    %v1978 = vld [vmem:[%s1969 + $0x40] sm:$0xff]
    %v1979 = vld [vmem:[%s1969 + $0x48] sm:$0xff]
    %v1980 = vld [vmem:[%s1969 + $0x50] sm:$0xff]
    %v1981 = vld [vmem:[%s1969 + $0x58] sm:$0xff]
    %v1982 = vld [vmem:[%s1969 + $0x60] sm:$0xff]
    %v1983 = vld [vmem:[%s1969 + $0x68] sm:$0xff]
    %v1984 = vld [vmem:[%s1969 + $0x70] sm:$0xff]
    %v1985 = vld [vmem:[%s1969 + $0x78] sm:$0xff]
    %v1986 = vld [vmem:[%s1969 + $0x80] sm:$0xff]
    %v1987 = vld [vmem:[%s1969 + $0x88] sm:$0xff]
    %v1988 = vld [vmem:[%s1969 + $0x90] sm:$0xff]
    %v1989 = vld [vmem:[%s1969 + $0x98] sm:$0xff]
    %v1990 = vld [vmem:[%s1969 + $0xa0] sm:$0xf]
    %v1991 = vld [vmem:[%s1969 + $0xa8] sm:$0xf]
    %v1992 = vrot.slane %v1403, 4
    %v1993 = vrot.slane %v1408, 4
    %v1994 = vsel %vm1486, %v1992, %v1993
    %v1995 = vrot.slane %v1413, 4
    %v1996 = vsel %vm1486, %v1993, %v1995
    %v1997 = vrot.slane %v1418, 4
    %v1998 = vsel %vm1486, %v1995, %v1997
    %v1999 = vsel %vm1477, %v1994, 0
    %v2001 = vsel %vm1477, %v1996, 0
    %v2003 = vsel %vm1477, %v1998, 0
    %v2005 = vsel %vm1477, %v1997, 0
    %v2008 = vsel %vm1486, %v1990, 0
    %v2011 = vsel %vm1486, %v1991, 0
    %2013 = vmatprep.subr.mxu0 %v1971
    %2014 = vmatpush1.msra.mxu0 %v1970
    %2015 = vmatprep.subr.mxu0 %v1973
    %2016 = vmatpush1.msra.mxu0 %v1972
    %2017 = vmatprep.subr.mxu0 %v1975
    %2018 = vmatpush1.msra.mxu0 %v1974
    %2019 = vmatprep.subr.mxu0 %v1977
    %2020 = vmatpush1.msra.mxu0 %v1976
    %2021 = vmatprep.subr.mxu0 %v1979
    %2022 = vmatpush1.msra.mxu0 %v1978
    %2023 = vmatprep.subr.mxu0 %v1981
    %2024 = vmatpush1.msra.mxu0 %v1980
    %2025 = vmatprep.subr.mxu0 %v1983
    %2026 = vmatpush1.msra.mxu0 %v1982
    %2027 = vmatprep.subr.mxu0 %v1985
    %2028 = vmatpush1.msra.mxu0 %v1984
    %2029 = vmatprep.subr.mxu0 %v1987
    %2030 = vmatpush1.msra.mxu0 %v1986
    %2031 = vmatprep.subr.mxu0 %v1989
    %2032 = vmatpush1.msra.mxu0 %v1988
    %2033 = vmatprep.subr.mxu0 %v2011
    %2034 = vmatpush1.msra.mxu0 %v2008
    %2035 = vmatprep.subr.mxu0 0.0
    %2036 = vmatpush1.msra.mxu0 0.0
    %2037 = vmatprep.subr.mxu0 0.0
    %2038 = vmatpush1.msra.mxu0 0.0
    %2039 = vmatprep.subr.mxu0 0.0
    %2040 = vmatpush1.msra.mxu0 0.0
    %2041 = vmatprep.subr.mxu0 0.0
    %2042 = vmatpush1.msra.mxu0 0.0
    %2043 = vmatprep.subr.mxu0 0.0
    %2044 = vmatpush1.msra.mxu0 0.0
    %2045 = vmatprep.subr.mxu0 0.0
    %2046 = vmatpush1.msra.mxu0 0.0
    %2047 = vmatprep.subr.mxu0 0.0
    %2048 = vmatpush1.msra.mxu0 0.0
    %2049 = vmatprep.subr.mxu0 0.0
    %2050 = vmatpush1.msra.mxu0 0.0
    %2051 = vmatprep.subr.mxu0 0.0
    %2052 = vmatpush1.msra.mxu0 0.0
    %2053 = vmatprep.subr.mxu0 0.0
    %2054 = vmatpush1.msra.mxu0 0.0
    %2055 = vmatprep.subr.mxu0 0.0
    %2056 = vmatpush1.msra.mxu0 0.0
    %2057 = vmatprep.subr.mxu0 0.0
    %2058 = vmatpush1.msra.mxu0 0.0
    %2059 = vmatprep.subr.mxu0 0.0
    %2060 = vmatpush1.msra.mxu0 0.0
    %2061 = vmatprep.subr.mxu0 0.0
    %2062 = vmatpush1.msra.mxu0 0.0
    %2063 = vmatprep.subr.mxu0 0.0
    %2064 = vmatpush1.msra.mxu0 0.0
    %2065 = vmatprep.subr.mxu0 0.0
    %2066 = vmatpush1.msra.mxu0 0.0
    %2067 = vmatprep.subr.mxu0 0.0
    %2068 = vmatpush1.msra.mxu0 0.0
    %2069 = vmatprep.subr.mxu0 0.0
    %2070 = vmatpush1.msra.mxu0 0.0
    %2071 = vmatprep.subr.mxu0 0.0
    %2072 = vmatpush1.msra.mxu0 0.0
    %2073 = vmatprep.subr.mxu0 0.0
    %2074 = vmatpush1.msra.mxu0 0.0
    %2075 = vmatprep.subr.mxu0 0.0
    %2076 = vmatpush1.msra.mxu0 0.0
    %2077 = vmatprep.mubr.f32.mxu0 0.0
    %2078 = vmatmul.mubr.f32.gmra.mrb[0].mxu0 %v1999
    %v2079 = vpop.f32.mrb[0].mxu0
    %v2080 = vadd.f32 0.0, %v2079
    %v2081 = vpop.f32.mrb[0].mxu0
    %v2082 = vadd.f32 0.0, %v2081
    %2083 = vmatprep.mubr.f32.mxu0 0.0
    %2084 = vmatmul.mubr.f32.gmra.mrb[0].mxu0 %v2001
    %v2085 = vpop.f32.mrb[0].mxu0
    %v2086 = vadd.f32 0.0, %v2085
    %v2087 = vpop.f32.mrb[0].mxu0
    %v2088 = vadd.f32 0.0, %v2087
    %2089 = vmatprep.mubr.f32.mxu0 0.0
    %2090 = vmatmul.mubr.f32.gmra.mrb[0].mxu0 %v2003
    %v2091 = vpop.f32.mrb[0].mxu0
    %v2092 = vadd.f32 0.0, %v2091
    %v2093 = vpop.f32.mrb[0].mxu0
    %v2094 = vadd.f32 0.0, %v2093
    %2095 = vmatprep.mubr.f32.mxu0 0.0
    %2096 = vmatmul.mubr.f32.gmra.mrb[0].mxu0 %v2005
    %v2097 = vpop.f32.mrb[0].mxu0
    %v2098 = vadd.f32 0.0, %v2097
    %v2099 = vpop.f32.mrb[0].mxu0
    %v2100 = vadd.f32 0.0, %v2099
    %2101 = vdwg.mxu0
    %v2102 = vadd.f32 %v1961, %v2080
    %v2103 = vadd.f32 %v1962, %v2082
    %v2104 = vadd.f32 %v1963, %v2086
    %v2105 = vadd.f32 %v1964, %v2088
    %v2106 = vadd.f32 %v1965, %v2092
    %v2107 = vadd.f32 %v1966, %v2094
    %v2108 = vadd.f32 %v1967, %v2098
    %v2109 = vadd.f32 %v1968, %v2100
    %v2110 = vld [vmem:[%s6] sm:$0x3]
    %v2112 = vlaneseq
    %v2113 = vshrl.u32 %v2112, 7
    %v2114 = vsub.s32 0, %v2113
    %v2115 = vrot.slane %v2110, %v2114
    %v2116 = vlaneseq
    %v2117 = vshrl.u32 %v2116, 7
    %v2118 = vsub.s32 1, %v2117
    %v2119 = vrot.slane %v2110, %v2118
    %v2122 = vadd.f32 %v2102, %v2115
    %v2123 = vadd.f32 %v2103, %v2119
    %v2124 = vadd.f32 %v2104, %v2115
    %v2125 = vadd.f32 %v2105, %v2119
    %v2126 = vadd.f32 %v2106, %v2115
    %v2127 = vadd.f32 %v2107, %v2119
    %v2128 = vadd.f32 %v2108, %v2115
    %v2129 = vadd.f32 %v2109, %v2119
    %v2130 = vmax.f32 %v2122, 0.0
    %v2131 = vmax.f32 %v2123, 0.0
    %v2132 = vmax.f32 %v2124, 0.0
    %v2133 = vmax.f32 %v2125, 0.0
    %v2134 = vmax.f32 %v2126, 0.0
    %v2135 = vmax.f32 %v2127, 0.0
    %v2136 = vmax.f32 %v2128, 0.0
    %v2137 = vmax.f32 %v2129, 0.0
    %2146 = vrot.lane.b32.xlu0 %v2130, 127
    %v2147 = vpop.permute.xlu0 %2146
    %2148 = vrot.lane.b32.xlu0 %v2131, 127
    %v2149 = vpop.permute.xlu0 %2148
    %2150 = vrot.lane.b32.xlu0 %v2132, 127
    %v2151 = vpop.permute.xlu0 %2150
    %2152 = vrot.lane.b32.xlu0 %v2133, 127
    %v2153 = vpop.permute.xlu0 %2152
    %2154 = vrot.lane.b32.xlu0 %v2134, 127
    %v2155 = vpop.permute.xlu0 %2154
    %2156 = vrot.lane.b32.xlu0 %v2135, 127
    %v2157 = vpop.permute.xlu0 %2156
    %2158 = vrot.lane.b32.xlu0 %v2136, 127
    %v2159 = vpop.permute.xlu0 %2158
    %2160 = vrot.lane.b32.xlu0 %v2137, 127
    %v2161 = vpop.permute.xlu0 %2160
    %v2162 = vsel %vm1041, %v2147, %v2149
    %v2163 = vsel %vm1041, %v2151, %v2153
    %v2164 = vsel %vm1041, %v2155, %v2157
    %v2165 = vsel %vm1041, %v2159, %v2161
    %v2174 = vmax.f32 %v2130, %v2162
    %v2175 = vmax.f32 %v2131, %v2149
    %v2176 = vmax.f32 %v2132, %v2163
    %v2177 = vmax.f32 %v2133, %v2153
    %v2178 = vmax.f32 %v2134, %v2164
    %v2179 = vmax.f32 %v2135, %v2157
    %v2180 = vmax.f32 %v2136, %v2165
    %v2181 = vmax.f32 %v2137, %v2161
    %v2190 = vrot.slane %v2174, 1
    %v2191 = vrot.slane %v2176, 1
    %v2192 = vsel %vm1098, %v2190, %v2191
    %v2193 = vrot.slane %v2175, 1
    %v2194 = vrot.slane %v2177, 1
    %v2195 = vsel %vm1098, %v2193, %v2194
    %v2196 = vrot.slane %v2178, 1
    %v2197 = vsel %vm1098, %v2191, %v2196
    %v2198 = vrot.slane %v2179, 1
    %v2199 = vsel %vm1098, %v2194, %v2198
    %v2200 = vrot.slane %v2180, 1
    %v2201 = vsel %vm1098, %v2196, %v2200
    %v2202 = vrot.slane %v2181, 1
    %v2203 = vsel %vm1098, %v2198, %v2202
    %v2212 = vmax.f32 %v2174, %v2192
    %v2213 = vmax.f32 %v2175, %v2195
    %v2214 = vmax.f32 %v2176, %v2197
    %v2215 = vmax.f32 %v2177, %v2199
    %v2216 = vmax.f32 %v2178, %v2201
    %v2217 = vmax.f32 %v2179, %v2203
    %v2218 = vmax.f32 %v2180, %v2200
    %v2219 = vmax.f32 %v2181, %v2202
    %v2220 = vld [vmem:[%s7] sm:$0xff]
    %v2221 = vld [vmem:[%s7 + $0x8] sm:$0x3]
    %v2222 = vld [vmem:[%s8] sm:$0xff]
    %v2223 = vld [vmem:[%s8 + $0x8] sm:$0xff]
    %v2224 = vld [vmem:[%s8 + $0x10] sm:$0xff]
    %v2225 = vld [vmem:[%s8 + $0x18] sm:$0xff]
    %v2226 = vld [vmem:[%s8 + $0x20] sm:$0xff]
    %v2227 = vld [vmem:[%s8 + $0x28] sm:$0xff]
    %v2228 = vld [vmem:[%s8 + $0x30] sm:$0xff]
    %v2229 = vld [vmem:[%s8 + $0x38] sm:$0xff]
    %v2230 = vld [vmem:[%s8 + $0x40] sm:$0xff]
    %v2231 = vld [vmem:[%s8 + $0x48] sm:$0xff]
    %v2232 = vld [vmem:[%s8 + $0x50] sm:$0xff]
    %v2233 = vld [vmem:[%s8 + $0x58] sm:$0xff]
    %v2234 = vld [vmem:[%s8 + $0x60] sm:$0xff]
    %v2235 = vld [vmem:[%s8 + $0x68] sm:$0xff]
    %v2236 = vld [vmem:[%s8 + $0x70] sm:$0xff]
    %v2237 = vld [vmem:[%s8 + $0x78] sm:$0xff]
    %v2238 = vld [vmem:[%s8 + $0x80] sm:$0xff]
    %v2239 = vld [vmem:[%s8 + $0x88] sm:$0xff]
    %v2240 = vld [vmem:[%s8 + $0x90] sm:$0xff]
    %v2241 = vld [vmem:[%s8 + $0x98] sm:$0x7f]
    %vm2242 = vcmask 252928
    %v2244 = vsel %vm2242, %v2213, 0
    %v2247 = vsel %vm2242, %v2215, 0
    %v2250 = vsel %vm2242, %v2217, 0
    %v2253 = vsel %vm2242, %v2219, 0
    %v2256 = vsel %vm1098, %v2241, 0
    %2258 = vmatprep.subr.mxu0 0.0
    %2259 = vmatpush1.msra.mxu0 %v2222
    %2260 = vmatprep.subr.mxu0 0.0
    %2261 = vmatpush1.msra.mxu0 %v2223
    %2262 = vmatprep.subr.mxu0 0.0
    %2263 = vmatpush1.msra.mxu0 %v2224
    %2264 = vmatprep.subr.mxu0 0.0
    %2265 = vmatpush1.msra.mxu0 %v2225
    %2266 = vmatprep.subr.mxu0 0.0
    %2267 = vmatpush1.msra.mxu0 %v2226
    %2268 = vmatprep.subr.mxu0 0.0
    %2269 = vmatpush1.msra.mxu0 %v2227
    %2270 = vmatprep.subr.mxu0 0.0
    %2271 = vmatpush1.msra.mxu0 %v2228
    %2272 = vmatprep.subr.mxu0 0.0
    %2273 = vmatpush1.msra.mxu0 %v2229
    %2274 = vmatprep.subr.mxu0 0.0
    %2275 = vmatpush1.msra.mxu0 %v2230
    %2276 = vmatprep.subr.mxu0 0.0
    %2277 = vmatpush1.msra.mxu0 %v2231
    %2278 = vmatprep.subr.mxu0 0.0
    %2279 = vmatpush1.msra.mxu0 %v2232
    %2280 = vmatprep.subr.mxu0 0.0
    %2281 = vmatpush1.msra.mxu0 %v2233
    %2282 = vmatprep.subr.mxu0 0.0
    %2283 = vmatpush1.msra.mxu0 %v2234
    %2284 = vmatprep.subr.mxu0 0.0
    %2285 = vmatpush1.msra.mxu0 %v2235
    %2286 = vmatprep.subr.mxu0 0.0
    %2287 = vmatpush1.msra.mxu0 %v2236
    %2288 = vmatprep.subr.mxu0 0.0
    %2289 = vmatpush1.msra.mxu0 %v2237
    %2290 = vmatprep.subr.mxu0 0.0
    %2291 = vmatpush1.msra.mxu0 %v2238
    %2292 = vmatprep.subr.mxu0 0.0
    %2293 = vmatpush1.msra.mxu0 %v2239
    %2294 = vmatprep.subr.mxu0 0.0
    %2295 = vmatpush1.msra.mxu0 %v2240
    %2296 = vmatprep.subr.mxu0 0.0
    %2297 = vmatpush1.msra.mxu0 %v2256
    %2298 = vmatprep.subr.mxu0 0.0
    %2299 = vmatpush1.msra.mxu0 0.0
    %2300 = vmatprep.subr.mxu0 0.0
    %2301 = vmatpush1.msra.mxu0 0.0
    %2302 = vmatprep.subr.mxu0 0.0
    %2303 = vmatpush1.msra.mxu0 0.0
    %2304 = vmatprep.subr.mxu0 0.0
    %2305 = vmatpush1.msra.mxu0 0.0
    %2306 = vmatprep.subr.mxu0 0.0
    %2307 = vmatpush1.msra.mxu0 0.0
    %2308 = vmatprep.subr.mxu0 0.0
    %2309 = vmatpush1.msra.mxu0 0.0
    %2310 = vmatprep.subr.mxu0 0.0
    %2311 = vmatpush1.msra.mxu0 0.0
    %2312 = vmatprep.subr.mxu0 0.0
    %2313 = vmatpush1.msra.mxu0 0.0
    %2314 = vmatprep.subr.mxu0 0.0
    %2315 = vmatpush1.msra.mxu0 0.0
    %2316 = vmatprep.subr.mxu0 0.0
    %2317 = vmatpush1.msra.mxu0 0.0
    %2318 = vmatprep.subr.mxu0 0.0
    %2319 = vmatpush1.msra.mxu0 0.0
    %2320 = vmatprep.subr.mxu0 0.0
    %2321 = vmatpush1.msra.mxu0 0.0
    %2322 = vmatprep.mubr.f32.mxu0 %v2244
    %2323 = vmatmul.mubr.f32.gmra.mrb[0].mxu0 %v2212
    %v2324 = vpop.f32.mrb[0].mxu0
    %v2325 = vadd.f32 0.0, %v2324
    %v2326 = vpop.f32.mrb[0].mxu0
    %2327 = vmatprep.mubr.f32.mxu0 %v2247
    %2328 = vmatmul.mubr.f32.gmra.mrb[0].mxu0 %v2214
    %v2329 = vpop.f32.mrb[0].mxu0
    %v2330 = vadd.f32 0.0, %v2329
    %v2331 = vpop.f32.mrb[0].mxu0
    %2332 = vmatprep.mubr.f32.mxu0 %v2250
    %2333 = vmatmul.mubr.f32.gmra.mrb[0].mxu0 %v2216
    %v2334 = vpop.f32.mrb[0].mxu0
    %v2335 = vadd.f32 0.0, %v2334
    %v2336 = vpop.f32.mrb[0].mxu0
    %2337 = vmatprep.mubr.f32.mxu0 %v2253
    %2338 = vmatmul.mubr.f32.gmra.mrb[0].mxu0 %v2218
    %v2339 = vpop.f32.mrb[0].mxu0
    %v2340 = vadd.f32 0.0, %v2339
    %v2341 = vpop.f32.mrb[0].mxu0
    %2342 = vdwg.mxu0
    %vm2343 = vcmask 203776
    %v2345 = vsel %vm2343, %v2220, 0
    %v2348 = vsel %vm2343, %v2221, 0
    %vm2350 = vcmask 1040384
    %v2352 = vsel %vm2350, %v2340, 0
    %2354 = vmatprep.subr.mxu0 0.0
    %2355 = vmatpush1.msra.mxu0 %v2325
    %2356 = vmatprep.subr.mxu0 0.0
    %2357 = vmatpush1.msra.mxu0 %v2330
    %2358 = vmatprep.subr.mxu0 0.0
    %2359 = vmatpush1.msra.mxu0 %v2335
    %2360 = vmatprep.subr.mxu0 0.0
    %2361 = vmatpush1.msra.mxu0 %v2352
    %2362 = vmatprep.subr.mxu0 0.0
    %2363 = vmatpush1.msra.mxu0 0.0
    %2364 = vmatprep.subr.mxu0 0.0
    %2365 = vmatpush1.msra.mxu0 0.0
    %2366 = vmatprep.subr.mxu0 0.0
    %2367 = vmatpush1.msra.mxu0 0.0
    %2368 = vmatprep.subr.mxu0 0.0
    %2369 = vmatpush1.msra.mxu0 0.0
    %2370 = vmatprep.subr.mxu0 0.0
    %2371 = vmatpush1.msra.mxu0 0.0
    %2372 = vmatprep.subr.mxu0 0.0
    %2373 = vmatpush1.msra.mxu0 0.0
    %2374 = vmatprep.subr.mxu0 0.0
    %2375 = vmatpush1.msra.mxu0 0.0
    %2376 = vmatprep.subr.mxu0 0.0
    %2377 = vmatpush1.msra.mxu0 0.0
    %2378 = vmatprep.subr.mxu0 0.0
    %2379 = vmatpush1.msra.mxu0 0.0
    %2380 = vmatprep.subr.mxu0 0.0
    %2381 = vmatpush1.msra.mxu0 0.0
    %2382 = vmatprep.subr.mxu0 0.0
    %2383 = vmatpush1.msra.mxu0 0.0
    %2384 = vmatprep.subr.mxu0 0.0
    %2385 = vmatpush1.msra.mxu0 0.0
    %2386 = vmatprep.subr.mxu0 0.0
    %2387 = vmatpush1.msra.mxu0 0.0
    %2388 = vmatprep.subr.mxu0 0.0
    %2389 = vmatpush1.msra.mxu0 0.0
    %2390 = vmatprep.subr.mxu0 0.0
    %2391 = vmatpush1.msra.mxu0 0.0
    %2392 = vmatprep.subr.mxu0 0.0
    %2393 = vmatpush1.msra.mxu0 0.0
    %2394 = vmatprep.subr.mxu0 0.0
    %2395 = vmatpush1.msra.mxu0 0.0
    %2396 = vmatprep.subr.mxu0 0.0
    %2397 = vmatpush1.msra.mxu0 0.0
    %2398 = vmatprep.subr.mxu0 0.0
    %2399 = vmatpush1.msra.mxu0 0.0
    %2400 = vmatprep.subr.mxu0 0.0
    %2401 = vmatpush1.msra.mxu0 0.0
    %2402 = vmatprep.subr.mxu0 0.0
    %2403 = vmatpush1.msra.mxu0 0.0
    %2404 = vmatprep.subr.mxu0 0.0
    %2405 = vmatpush1.msra.mxu0 0.0
    %2406 = vmatprep.subr.mxu0 0.0
    %2407 = vmatpush1.msra.mxu0 0.0
    %2408 = vmatprep.subr.mxu0 0.0
    %2409 = vmatpush1.msra.mxu0 0.0
    %2410 = vmatprep.subr.mxu0 0.0
    %2411 = vmatpush1.msra.mxu0 0.0
    %2412 = vmatprep.subr.mxu0 0.0
    %2413 = vmatpush1.msra.mxu0 0.0
    %2414 = vmatprep.subr.mxu0 0.0
    %2415 = vmatpush1.msra.mxu0 0.0
    %2416 = vmatprep.subr.mxu0 0.0
    %2417 = vmatpush1.msra.mxu0 0.0
    %2418 = vmatprep.mubr.f32.mxu0 0.0
    %2419 = vmatmul.mubr.f32.gmra.mrb[0].mxu0 %v2345
    %v2420 = vpop.f32.mrb[0].mxu0
    %v2421 = vadd.f32 0.0, %v2420
    %v2422 = vpop.f32.mrb[0].mxu0
    %2423 = vmatprep.mubr.f32.mxu0 0.0
    %2424 = vmatmul.mubr.f32.gmra.mrb[0].mxu0 %v2348
    %v2425 = vpop.f32.mrb[0].mxu0
    %v2426 = vadd.f32 0.0, %v2425
    %v2427 = vpop.f32.mrb[0].mxu0
    %2428 = vdwg.mxu0
    %v2429 = vld [vmem:[%s9] sm:$0xff]
    %v2430 = vld [vmem:[%s9 + $0x8] sm:$0xff]
    %v2431 = vld [vmem:[%s9 + $0x10] sm:$0xff]
    %v2432 = vld [vmem:[%s9 + $0x18] sm:$0xff]
    %v2433 = vld [vmem:[%s9 + $0x20] sm:$0xff]
    %v2434 = vld [vmem:[%s9 + $0x28] sm:$0xff]
    %v2435 = vld [vmem:[%s9 + $0x30] sm:$0xff]
    %v2436 = vld [vmem:[%s9 + $0x38] sm:$0xff]
    %v2437 = vld [vmem:[%s9 + $0x40] sm:$0xff]
    %v2438 = vld [vmem:[%s9 + $0x48] sm:$0xff]
    %v2439 = vld [vmem:[%s9 + $0x50] sm:$0xff]
    %v2440 = vld [vmem:[%s9 + $0x58] sm:$0xff]
    %v2441 = vld [vmem:[%s9 + $0x60] sm:$0xff]
    %v2442 = vld [vmem:[%s9 + $0x68] sm:$0xff]
    %v2443 = vld [vmem:[%s9 + $0x70] sm:$0xff]
    %v2444 = vld [vmem:[%s9 + $0x78] sm:$0xff]
    %v2445 = vld [vmem:[%s9 + $0x80] sm:$0xff]
    %v2446 = vld [vmem:[%s9 + $0x88] sm:$0xff]
    %v2447 = vld [vmem:[%s9 + $0x90] sm:$0xff]
    %v2448 = vld [vmem:[%s9 + $0x98] sm:$0xff]
    %s2449 = scalar_lea.vmem %s9, 160
    %v2450 = vld [vmem:[%s2449] sm:$0xff]
    %v2451 = vld [vmem:[%s2449 + $0x8] sm:$0xff]
    %v2452 = vld [vmem:[%s2449 + $0x10] sm:$0xff]
    %v2453 = vld [vmem:[%s2449 + $0x18] sm:$0xff]
    %v2454 = vld [vmem:[%s2449 + $0x20] sm:$0xff]
    %v2455 = vld [vmem:[%s2449 + $0x28] sm:$0xff]
    %v2456 = vld [vmem:[%s2449 + $0x30] sm:$0xff]
    %v2457 = vld [vmem:[%s2449 + $0x38] sm:$0xff]
    %v2458 = vld [vmem:[%s2449 + $0x40] sm:$0xff]
    %v2459 = vld [vmem:[%s2449 + $0x48] sm:$0xff]
    %v2460 = vld [vmem:[%s2449 + $0x50] sm:$0xff]
    %v2461 = vld [vmem:[%s2449 + $0x58] sm:$0xff]
    %v2462 = vld [vmem:[%s2449 + $0x60] sm:$0xff]
    %v2463 = vld [vmem:[%s2449 + $0x68] sm:$0xff]
    %v2464 = vld [vmem:[%s2449 + $0x70] sm:$0xff]
    %v2465 = vld [vmem:[%s2449 + $0x78] sm:$0xff]
    %v2466 = vld [vmem:[%s2449 + $0x80] sm:$0xff]
    %v2467 = vld [vmem:[%s2449 + $0x88] sm:$0xff]
    %v2468 = vld [vmem:[%s2449 + $0x90] sm:$0xff]
    %v2469 = vld [vmem:[%s2449 + $0x98] sm:$0xff]
    %v2471 = vrot.slane %v2421, 2
    %vm2472 = vcmask 654336
    %v2473 = vsel %vm2472, %v2471, 0
    %2475 = vmatprep.subr.mxu0 %v2451
    %2476 = vmatpush1.msra.mxu0 %v2450
    %2477 = vmatprep.subr.mxu0 %v2453
    %2478 = vmatpush1.msra.mxu0 %v2452
    %2479 = vmatprep.subr.mxu0 %v2455
    %2480 = vmatpush1.msra.mxu0 %v2454
    %2481 = vmatprep.subr.mxu0 %v2457
    %2482 = vmatpush1.msra.mxu0 %v2456
    %2483 = vmatprep.subr.mxu0 %v2459
    %2484 = vmatpush1.msra.mxu0 %v2458
    %2485 = vmatprep.subr.mxu0 %v2461
    %2486 = vmatpush1.msra.mxu0 %v2460
    %2487 = vmatprep.subr.mxu0 %v2463
    %2488 = vmatpush1.msra.mxu0 %v2462
    %2489 = vmatprep.subr.mxu0 %v2465
    %2490 = vmatpush1.msra.mxu0 %v2464
    %2491 = vmatprep.subr.mxu0 %v2467
    %2492 = vmatpush1.msra.mxu0 %v2466
    %2493 = vmatprep.subr.mxu0 %v2469
    %2494 = vmatpush1.msra.mxu0 %v2468
    %2495 = vmatprep.subr.mxu0 0.0
    %2496 = vmatpush1.msra.mxu0 0.0
    %2497 = vmatprep.subr.mxu0 0.0
    %2498 = vmatpush1.msra.mxu0 0.0
    %2499 = vmatprep.subr.mxu0 0.0
    %2500 = vmatpush1.msra.mxu0 0.0
    %2501 = vmatprep.subr.mxu0 0.0
    %2502 = vmatpush1.msra.mxu0 0.0
    %2503 = vmatprep.subr.mxu0 0.0
    %2504 = vmatpush1.msra.mxu0 0.0
    %2505 = vmatprep.subr.mxu0 0.0
    %2506 = vmatpush1.msra.mxu0 0.0
    %2507 = vmatprep.subr.mxu0 0.0
    %2508 = vmatpush1.msra.mxu0 0.0
    %2509 = vmatprep.subr.mxu0 0.0
    %2510 = vmatpush1.msra.mxu0 0.0
    %2511 = vmatprep.subr.mxu0 0.0
    %2512 = vmatpush1.msra.mxu0 0.0
    %2513 = vmatprep.subr.mxu0 0.0
    %2514 = vmatpush1.msra.mxu0 0.0
    %2515 = vmatprep.subr.mxu0 0.0
    %2516 = vmatpush1.msra.mxu0 0.0
    %2517 = vmatprep.subr.mxu0 0.0
    %2518 = vmatpush1.msra.mxu0 0.0
    %2519 = vmatprep.subr.mxu0 0.0
    %2520 = vmatpush1.msra.mxu0 0.0
    %2521 = vmatprep.subr.mxu0 0.0
    %2522 = vmatpush1.msra.mxu0 0.0
    %2523 = vmatprep.subr.mxu0 0.0
    %2524 = vmatpush1.msra.mxu0 0.0
    %2525 = vmatprep.subr.mxu0 0.0
    %2526 = vmatpush1.msra.mxu0 0.0
    %2527 = vmatprep.subr.mxu0 0.0
    %2528 = vmatpush1.msra.mxu0 0.0
    %2529 = vmatprep.subr.mxu0 0.0
    %2530 = vmatpush1.msra.mxu0 0.0
    %2531 = vmatprep.subr.mxu0 0.0
    %2532 = vmatpush1.msra.mxu0 0.0
    %2533 = vmatprep.subr.mxu0 0.0
    %2534 = vmatpush1.msra.mxu0 0.0
    %2535 = vmatprep.subr.mxu0 0.0
    %2536 = vmatpush1.msra.mxu0 0.0
    %2537 = vmatprep.subr.mxu0 0.0
    %2538 = vmatpush1.msra.mxu0 0.0
    %2539 = vmatprep.mubr.f32.mxu0 0.0
    %2540 = vmatmul.mubr.f32.gmra.mrb[0].mxu0 %v2473
    %v2541 = vpop.f32.mrb[0].mxu0
    %v2542 = vadd.f32 0.0, %v2541
    %v2543 = vpop.f32.mrb[0].mxu0
    %v2544 = vadd.f32 0.0, %v2543
    %2545 = vdwg.mxu0
    %v2546 = vsel %vm2472, %v2421, 0
    %2548 = vmatprep.subr.mxu0 %v2430
    %2549 = vmatpush1.msra.mxu0 %v2429
    %2550 = vmatprep.subr.mxu0 %v2432
    %2551 = vmatpush1.msra.mxu0 %v2431
    %2552 = vmatprep.subr.mxu0 %v2434
    %2553 = vmatpush1.msra.mxu0 %v2433
    %2554 = vmatprep.subr.mxu0 %v2436
    %2555 = vmatpush1.msra.mxu0 %v2435
    %2556 = vmatprep.subr.mxu0 %v2438
    %2557 = vmatpush1.msra.mxu0 %v2437
    %2558 = vmatprep.subr.mxu0 %v2440
    %2559 = vmatpush1.msra.mxu0 %v2439
    %2560 = vmatprep.subr.mxu0 %v2442
    %2561 = vmatpush1.msra.mxu0 %v2441
    %2562 = vmatprep.subr.mxu0 %v2444
    %2563 = vmatpush1.msra.mxu0 %v2443
    %2564 = vmatprep.subr.mxu0 %v2446
    %2565 = vmatpush1.msra.mxu0 %v2445
    %2566 = vmatprep.subr.mxu0 %v2448
    %2567 = vmatpush1.msra.mxu0 %v2447
    %2568 = vmatprep.subr.mxu0 0.0
    %2569 = vmatpush1.msra.mxu0 0.0
    %2570 = vmatprep.subr.mxu0 0.0
    %2571 = vmatpush1.msra.mxu0 0.0
    %2572 = vmatprep.subr.mxu0 0.0
    %2573 = vmatpush1.msra.mxu0 0.0
    %2574 = vmatprep.subr.mxu0 0.0
    %2575 = vmatpush1.msra.mxu0 0.0
    %2576 = vmatprep.subr.mxu0 0.0
    %2577 = vmatpush1.msra.mxu0 0.0
    %2578 = vmatprep.subr.mxu0 0.0
    %2579 = vmatpush1.msra.mxu0 0.0
    %2580 = vmatprep.subr.mxu0 0.0
    %2581 = vmatpush1.msra.mxu0 0.0
    %2582 = vmatprep.subr.mxu0 0.0
    %2583 = vmatpush1.msra.mxu0 0.0
    %2584 = vmatprep.subr.mxu0 0.0
    %2585 = vmatpush1.msra.mxu0 0.0
    %2586 = vmatprep.subr.mxu0 0.0
    %2587 = vmatpush1.msra.mxu0 0.0
    %2588 = vmatprep.subr.mxu0 0.0
    %2589 = vmatpush1.msra.mxu0 0.0
    %2590 = vmatprep.subr.mxu0 0.0
    %2591 = vmatpush1.msra.mxu0 0.0
    %2592 = vmatprep.subr.mxu0 0.0
    %2593 = vmatpush1.msra.mxu0 0.0
    %2594 = vmatprep.subr.mxu0 0.0
    %2595 = vmatpush1.msra.mxu0 0.0
    %2596 = vmatprep.subr.mxu0 0.0
    %2597 = vmatpush1.msra.mxu0 0.0
    %2598 = vmatprep.subr.mxu0 0.0
    %2599 = vmatpush1.msra.mxu0 0.0
    %2600 = vmatprep.subr.mxu0 0.0
    %2601 = vmatpush1.msra.mxu0 0.0
    %2602 = vmatprep.subr.mxu0 0.0
    %2603 = vmatpush1.msra.mxu0 0.0
    %2604 = vmatprep.subr.mxu0 0.0
    %2605 = vmatpush1.msra.mxu0 0.0
    %2606 = vmatprep.subr.mxu0 0.0
    %2607 = vmatpush1.msra.mxu0 0.0
    %2608 = vmatprep.subr.mxu0 0.0
    %2609 = vmatpush1.msra.mxu0 0.0
    %2610 = vmatprep.subr.mxu0 0.0
    %2611 = vmatpush1.msra.mxu0 0.0
    %2612 = vmatprep.mubr.f32.mxu0 0.0
    %2613 = vmatmul.mubr.f32.gmra.mrb[0].mxu0 %v2546
    %v2614 = vpop.f32.mrb[0].mxu0
    %v2615 = vadd.f32 %v2542, %v2614
    %v2616 = vpop.f32.mrb[0].mxu0
    %v2617 = vadd.f32 %v2544, %v2616
    %2618 = vdwg.mxu0
    %s2619 = scalar_lea.vmem %s9, 320
    %v2620 = vld [vmem:[%s2619] sm:$0xff]
    %v2621 = vld [vmem:[%s2619 + $0x8] sm:$0xff]
    %v2622 = vld [vmem:[%s2619 + $0x10] sm:$0xff]
    %v2623 = vld [vmem:[%s2619 + $0x18] sm:$0xff]
    %v2624 = vld [vmem:[%s2619 + $0x20] sm:$0xff]
    %v2625 = vld [vmem:[%s2619 + $0x28] sm:$0xff]
    %v2626 = vld [vmem:[%s2619 + $0x30] sm:$0xff]
    %v2627 = vld [vmem:[%s2619 + $0x38] sm:$0xff]
    %v2628 = vld [vmem:[%s2619 + $0x40] sm:$0xff]
    %v2629 = vld [vmem:[%s2619 + $0x48] sm:$0xff]
    %v2630 = vld [vmem:[%s2619 + $0x50] sm:$0xff]
    %v2631 = vld [vmem:[%s2619 + $0x58] sm:$0xff]
    %v2632 = vld [vmem:[%s2619 + $0x60] sm:$0xff]
    %v2633 = vld [vmem:[%s2619 + $0x68] sm:$0xff]
    %v2634 = vld [vmem:[%s2619 + $0x70] sm:$0xff]
    %v2635 = vld [vmem:[%s2619 + $0x78] sm:$0xff]
    %v2636 = vld [vmem:[%s2619 + $0x80] sm:$0xff]
    %v2637 = vld [vmem:[%s2619 + $0x88] sm:$0xff]
    %v2638 = vld [vmem:[%s2619 + $0x90] sm:$0xff]
    %v2639 = vld [vmem:[%s2619 + $0x98] sm:$0xff]
    %v2640 = vrot.slane %v2421, 4
    %v2641 = vsel %vm2472, %v2640, 0
    %2643 = vmatprep.subr.mxu0 %v2621
    %2644 = vmatpush1.msra.mxu0 %v2620
    %2645 = vmatprep.subr.mxu0 %v2623
    %2646 = vmatpush1.msra.mxu0 %v2622
    %2647 = vmatprep.subr.mxu0 %v2625
    %2648 = vmatpush1.msra.mxu0 %v2624
    %2649 = vmatprep.subr.mxu0 %v2627
    %2650 = vmatpush1.msra.mxu0 %v2626
    %2651 = vmatprep.subr.mxu0 %v2629
    %2652 = vmatpush1.msra.mxu0 %v2628
    %2653 = vmatprep.subr.mxu0 %v2631
    %2654 = vmatpush1.msra.mxu0 %v2630
    %2655 = vmatprep.subr.mxu0 %v2633
    %2656 = vmatpush1.msra.mxu0 %v2632
    %2657 = vmatprep.subr.mxu0 %v2635
    %2658 = vmatpush1.msra.mxu0 %v2634
    %2659 = vmatprep.subr.mxu0 %v2637
    %2660 = vmatpush1.msra.mxu0 %v2636
    %2661 = vmatprep.subr.mxu0 %v2639
    %2662 = vmatpush1.msra.mxu0 %v2638
    %2663 = vmatprep.subr.mxu0 0.0
    %2664 = vmatpush1.msra.mxu0 0.0
    %2665 = vmatprep.subr.mxu0 0.0
    %2666 = vmatpush1.msra.mxu0 0.0
    %2667 = vmatprep.subr.mxu0 0.0
    %2668 = vmatpush1.msra.mxu0 0.0
    %2669 = vmatprep.subr.mxu0 0.0
    %2670 = vmatpush1.msra.mxu0 0.0
    %2671 = vmatprep.subr.mxu0 0.0
    %2672 = vmatpush1.msra.mxu0 0.0
    %2673 = vmatprep.subr.mxu0 0.0
    %2674 = vmatpush1.msra.mxu0 0.0
    %2675 = vmatprep.subr.mxu0 0.0
    %2676 = vmatpush1.msra.mxu0 0.0
    %2677 = vmatprep.subr.mxu0 0.0
    %2678 = vmatpush1.msra.mxu0 0.0
    %2679 = vmatprep.subr.mxu0 0.0
    %2680 = vmatpush1.msra.mxu0 0.0
    %2681 = vmatprep.subr.mxu0 0.0
    %2682 = vmatpush1.msra.mxu0 0.0
    %2683 = vmatprep.subr.mxu0 0.0
    %2684 = vmatpush1.msra.mxu0 0.0
    %2685 = vmatprep.subr.mxu0 0.0
    %2686 = vmatpush1.msra.mxu0 0.0
    %2687 = vmatprep.subr.mxu0 0.0
    %2688 = vmatpush1.msra.mxu0 0.0
    %2689 = vmatprep.subr.mxu0 0.0
    %2690 = vmatpush1.msra.mxu0 0.0
    %2691 = vmatprep.subr.mxu0 0.0
    %2692 = vmatpush1.msra.mxu0 0.0
    %2693 = vmatprep.subr.mxu0 0.0
    %2694 = vmatpush1.msra.mxu0 0.0
    %2695 = vmatprep.subr.mxu0 0.0
    %2696 = vmatpush1.msra.mxu0 0.0
    %2697 = vmatprep.subr.mxu0 0.0
    %2698 = vmatpush1.msra.mxu0 0.0
    %2699 = vmatprep.subr.mxu0 0.0
    %2700 = vmatpush1.msra.mxu0 0.0
    %2701 = vmatprep.subr.mxu0 0.0
    %2702 = vmatpush1.msra.mxu0 0.0
    %2703 = vmatprep.subr.mxu0 0.0
    %2704 = vmatpush1.msra.mxu0 0.0
    %2705 = vmatprep.subr.mxu0 0.0
    %2706 = vmatpush1.msra.mxu0 0.0
    %2707 = vmatprep.mubr.f32.mxu0 0.0
    %2708 = vmatmul.mubr.f32.gmra.mrb[0].mxu0 %v2641
    %v2709 = vpop.f32.mrb[0].mxu0
    %v2710 = vadd.f32 0.0, %v2709
    %v2711 = vpop.f32.mrb[0].mxu0
    %v2712 = vadd.f32 0.0, %v2711
    %2713 = vdwg.mxu0
    %v2714 = vadd.f32 %v2615, %v2710
    %v2715 = vadd.f32 %v2617, %v2712
    %s2716 = scalar_lea.vmem %s9, 480
    %v2717 = vld [vmem:[%s2716] sm:$0xff]
    %v2718 = vld [vmem:[%s2716 + $0x8] sm:$0xff]
    %v2719 = vld [vmem:[%s2716 + $0x10] sm:$0xff]
    %v2720 = vld [vmem:[%s2716 + $0x18] sm:$0xff]
    %v2721 = vld [vmem:[%s2716 + $0x20] sm:$0xff]
    %v2722 = vld [vmem:[%s2716 + $0x28] sm:$0xff]
    %v2723 = vld [vmem:[%s2716 + $0x30] sm:$0xff]
    %v2724 = vld [vmem:[%s2716 + $0x38] sm:$0xff]
    %v2725 = vld [vmem:[%s2716 + $0x40] sm:$0xff]
    %v2726 = vld [vmem:[%s2716 + $0x48] sm:$0xff]
    %v2727 = vld [vmem:[%s2716 + $0x50] sm:$0xff]
    %v2728 = vld [vmem:[%s2716 + $0x58] sm:$0xff]
    %v2729 = vld [vmem:[%s2716 + $0x60] sm:$0xff]
    %v2730 = vld [vmem:[%s2716 + $0x68] sm:$0xff]
    %v2731 = vld [vmem:[%s2716 + $0x70] sm:$0xff]
    %v2732 = vld [vmem:[%s2716 + $0x78] sm:$0xff]
    %v2733 = vld [vmem:[%s2716 + $0x80] sm:$0xff]
    %v2734 = vld [vmem:[%s2716 + $0x88] sm:$0xff]
    %v2735 = vld [vmem:[%s2716 + $0x90] sm:$0xff]
    %v2736 = vld [vmem:[%s2716 + $0x98] sm:$0xff]
    %v2737 = vrot.slane %v2421, 6
    %v2738 = vsel %vm2472, %v2737, 0
    %2740 = vmatprep.subr.mxu0 %v2718
    %2741 = vmatpush1.msra.mxu0 %v2717
    %2742 = vmatprep.subr.mxu0 %v2720
    %2743 = vmatpush1.msra.mxu0 %v2719
    %2744 = vmatprep.subr.mxu0 %v2722
    %2745 = vmatpush1.msra.mxu0 %v2721
    %2746 = vmatprep.subr.mxu0 %v2724
    %2747 = vmatpush1.msra.mxu0 %v2723
    %2748 = vmatprep.subr.mxu0 %v2726
    %2749 = vmatpush1.msra.mxu0 %v2725
    %2750 = vmatprep.subr.mxu0 %v2728
    %2751 = vmatpush1.msra.mxu0 %v2727
    %2752 = vmatprep.subr.mxu0 %v2730
    %2753 = vmatpush1.msra.mxu0 %v2729
    %2754 = vmatprep.subr.mxu0 %v2732
    %2755 = vmatpush1.msra.mxu0 %v2731
    %2756 = vmatprep.subr.mxu0 %v2734
    %2757 = vmatpush1.msra.mxu0 %v2733
    %2758 = vmatprep.subr.mxu0 %v2736
    %2759 = vmatpush1.msra.mxu0 %v2735
    %2760 = vmatprep.subr.mxu0 0.0
    %2761 = vmatpush1.msra.mxu0 0.0
    %2762 = vmatprep.subr.mxu0 0.0
    %2763 = vmatpush1.msra.mxu0 0.0
    %2764 = vmatprep.subr.mxu0 0.0
    %2765 = vmatpush1.msra.mxu0 0.0
    %2766 = vmatprep.subr.mxu0 0.0
    %2767 = vmatpush1.msra.mxu0 0.0
    %2768 = vmatprep.subr.mxu0 0.0
    %2769 = vmatpush1.msra.mxu0 0.0
    %2770 = vmatprep.subr.mxu0 0.0
    %2771 = vmatpush1.msra.mxu0 0.0
    %2772 = vmatprep.subr.mxu0 0.0
    %2773 = vmatpush1.msra.mxu0 0.0
    %2774 = vmatprep.subr.mxu0 0.0
    %2775 = vmatpush1.msra.mxu0 0.0
    %2776 = vmatprep.subr.mxu0 0.0
    %2777 = vmatpush1.msra.mxu0 0.0
    %2778 = vmatprep.subr.mxu0 0.0
    %2779 = vmatpush1.msra.mxu0 0.0
    %2780 = vmatprep.subr.mxu0 0.0
    %2781 = vmatpush1.msra.mxu0 0.0
    %2782 = vmatprep.subr.mxu0 0.0
    %2783 = vmatpush1.msra.mxu0 0.0
    %2784 = vmatprep.subr.mxu0 0.0
    %2785 = vmatpush1.msra.mxu0 0.0
    %2786 = vmatprep.subr.mxu0 0.0
    %2787 = vmatpush1.msra.mxu0 0.0
    %2788 = vmatprep.subr.mxu0 0.0
    %2789 = vmatpush1.msra.mxu0 0.0
    %2790 = vmatprep.subr.mxu0 0.0
    %2791 = vmatpush1.msra.mxu0 0.0
    %2792 = vmatprep.subr.mxu0 0.0
    %2793 = vmatpush1.msra.mxu0 0.0
    %2794 = vmatprep.subr.mxu0 0.0
    %2795 = vmatpush1.msra.mxu0 0.0
    %2796 = vmatprep.subr.mxu0 0.0
    %2797 = vmatpush1.msra.mxu0 0.0
    %2798 = vmatprep.subr.mxu0 0.0
    %2799 = vmatpush1.msra.mxu0 0.0
    %2800 = vmatprep.subr.mxu0 0.0
    %2801 = vmatpush1.msra.mxu0 0.0
    %2802 = vmatprep.subr.mxu0 0.0
    %2803 = vmatpush1.msra.mxu0 0.0
    %2804 = vmatprep.mubr.f32.mxu0 0.0
    %2805 = vmatmul.mubr.f32.gmra.mrb[0].mxu0 %v2738
    %v2806 = vpop.f32.mrb[0].mxu0
    %v2807 = vadd.f32 0.0, %v2806
    %v2808 = vpop.f32.mrb[0].mxu0
    %v2809 = vadd.f32 0.0, %v2808
    %2810 = vdwg.mxu0
    %v2811 = vadd.f32 %v2714, %v2807
    %v2812 = vadd.f32 %v2715, %v2809
    %s2813 = scalar_lea.vmem %s9, 640
    %v2814 = vld [vmem:[%s2813] sm:$0xff]
    %v2815 = vld [vmem:[%s2813 + $0x8] sm:$0xff]
    %v2816 = vld [vmem:[%s2813 + $0x10] sm:$0xff]
    %v2817 = vld [vmem:[%s2813 + $0x18] sm:$0xff]
    %v2818 = vld [vmem:[%s2813 + $0x20] sm:$0xff]
    %v2819 = vld [vmem:[%s2813 + $0x28] sm:$0xff]
    %v2820 = vld [vmem:[%s2813 + $0x30] sm:$0xff]
    %v2821 = vld [vmem:[%s2813 + $0x38] sm:$0xff]
    %v2822 = vld [vmem:[%s2813 + $0x40] sm:$0xff]
    %v2823 = vld [vmem:[%s2813 + $0x48] sm:$0xff]
    %v2824 = vld [vmem:[%s2813 + $0x50] sm:$0xff]
    %v2825 = vld [vmem:[%s2813 + $0x58] sm:$0xff]
    %v2826 = vld [vmem:[%s2813 + $0x60] sm:$0xff]
    %v2827 = vld [vmem:[%s2813 + $0x68] sm:$0xff]
    %v2828 = vld [vmem:[%s2813 + $0x70] sm:$0xff]
    %v2829 = vld [vmem:[%s2813 + $0x78] sm:$0xff]
    %v2830 = vld [vmem:[%s2813 + $0x80] sm:$0xff]
    %v2831 = vld [vmem:[%s2813 + $0x88] sm:$0xff]
    %v2832 = vld [vmem:[%s2813 + $0x90] sm:$0xff]
    %v2833 = vld [vmem:[%s2813 + $0x98] sm:$0xff]
    %v2835 = vsel %vm2472, %v2426, 0
    %2837 = vmatprep.subr.mxu0 %v2815
    %2838 = vmatpush1.msra.mxu0 %v2814
    %2839 = vmatprep.subr.mxu0 %v2817
    %2840 = vmatpush1.msra.mxu0 %v2816
    %2841 = vmatprep.subr.mxu0 %v2819
    %2842 = vmatpush1.msra.mxu0 %v2818
    %2843 = vmatprep.subr.mxu0 %v2821
    %2844 = vmatpush1.msra.mxu0 %v2820
    %2845 = vmatprep.subr.mxu0 %v2823
    %2846 = vmatpush1.msra.mxu0 %v2822
    %2847 = vmatprep.subr.mxu0 %v2825
    %2848 = vmatpush1.msra.mxu0 %v2824
    %2849 = vmatprep.subr.mxu0 %v2827
    %2850 = vmatpush1.msra.mxu0 %v2826
    %2851 = vmatprep.subr.mxu0 %v2829
    %2852 = vmatpush1.msra.mxu0 %v2828
    %2853 = vmatprep.subr.mxu0 %v2831
    %2854 = vmatpush1.msra.mxu0 %v2830
    %2855 = vmatprep.subr.mxu0 %v2833
    %2856 = vmatpush1.msra.mxu0 %v2832
    %2857 = vmatprep.subr.mxu0 0.0
    %2858 = vmatpush1.msra.mxu0 0.0
    %2859 = vmatprep.subr.mxu0 0.0
    %2860 = vmatpush1.msra.mxu0 0.0
    %2861 = vmatprep.subr.mxu0 0.0
    %2862 = vmatpush1.msra.mxu0 0.0
    %2863 = vmatprep.subr.mxu0 0.0
    %2864 = vmatpush1.msra.mxu0 0.0
    %2865 = vmatprep.subr.mxu0 0.0
    %2866 = vmatpush1.msra.mxu0 0.0
    %2867 = vmatprep.subr.mxu0 0.0
    %2868 = vmatpush1.msra.mxu0 0.0
    %2869 = vmatprep.subr.mxu0 0.0
    %2870 = vmatpush1.msra.mxu0 0.0
    %2871 = vmatprep.subr.mxu0 0.0
    %2872 = vmatpush1.msra.mxu0 0.0
    %2873 = vmatprep.subr.mxu0 0.0
    %2874 = vmatpush1.msra.mxu0 0.0
    %2875 = vmatprep.subr.mxu0 0.0
    %2876 = vmatpush1.msra.mxu0 0.0
    %2877 = vmatprep.subr.mxu0 0.0
    %2878 = vmatpush1.msra.mxu0 0.0
    %2879 = vmatprep.subr.mxu0 0.0
    %2880 = vmatpush1.msra.mxu0 0.0
    %2881 = vmatprep.subr.mxu0 0.0
    %2882 = vmatpush1.msra.mxu0 0.0
    %2883 = vmatprep.subr.mxu0 0.0
    %2884 = vmatpush1.msra.mxu0 0.0
    %2885 = vmatprep.subr.mxu0 0.0
    %2886 = vmatpush1.msra.mxu0 0.0
    %2887 = vmatprep.subr.mxu0 0.0
    %2888 = vmatpush1.msra.mxu0 0.0
    %2889 = vmatprep.subr.mxu0 0.0
    %2890 = vmatpush1.msra.mxu0 0.0
    %2891 = vmatprep.subr.mxu0 0.0
    %2892 = vmatpush1.msra.mxu0 0.0
    %2893 = vmatprep.subr.mxu0 0.0
    %2894 = vmatpush1.msra.mxu0 0.0
    %2895 = vmatprep.subr.mxu0 0.0
    %2896 = vmatpush1.msra.mxu0 0.0
    %2897 = vmatprep.subr.mxu0 0.0
    %2898 = vmatpush1.msra.mxu0 0.0
    %2899 = vmatprep.subr.mxu0 0.0
    %2900 = vmatpush1.msra.mxu0 0.0
    %2901 = vmatprep.mubr.f32.mxu0 0.0
    %2902 = vmatmul.mubr.f32.gmra.mrb[0].mxu0 %v2835
    %v2903 = vpop.f32.mrb[0].mxu0
    %v2904 = vadd.f32 0.0, %v2903
    %v2905 = vpop.f32.mrb[0].mxu0
    %v2906 = vadd.f32 0.0, %v2905
    %2907 = vdwg.mxu0
    %v2908 = vadd.f32 %v2811, %v2904
    %v2909 = vadd.f32 %v2812, %v2906
    %v2910 = vld [vmem:[%s10] sm:$0x3]
    %v2912 = vlaneseq
    %v2913 = vshrl.u32 %v2912, 7
    %v2914 = vsub.s32 0, %v2913
    %v2915 = vrot.slane %v2910, %v2914
    %v2916 = vlaneseq
    %v2917 = vshrl.u32 %v2916, 7
    %v2918 = vsub.s32 1, %v2917
    %v2919 = vrot.slane %v2910, %v2918
    %v2922 = vadd.f32 %v2908, %v2915
    %v2923 = vadd.f32 %v2909, %v2919
    %v2924 = vmax.f32 %v2922, 0.0
    %v2925 = vmax.f32 %v2923, 0.0
    %v2926 = vld [vmem:[%s11] sm:$0xff]
    %v2927 = vld [vmem:[%s11 + $0x8] sm:$0xff]
    %v2928 = vld [vmem:[%s11 + $0x10] sm:$0xff]
    %v2929 = vld [vmem:[%s11 + $0x18] sm:$0xff]
    %v2930 = vld [vmem:[%s11 + $0x20] sm:$0xff]
    %v2931 = vld [vmem:[%s11 + $0x28] sm:$0xff]
    %v2932 = vld [vmem:[%s11 + $0x30] sm:$0xff]
    %v2933 = vld [vmem:[%s11 + $0x38] sm:$0xff]
    %v2934 = vld [vmem:[%s11 + $0x40] sm:$0xff]
    %v2935 = vld [vmem:[%s11 + $0x48] sm:$0xff]
    %v2936 = vld [vmem:[%s11 + $0x50] sm:$0xff]
    %v2937 = vld [vmem:[%s11 + $0x58] sm:$0xff]
    %v2938 = vld [vmem:[%s11 + $0x60] sm:$0xff]
    %v2939 = vld [vmem:[%s11 + $0x68] sm:$0xff]
    %v2940 = vld [vmem:[%s11 + $0x70] sm:$0xff]
    %v2941 = vld [vmem:[%s11 + $0x78] sm:$0xff]
    %v2942 = vld [vmem:[%s11 + $0x80] sm:$0xff]
    %v2943 = vld [vmem:[%s11 + $0x88] sm:$0xff]
    %v2944 = vld [vmem:[%s11 + $0x90] sm:$0xff]
    %v2945 = vld [vmem:[%s11 + $0x98] sm:$0xff]
    %v2946 = vld [vmem:[%s11 + $0xa0] sm:$0xff]
    %v2947 = vld [vmem:[%s11 + $0xa8] sm:$0xff]
    %v2948 = vld [vmem:[%s11 + $0xb0] sm:$0xff]
    %v2949 = vld [vmem:[%s11 + $0xb8] sm:$0xff]
    %v2950 = vld [vmem:[%s11 + $0xc0] sm:$0xff]
    %v2951 = vld [vmem:[%s11 + $0xc8] sm:$0xff]
    %v2952 = vld [vmem:[%s11 + $0xd0] sm:$0xff]
    %v2953 = vld [vmem:[%s11 + $0xd8] sm:$0xff]
    %v2954 = vld [vmem:[%s11 + $0xe0] sm:$0xff]
    %v2955 = vld [vmem:[%s11 + $0xe8] sm:$0xff]
    %v2956 = vld [vmem:[%s11 + $0xf0] sm:$0xff]
    %v2957 = vld [vmem:[%s11 + $0xf8] sm:$0xff]
    %v2958 = vld [vmem:[%s12] sm:$0x1]
    %v2960 = vlaneseq
    %v2961 = vshrl.u32 %v2960, 7
    %v2962 = vsub.s32 0, %v2961
    %v2963 = vrot.slane %v2958, %v2962
    %2965 = vmatprep.subr.mxu0 0.0
    %2966 = vmatpush1.msra.mxu0 %v2926
    %2967 = vmatprep.subr.mxu0 0.0
    %2968 = vmatpush1.msra.mxu0 %v2927
    %2969 = vmatprep.subr.mxu0 0.0
    %2970 = vmatpush1.msra.mxu0 %v2928
    %2971 = vmatprep.subr.mxu0 0.0
    %2972 = vmatpush1.msra.mxu0 %v2929
    %2973 = vmatprep.subr.mxu0 0.0
    %2974 = vmatpush1.msra.mxu0 %v2930
    %2975 = vmatprep.subr.mxu0 0.0
    %2976 = vmatpush1.msra.mxu0 %v2931
    %2977 = vmatprep.subr.mxu0 0.0
    %2978 = vmatpush1.msra.mxu0 %v2932
    %2979 = vmatprep.subr.mxu0 0.0
    %2980 = vmatpush1.msra.mxu0 %v2933
    %2981 = vmatprep.subr.mxu0 0.0
    %2982 = vmatpush1.msra.mxu0 %v2934
    %2983 = vmatprep.subr.mxu0 0.0
    %2984 = vmatpush1.msra.mxu0 %v2935
    %2985 = vmatprep.subr.mxu0 0.0
    %2986 = vmatpush1.msra.mxu0 %v2936
    %2987 = vmatprep.subr.mxu0 0.0
    %2988 = vmatpush1.msra.mxu0 %v2937
    %2989 = vmatprep.subr.mxu0 0.0
    %2990 = vmatpush1.msra.mxu0 %v2938
    %2991 = vmatprep.subr.mxu0 0.0
    %2992 = vmatpush1.msra.mxu0 %v2939
    %2993 = vmatprep.subr.mxu0 0.0
    %2994 = vmatpush1.msra.mxu0 %v2940
    %2995 = vmatprep.subr.mxu0 0.0
    %2996 = vmatpush1.msra.mxu0 %v2941
    %2997 = vmatprep.subr.mxu0 0.0
    %2998 = vmatpush1.msra.mxu0 %v2942
    %2999 = vmatprep.subr.mxu0 0.0
    %3000 = vmatpush1.msra.mxu0 %v2943
    %3001 = vmatprep.subr.mxu0 0.0
    %3002 = vmatpush1.msra.mxu0 %v2944
    %3003 = vmatprep.subr.mxu0 0.0
    %3004 = vmatpush1.msra.mxu0 %v2945
    %3005 = vmatprep.subr.mxu0 0.0
    %3006 = vmatpush1.msra.mxu0 %v2946
    %3007 = vmatprep.subr.mxu0 0.0
    %3008 = vmatpush1.msra.mxu0 %v2947
    %3009 = vmatprep.subr.mxu0 0.0
    %3010 = vmatpush1.msra.mxu0 %v2948
    %3011 = vmatprep.subr.mxu0 0.0
    %3012 = vmatpush1.msra.mxu0 %v2949
    %3013 = vmatprep.subr.mxu0 0.0
    %3014 = vmatpush1.msra.mxu0 %v2950
    %3015 = vmatprep.subr.mxu0 0.0
    %3016 = vmatpush1.msra.mxu0 %v2951
    %3017 = vmatprep.subr.mxu0 0.0
    %3018 = vmatpush1.msra.mxu0 %v2952
    %3019 = vmatprep.subr.mxu0 0.0
    %3020 = vmatpush1.msra.mxu0 %v2953
    %3021 = vmatprep.subr.mxu0 0.0
    %3022 = vmatpush1.msra.mxu0 %v2954
    %3023 = vmatprep.subr.mxu0 0.0
    %3024 = vmatpush1.msra.mxu0 %v2955
    %3025 = vmatprep.subr.mxu0 0.0
    %3026 = vmatpush1.msra.mxu0 %v2956
    %3027 = vmatprep.subr.mxu0 0.0
    %3028 = vmatpush1.msra.mxu0 %v2957
    %3029 = vmatprep.mubr.f32.mxu0 %v2925
    %3030 = vmatmul.mubr.f32.gmra.mrb[0].mxu0 %v2924
    %v3031 = vpop.f32.mrb[0].mxu0
    %v3032 = vadd.f32 %v2963, %v3031
    %v3033 = vpop.f32.mrb[0].mxu0
    %3034 = vdwg.mxu0
    %v3035 = vmax.f32 %v3032, 0.0
    %v3036 = vld [vmem:[%s13] sm:$0xff]
    %v3037 = vld [vmem:[%s13 + $0x8] sm:$0xff]
    %v3038 = vld [vmem:[%s13 + $0x10] sm:$0xff]
    %v3039 = vld [vmem:[%s13 + $0x18] sm:$0xff]
    %v3040 = vld [vmem:[%s13 + $0x20] sm:$0xff]
    %v3041 = vld [vmem:[%s13 + $0x28] sm:$0xff]
    %v3042 = vld [vmem:[%s13 + $0x30] sm:$0xff]
    %v3043 = vld [vmem:[%s13 + $0x38] sm:$0xff]
    %v3044 = vld [vmem:[%s13 + $0x40] sm:$0xff]
    %v3045 = vld [vmem:[%s13 + $0x48] sm:$0xff]
    %v3046 = vld [vmem:[%s13 + $0x50] sm:$0xff]
    %v3047 = vld [vmem:[%s13 + $0x58] sm:$0xff]
    %v3048 = vld [vmem:[%s13 + $0x60] sm:$0xff]
    %v3049 = vld [vmem:[%s13 + $0x68] sm:$0xff]
    %v3050 = vld [vmem:[%s13 + $0x70] sm:$0xff]
    %v3051 = vld [vmem:[%s13 + $0x78] sm:$0xff]
    %v3052 = vld [vmem:[%s14] sm:$0x1]
    %v3054 = vlaneseq
    %v3055 = vshrl.u32 %v3054, 7
    %v3056 = vsub.s32 0, %v3055
    %v3057 = vrot.slane %v3052, %v3056
    %3059 = vmatprep.subr.mxu0 0.0
    %3060 = vmatpush1.msra.mxu0 %v3036
    %3061 = vmatprep.subr.mxu0 0.0
    %3062 = vmatpush1.msra.mxu0 %v3037
    %3063 = vmatprep.subr.mxu0 0.0
    %3064 = vmatpush1.msra.mxu0 %v3038
    %3065 = vmatprep.subr.mxu0 0.0
    %3066 = vmatpush1.msra.mxu0 %v3039
    %3067 = vmatprep.subr.mxu0 0.0
    %3068 = vmatpush1.msra.mxu0 %v3040
    %3069 = vmatprep.subr.mxu0 0.0
    %3070 = vmatpush1.msra.mxu0 %v3041
    %3071 = vmatprep.subr.mxu0 0.0
    %3072 = vmatpush1.msra.mxu0 %v3042
    %3073 = vmatprep.subr.mxu0 0.0
    %3074 = vmatpush1.msra.mxu0 %v3043
    %3075 = vmatprep.subr.mxu0 0.0
    %3076 = vmatpush1.msra.mxu0 %v3044
    %3077 = vmatprep.subr.mxu0 0.0
    %3078 = vmatpush1.msra.mxu0 %v3045
    %3079 = vmatprep.subr.mxu0 0.0
    %3080 = vmatpush1.msra.mxu0 %v3046
    %3081 = vmatprep.subr.mxu0 0.0
    %3082 = vmatpush1.msra.mxu0 %v3047
    %3083 = vmatprep.subr.mxu0 0.0
    %3084 = vmatpush1.msra.mxu0 %v3048
    %3085 = vmatprep.subr.mxu0 0.0
    %3086 = vmatpush1.msra.mxu0 %v3049
    %3087 = vmatprep.subr.mxu0 0.0
    %3088 = vmatpush1.msra.mxu0 %v3050
    %3089 = vmatprep.subr.mxu0 0.0
    %3090 = vmatpush1.msra.mxu0 %v3051
    %3091 = vmatprep.subr.mxu0 0.0
    %3092 = vmatpush1.msra.mxu0 0.0
    %3093 = vmatprep.subr.mxu0 0.0
    %3094 = vmatpush1.msra.mxu0 0.0
    %3095 = vmatprep.subr.mxu0 0.0
    %3096 = vmatpush1.msra.mxu0 0.0
    %3097 = vmatprep.subr.mxu0 0.0
    %3098 = vmatpush1.msra.mxu0 0.0
    %3099 = vmatprep.subr.mxu0 0.0
    %3100 = vmatpush1.msra.mxu0 0.0
    %3101 = vmatprep.subr.mxu0 0.0
    %3102 = vmatpush1.msra.mxu0 0.0
    %3103 = vmatprep.subr.mxu0 0.0
    %3104 = vmatpush1.msra.mxu0 0.0
    %3105 = vmatprep.subr.mxu0 0.0
    %3106 = vmatpush1.msra.mxu0 0.0
    %3107 = vmatprep.subr.mxu0 0.0
    %3108 = vmatpush1.msra.mxu0 0.0
    %3109 = vmatprep.subr.mxu0 0.0
    %3110 = vmatpush1.msra.mxu0 0.0
    %3111 = vmatprep.subr.mxu0 0.0
    %3112 = vmatpush1.msra.mxu0 0.0
    %3113 = vmatprep.subr.mxu0 0.0
    %3114 = vmatpush1.msra.mxu0 0.0
    %3115 = vmatprep.subr.mxu0 0.0
    %3116 = vmatpush1.msra.mxu0 0.0
    %3117 = vmatprep.subr.mxu0 0.0
    %3118 = vmatpush1.msra.mxu0 0.0
    %3119 = vmatprep.subr.mxu0 0.0
    %3120 = vmatpush1.msra.mxu0 0.0
    %3121 = vmatprep.subr.mxu0 0.0
    %3122 = vmatpush1.msra.mxu0 0.0
    %3123 = vmatprep.mubr.f32.mxu0 0.0
    %3124 = vmatmul.mubr.f32.gmra.mrb[0].mxu0 %v3035
    %v3125 = vpop.f32.mrb[0].mxu0
    %v3126 = vadd.f32 %v3057, %v3125
    %v3127 = vpop.f32.mrb[0].mxu0
    %3128 = vdwg.mxu0
    %vm3129 = vcmask 812032
    %3130 = vst.msk [vmem:[#allocation2] sm:$0x3] %vm3129, %v3126
    // Predicated region
    $region62: #{_lenet_pallas.1} parent=1 // pred_check
      _
    $region63: #{_lenet_pallas.1} parent=1 // pred_check_branch
      %3132 = sbr.rel (0) target = $region65
    $region64: #{_lenet_pallas.1} parent=1 // pred_region
      %s3134 = ssub.s32 32, 32
      %3135 = vsyncadd [#allocation3], %s3134
      %s3137 = sshll.u32 [#allocation2], 4
      %s3138 = int_to_ptr.vmem [resolvable:$true] %s3137
      %3140 = dma.vmem_to_hbm [thread:$0]  %s3138, 32, %s15, [#allocation3]
    $region65: #{_lenet_pallas.1} parent=1 // pred_fallthru
      _
    // Predicated region
    $region66: #{_lenet_pallas.1} parent=1 // pred_check
      _
    $region67: #{_lenet_pallas.1} parent=1 // pred_check_branch
      %3142 = sbr.rel (0) target = $region69
    $region68: #{_lenet_pallas.1} parent=1 // pred_region
      %3143 = dma.done [#allocation3], 32
    $region69: #{_lenet_pallas.1} parent=1 // pred_fallthru
      _
    %3144 = vsyncpa [#allocation3], 1

</llo_original>
